<compile_context>
chip_gen: v7x
topology: tpu7x:2x2x1
jax: 0.10.0
libtpu: 0.0.40
codegen_flags: <defaults>
</compile_context>

<pallas_src>
import functools

import jax
import jax.numpy as jnp
from jax.experimental import pallas as pl
from jax.experimental.pallas import tpu as pltpu


# -------------------- Pallas kernel: fused im2col + matmul -----------------
def _conv1d_fused_kernel(x_ref, w_ref, b_ref, out_ref, *, kernel_size, stride):
    # x_ref:   (S, C)     one batch element, NLC layout
    # w_ref:   (K, C, d)  resident across the whole grid
    # b_ref:   (1, d)
    # out_ref: (L, d)
    l_out, d = out_ref.shape
    acc = jnp.zeros((l_out, d), dtype=jnp.float32)
    # Static unrolled loop over the K taps; each tap is a sublane-strided
    # load (rows k, k+stride, ..., k+(L-1)*stride) + a small MXU matmul.
    for k in range(kernel_size):
        xk = x_ref[pl.ds(k, l_out, stride=stride), :]            # (L, C)
        acc = acc + jnp.dot(xk, w_ref[k], preferred_element_type=jnp.float32)
    out_ref[...] = (acc + b_ref[...]).astype(out_ref.dtype)


@functools.partial(jax.jit, static_argnames=("kernel_size", "stride"))
def conv1d_nlc(x, w_kcd, bias2, *, kernel_size, stride):
    """Conv1d on NLC-layout input, equivalent to PyTorch Conv1d on NCL.

    x:      (B, S, C) float32
    w_kcd:  (K, C, d) float32   (pre-transposed PyTorch weight (d, C, K))
    bias2:  (1, d)    float32
    returns (B, L, d) with L = (S - K)//stride + 1
    """
    B, S, C = x.shape
    K, _, d = w_kcd.shape
    L = (S - kernel_size) // stride + 1

    kernel = functools.partial(
        _conv1d_fused_kernel, kernel_size=kernel_size, stride=stride
    )

    return pl.pallas_call(
        kernel,
        out_shape=jax.ShapeDtypeStruct((B, L, d), x.dtype),
        grid=(B,),
        in_specs=[
            # one batch element of the raw input; batch dim squeezed away
            pl.BlockSpec((pl.Squeezed(), S, C), lambda b: (b, 0, 0)),
            # weight stays resident (same block index for every grid step)
            pl.BlockSpec((K, C, d), lambda b: (0, 0, 0)),
            pl.BlockSpec((1, d), lambda b: (0, 0)),
        ],
        out_specs=pl.BlockSpec((pl.Squeezed(), L, d), lambda b: (b, 0, 0)),
        compiler_params=pltpu.CompilerParams(
            dimension_semantics=("parallel",)
        ),
    )(x, w_kcd, bias2)


# -------------------- InputModel wrapper ------------------------------------
class InputModelPallas:
    """JAX/Pallas equivalent of the PyTorch InputModel forward pass."""

    def __init__(self, mod, key):
        self.d = 32
        if mod == "a":
            self.seq_len, self.feat_dim, self.kernel_size, self.stride = 220, 73, 28, 3
        elif mod == "v":
            self.seq_len, self.feat_dim, self.kernel_size, self.stride = 350, 512, 30, 5
        else:
            self.seq_len, self.feat_dim, self.kernel_size, self.stride = 610, 200, 34, 9

        kw, kb = jax.random.split(key)
        fan_in = self.feat_dim * self.kernel_size
        bound = 1.0 / float(jnp.sqrt(fan_in))
        # PyTorch-style uniform(-bound, bound) init, deterministic via PRNGKey.
        self.weight = jax.random.uniform(            # PyTorch layout (d, C, K)
            kw, (self.d, self.feat_dim, self.kernel_size),
            minval=-bound, maxval=bound, dtype=jnp.float32,
        )
        self.bias = jax.random.uniform(
            kb, (self.d,), minval=-bound, maxval=bound, dtype=jnp.float32
        )
        # Pre-transposed weight / bias for the kernel (done once at init).
        self.w_kcd = jnp.transpose(self.weight, (2, 1, 0))   # (K, C, d)
        self.b2 = self.bias.reshape(1, self.d)               # (1, d)

    def __call__(self, src):
        # src: (B, seq_len, feat_dim)  ->  (B, L_out, d)
        return conv1d_nlc(
            src, self.w_kcd, self.b2,
            kernel_size=self.kernel_size, stride=self.stride,
        )


if __name__ == "__main__":
    key = jax.random.PRNGKey(0)
    k_param, k_in = jax.random.split(key)

    model = InputModelPallas("a", k_param)

    B = 2
    src = jax.random.normal(
        k_in, (B, model.seq_len, model.feat_dim), dtype=jnp.float32
    )

    out = model(src)
    out = jax.block_until_ready(out)

    # Shape check: mod='a' -> L_out = (220 - 28)//3 + 1 = 65, d = 32
    assert out.shape == (B, 65, 32), out.shape

    # Reference check against a plain-JAX conv (lax.conv_general_dilated).
    ref = jax.lax.conv_general_dilated(
        jnp.transpose(src, (0, 2, 1)),                  # (B, C, S)
        model.weight,                                   # (d, C, K)
        window_strides=(model.stride,),
        padding="VALID",
        dimension_numbers=("NCH", "OIH", "NCH"),
    ) + model.bias[None, :, None]
    ref = jnp.transpose(ref, (0, 2, 1))                 # (B, L_out, d)
    assert jnp.allclose(out, ref, atol=1e-4, rtol=1e-4), (
        float(jnp.max(jnp.abs(out - ref)))
    )

    print("KERNEL_OK")
</pallas_src>

<mosaic_0001>
module attributes {stable_mosaic.version = 11 : i64} {
  func.func @_conv1d_fused_kernel(%arg0: i32, %arg1: memref<1x220x73xf32, #tpu.memory_space<vmem>>, %arg2: memref<28x73x32xf32, #tpu.memory_space<vmem>>, %arg3: memref<1x32xf32, #tpu.memory_space<vmem>>, %arg4: memref<1x65x32xf32, #tpu.memory_space<vmem>>) attributes {dimension_semantics = [#tpu.dimension_semantics<parallel>], iteration_bounds = array<i64: 2>, scalar_prefetch = 0 : i64, scratch_operands = 0 : i64, tpu.core_type = #tpu.core_type<tc>, window_params = [{transform_indices = @transform_0, window_bounds = array<i64: 1, 220, 73>}, {pipeline_mode = #tpu.pipeline_mode<synchronous>, transform_indices = @transform_1, window_bounds = array<i64: 28, 73, 32>}, {pipeline_mode = #tpu.pipeline_mode<synchronous>, transform_indices = @transform_2, window_bounds = array<i64: 1, 32>}, {transform_indices = @transform_3, window_bounds = array<i64: 1, 65, 32>}]} {
    %cst = arith.constant 0.000000e+00 : f32
    %0 = vector.broadcast %cst : f32 to vector<65x32xf32>
    %c0 = arith.constant 0 : index
    %c0_0 = arith.constant 0 : index
    %c0_1 = arith.constant 0 : index
    %1 = tpu.strided_load %arg1[%c0, %c0_0, %c0_1] {strides = array<i32: 1, 3, 1>} : memref<1x220x73xf32, #tpu.memory_space<vmem>>, vector<1x65x73xf32>
    %2 = vector.shape_cast %1 : vector<1x65x73xf32> to vector<65x73xf32>
    %c0_2 = arith.constant 0 : index
    %c0_3 = arith.constant 0 : index
    %c0_4 = arith.constant 0 : index
    %3 = vector.load %arg2[%c0_2, %c0_3, %c0_4] : memref<28x73x32xf32, #tpu.memory_space<vmem>>, vector<1x73x32xf32>
    %4 = vector.shape_cast %3 : vector<1x73x32xf32> to vector<73x32xf32>
    %cst_5 = arith.constant dense<0.000000e+00> : vector<65x32xf32>
    %5 = tpu.matmul %2, %4, %cst_5 {dimension_numbers = #tpu.dot_dimension_numbers<[1], [0], [0], [1], [0, 0, 1, 1], [], []>} : vector<65x73xf32>, vector<73x32xf32>, vector<65x32xf32> -> vector<65x32xf32>
    %6 = arith.addf %0, %5 : vector<65x32xf32>
    %c0_6 = arith.constant 0 : index
    %c1 = arith.constant 1 : index
    %c0_7 = arith.constant 0 : index
    %7 = tpu.strided_load %arg1[%c0_6, %c1, %c0_7] {strides = array<i32: 1, 3, 1>} : memref<1x220x73xf32, #tpu.memory_space<vmem>>, vector<1x65x73xf32>
    %8 = vector.shape_cast %7 : vector<1x65x73xf32> to vector<65x73xf32>
    %c1_8 = arith.constant 1 : index
    %c0_9 = arith.constant 0 : index
    %c0_10 = arith.constant 0 : index
    %9 = vector.load %arg2[%c1_8, %c0_9, %c0_10] : memref<28x73x32xf32, #tpu.memory_space<vmem>>, vector<1x73x32xf32>
    %10 = vector.shape_cast %9 : vector<1x73x32xf32> to vector<73x32xf32>
    %cst_11 = arith.constant dense<0.000000e+00> : vector<65x32xf32>
    %11 = tpu.matmul %8, %10, %cst_11 {dimension_numbers = #tpu.dot_dimension_numbers<[1], [0], [0], [1], [0, 0, 1, 1], [], []>} : vector<65x73xf32>, vector<73x32xf32>, vector<65x32xf32> -> vector<65x32xf32>
    %12 = arith.addf %6, %11 : vector<65x32xf32>
    %c0_12 = arith.constant 0 : index
    %c2 = arith.constant 2 : index
    %c0_13 = arith.constant 0 : index
    %13 = tpu.strided_load %arg1[%c0_12, %c2, %c0_13] {strides = array<i32: 1, 3, 1>} : memref<1x220x73xf32, #tpu.memory_space<vmem>>, vector<1x65x73xf32>
    %14 = vector.shape_cast %13 : vector<1x65x73xf32> to vector<65x73xf32>
    %c2_14 = arith.constant 2 : index
    %c0_15 = arith.constant 0 : index
    %c0_16 = arith.constant 0 : index
    %15 = vector.load %arg2[%c2_14, %c0_15, %c0_16] : memref<28x73x32xf32, #tpu.memory_space<vmem>>, vector<1x73x32xf32>
    %16 = vector.shape_cast %15 : vector<1x73x32xf32> to vector<73x32xf32>
    %cst_17 = arith.constant dense<0.000000e+00> : vector<65x32xf32>
    %17 = tpu.matmul %14, %16, %cst_17 {dimension_numbers = #tpu.dot_dimension_numbers<[1], [0], [0], [1], [0, 0, 1, 1], [], []>} : vector<65x73xf32>, vector<73x32xf32>, vector<65x32xf32> -> vector<65x32xf32>
    %18 = arith.addf %12, %17 : vector<65x32xf32>
    %c0_18 = arith.constant 0 : index
    %c3 = arith.constant 3 : index
    %c0_19 = arith.constant 0 : index
    %19 = tpu.strided_load %arg1[%c0_18, %c3, %c0_19] {strides = array<i32: 1, 3, 1>} : memref<1x220x73xf32, #tpu.memory_space<vmem>>, vector<1x65x73xf32>
    %20 = vector.shape_cast %19 : vector<1x65x73xf32> to vector<65x73xf32>
    %c3_20 = arith.constant 3 : index
    %c0_21 = arith.constant 0 : index
    %c0_22 = arith.constant 0 : index
    %21 = vector.load %arg2[%c3_20, %c0_21, %c0_22] : memref<28x73x32xf32, #tpu.memory_space<vmem>>, vector<1x73x32xf32>
    %22 = vector.shape_cast %21 : vector<1x73x32xf32> to vector<73x32xf32>
    %cst_23 = arith.constant dense<0.000000e+00> : vector<65x32xf32>
    %23 = tpu.matmul %20, %22, %cst_23 {dimension_numbers = #tpu.dot_dimension_numbers<[1], [0], [0], [1], [0, 0, 1, 1], [], []>} : vector<65x73xf32>, vector<73x32xf32>, vector<65x32xf32> -> vector<65x32xf32>
    %24 = arith.addf %18, %23 : vector<65x32xf32>
    %c0_24 = arith.constant 0 : index
    %c4 = arith.constant 4 : index
    %c0_25 = arith.constant 0 : index
    %25 = tpu.strided_load %arg1[%c0_24, %c4, %c0_25] {strides = array<i32: 1, 3, 1>} : memref<1x220x73xf32, #tpu.memory_space<vmem>>, vector<1x65x73xf32>
    %26 = vector.shape_cast %25 : vector<1x65x73xf32> to vector<65x73xf32>
    %c4_26 = arith.constant 4 : index
    %c0_27 = arith.constant 0 : index
    %c0_28 = arith.constant 0 : index
    %27 = vector.load %arg2[%c4_26, %c0_27, %c0_28] : memref<28x73x32xf32, #tpu.memory_space<vmem>>, vector<1x73x32xf32>
    %28 = vector.shape_cast %27 : vector<1x73x32xf32> to vector<73x32xf32>
    %cst_29 = arith.constant dense<0.000000e+00> : vector<65x32xf32>
    %29 = tpu.matmul %26, %28, %cst_29 {dimension_numbers = #tpu.dot_dimension_numbers<[1], [0], [0], [1], [0, 0, 1, 1], [], []>} : vector<65x73xf32>, vector<73x32xf32>, vector<65x32xf32> -> vector<65x32xf32>
    %30 = arith.addf %24, %29 : vector<65x32xf32>
    %c0_30 = arith.constant 0 : index
    %c5 = arith.constant 5 : index
    %c0_31 = arith.constant 0 : index
    %31 = tpu.strided_load %arg1[%c0_30, %c5, %c0_31] {strides = array<i32: 1, 3, 1>} : memref<1x220x73xf32, #tpu.memory_space<vmem>>, vector<1x65x73xf32>
    %32 = vector.shape_cast %31 : vector<1x65x73xf32> to vector<65x73xf32>
    %c5_32 = arith.constant 5 : index
    %c0_33 = arith.constant 0 : index
    %c0_34 = arith.constant 0 : index
    %33 = vector.load %arg2[%c5_32, %c0_33, %c0_34] : memref<28x73x32xf32, #tpu.memory_space<vmem>>, vector<1x73x32xf32>
    %34 = vector.shape_cast %33 : vector<1x73x32xf32> to vector<73x32xf32>
    %cst_35 = arith.constant dense<0.000000e+00> : vector<65x32xf32>
    %35 = tpu.matmul %32, %34, %cst_35 {dimension_numbers = #tpu.dot_dimension_numbers<[1], [0], [0], [1], [0, 0, 1, 1], [], []>} : vector<65x73xf32>, vector<73x32xf32>, vector<65x32xf32> -> vector<65x32xf32>
    %36 = arith.addf %30, %35 : vector<65x32xf32>
    %c0_36 = arith.constant 0 : index
    %c6 = arith.constant 6 : index
    %c0_37 = arith.constant 0 : index
    %37 = tpu.strided_load %arg1[%c0_36, %c6, %c0_37] {strides = array<i32: 1, 3, 1>} : memref<1x220x73xf32, #tpu.memory_space<vmem>>, vector<1x65x73xf32>
    %38 = vector.shape_cast %37 : vector<1x65x73xf32> to vector<65x73xf32>
    %c6_38 = arith.constant 6 : index
    %c0_39 = arith.constant 0 : index
    %c0_40 = arith.constant 0 : index
    %39 = vector.load %arg2[%c6_38, %c0_39, %c0_40] : memref<28x73x32xf32, #tpu.memory_space<vmem>>, vector<1x73x32xf32>
    %40 = vector.shape_cast %39 : vector<1x73x32xf32> to vector<73x32xf32>
    %cst_41 = arith.constant dense<0.000000e+00> : vector<65x32xf32>
    %41 = tpu.matmul %38, %40, %cst_41 {dimension_numbers = #tpu.dot_dimension_numbers<[1], [0], [0], [1], [0, 0, 1, 1], [], []>} : vector<65x73xf32>, vector<73x32xf32>, vector<65x32xf32> -> vector<65x32xf32>
    %42 = arith.addf %36, %41 : vector<65x32xf32>
    %c0_42 = arith.constant 0 : index
    %c7 = arith.constant 7 : index
    %c0_43 = arith.constant 0 : index
    %43 = tpu.strided_load %arg1[%c0_42, %c7, %c0_43] {strides = array<i32: 1, 3, 1>} : memref<1x220x73xf32, #tpu.memory_space<vmem>>, vector<1x65x73xf32>
    %44 = vector.shape_cast %43 : vector<1x65x73xf32> to vector<65x73xf32>
    %c7_44 = arith.constant 7 : index
    %c0_45 = arith.constant 0 : index
    %c0_46 = arith.constant 0 : index
    %45 = vector.load %arg2[%c7_44, %c0_45, %c0_46] : memref<28x73x32xf32, #tpu.memory_space<vmem>>, vector<1x73x32xf32>
    %46 = vector.shape_cast %45 : vector<1x73x32xf32> to vector<73x32xf32>
    %cst_47 = arith.constant dense<0.000000e+00> : vector<65x32xf32>
    %47 = tpu.matmul %44, %46, %cst_47 {dimension_numbers = #tpu.dot_dimension_numbers<[1], [0], [0], [1], [0, 0, 1, 1], [], []>} : vector<65x73xf32>, vector<73x32xf32>, vector<65x32xf32> -> vector<65x32xf32>
    %48 = arith.addf %42, %47 : vector<65x32xf32>
    %c0_48 = arith.constant 0 : index
    %c8 = arith.constant 8 : index
    %c0_49 = arith.constant 0 : index
    %49 = tpu.strided_load %arg1[%c0_48, %c8, %c0_49] {strides = array<i32: 1, 3, 1>} : memref<1x220x73xf32, #tpu.memory_space<vmem>>, vector<1x65x73xf32>
    %50 = vector.shape_cast %49 : vector<1x65x73xf32> to vector<65x73xf32>
    %c8_50 = arith.constant 8 : index
    %c0_51 = arith.constant 0 : index
    %c0_52 = arith.constant 0 : index
    %51 = vector.load %arg2[%c8_50, %c0_51, %c0_52] : memref<28x73x32xf32, #tpu.memory_space<vmem>>, vector<1x73x32xf32>
    %52 = vector.shape_cast %51 : vector<1x73x32xf32> to vector<73x32xf32>
    %cst_53 = arith.constant dense<0.000000e+00> : vector<65x32xf32>
    %53 = tpu.matmul %50, %52, %cst_53 {dimension_numbers = #tpu.dot_dimension_numbers<[1], [0], [0], [1], [0, 0, 1, 1], [], []>} : vector<65x73xf32>, vector<73x32xf32>, vector<65x32xf32> -> vector<65x32xf32>
    %54 = arith.addf %48, %53 : vector<65x32xf32>
    %c0_54 = arith.constant 0 : index
    %c9 = arith.constant 9 : index
    %c0_55 = arith.constant 0 : index
    %55 = tpu.strided_load %arg1[%c0_54, %c9, %c0_55] {strides = array<i32: 1, 3, 1>} : memref<1x220x73xf32, #tpu.memory_space<vmem>>, vector<1x65x73xf32>
    %56 = vector.shape_cast %55 : vector<1x65x73xf32> to vector<65x73xf32>
    %c9_56 = arith.constant 9 : index
    %c0_57 = arith.constant 0 : index
    %c0_58 = arith.constant 0 : index
    %57 = vector.load %arg2[%c9_56, %c0_57, %c0_58] : memref<28x73x32xf32, #tpu.memory_space<vmem>>, vector<1x73x32xf32>
    %58 = vector.shape_cast %57 : vector<1x73x32xf32> to vector<73x32xf32>
    %cst_59 = arith.constant dense<0.000000e+00> : vector<65x32xf32>
    %59 = tpu.matmul %56, %58, %cst_59 {dimension_numbers = #tpu.dot_dimension_numbers<[1], [0], [0], [1], [0, 0, 1, 1], [], []>} : vector<65x73xf32>, vector<73x32xf32>, vector<65x32xf32> -> vector<65x32xf32>
    %60 = arith.addf %54, %59 : vector<65x32xf32>
    %c0_60 = arith.constant 0 : index
    %c10 = arith.constant 10 : index
    %c0_61 = arith.constant 0 : index
    %61 = tpu.strided_load %arg1[%c0_60, %c10, %c0_61] {strides = array<i32: 1, 3, 1>} : memref<1x220x73xf32, #tpu.memory_space<vmem>>, vector<1x65x73xf32>
    %62 = vector.shape_cast %61 : vector<1x65x73xf32> to vector<65x73xf32>
    %c10_62 = arith.constant 10 : index
    %c0_63 = arith.constant 0 : index
    %c0_64 = arith.constant 0 : index
    %63 = vector.load %arg2[%c10_62, %c0_63, %c0_64] : memref<28x73x32xf32, #tpu.memory_space<vmem>>, vector<1x73x32xf32>
    %64 = vector.shape_cast %63 : vector<1x73x32xf32> to vector<73x32xf32>
    %cst_65 = arith.constant dense<0.000000e+00> : vector<65x32xf32>
    %65 = tpu.matmul %62, %64, %cst_65 {dimension_numbers = #tpu.dot_dimension_numbers<[1], [0], [0], [1], [0, 0, 1, 1], [], []>} : vector<65x73xf32>, vector<73x32xf32>, vector<65x32xf32> -> vector<65x32xf32>
    %66 = arith.addf %60, %65 : vector<65x32xf32>
    %c0_66 = arith.constant 0 : index
    %c11 = arith.constant 11 : index
    %c0_67 = arith.constant 0 : index
    %67 = tpu.strided_load %arg1[%c0_66, %c11, %c0_67] {strides = array<i32: 1, 3, 1>} : memref<1x220x73xf32, #tpu.memory_space<vmem>>, vector<1x65x73xf32>
    %68 = vector.shape_cast %67 : vector<1x65x73xf32> to vector<65x73xf32>
    %c11_68 = arith.constant 11 : index
    %c0_69 = arith.constant 0 : index
    %c0_70 = arith.constant 0 : index
    %69 = vector.load %arg2[%c11_68, %c0_69, %c0_70] : memref<28x73x32xf32, #tpu.memory_space<vmem>>, vector<1x73x32xf32>
    %70 = vector.shape_cast %69 : vector<1x73x32xf32> to vector<73x32xf32>
    %cst_71 = arith.constant dense<0.000000e+00> : vector<65x32xf32>
    %71 = tpu.matmul %68, %70, %cst_71 {dimension_numbers = #tpu.dot_dimension_numbers<[1], [0], [0], [1], [0, 0, 1, 1], [], []>} : vector<65x73xf32>, vector<73x32xf32>, vector<65x32xf32> -> vector<65x32xf32>
    %72 = arith.addf %66, %71 : vector<65x32xf32>
    %c0_72 = arith.constant 0 : index
    %c12 = arith.constant 12 : index
    %c0_73 = arith.constant 0 : index
    %73 = tpu.strided_load %arg1[%c0_72, %c12, %c0_73] {strides = array<i32: 1, 3, 1>} : memref<1x220x73xf32, #tpu.memory_space<vmem>>, vector<1x65x73xf32>
    %74 = vector.shape_cast %73 : vector<1x65x73xf32> to vector<65x73xf32>
    %c12_74 = arith.constant 12 : index
    %c0_75 = arith.constant 0 : index
    %c0_76 = arith.constant 0 : index
    %75 = vector.load %arg2[%c12_74, %c0_75, %c0_76] : memref<28x73x32xf32, #tpu.memory_space<vmem>>, vector<1x73x32xf32>
    %76 = vector.shape_cast %75 : vector<1x73x32xf32> to vector<73x32xf32>
    %cst_77 = arith.constant dense<0.000000e+00> : vector<65x32xf32>
    %77 = tpu.matmul %74, %76, %cst_77 {dimension_numbers = #tpu.dot_dimension_numbers<[1], [0], [0], [1], [0, 0, 1, 1], [], []>} : vector<65x73xf32>, vector<73x32xf32>, vector<65x32xf32> -> vector<65x32xf32>
    %78 = arith.addf %72, %77 : vector<65x32xf32>
    %c0_78 = arith.constant 0 : index
    %c13 = arith.constant 13 : index
    %c0_79 = arith.constant 0 : index
    %79 = tpu.strided_load %arg1[%c0_78, %c13, %c0_79] {strides = array<i32: 1, 3, 1>} : memref<1x220x73xf32, #tpu.memory_space<vmem>>, vector<1x65x73xf32>
    %80 = vector.shape_cast %79 : vector<1x65x73xf32> to vector<65x73xf32>
    %c13_80 = arith.constant 13 : index
    %c0_81 = arith.constant 0 : index
    %c0_82 = arith.constant 0 : index
    %81 = vector.load %arg2[%c13_80, %c0_81, %c0_82] : memref<28x73x32xf32, #tpu.memory_space<vmem>>, vector<1x73x32xf32>
    %82 = vector.shape_cast %81 : vector<1x73x32xf32> to vector<73x32xf32>
    %cst_83 = arith.constant dense<0.000000e+00> : vector<65x32xf32>
    %83 = tpu.matmul %80, %82, %cst_83 {dimension_numbers = #tpu.dot_dimension_numbers<[1], [0], [0], [1], [0, 0, 1, 1], [], []>} : vector<65x73xf32>, vector<73x32xf32>, vector<65x32xf32> -> vector<65x32xf32>
    %84 = arith.addf %78, %83 : vector<65x32xf32>
    %c0_84 = arith.constant 0 : index
    %c14 = arith.constant 14 : index
    %c0_85 = arith.constant 0 : index
    %85 = tpu.strided_load %arg1[%c0_84, %c14, %c0_85] {strides = array<i32: 1, 3, 1>} : memref<1x220x73xf32, #tpu.memory_space<vmem>>, vector<1x65x73xf32>
    %86 = vector.shape_cast %85 : vector<1x65x73xf32> to vector<65x73xf32>
    %c14_86 = arith.constant 14 : index
    %c0_87 = arith.constant 0 : index
    %c0_88 = arith.constant 0 : index
    %87 = vector.load %arg2[%c14_86, %c0_87, %c0_88] : memref<28x73x32xf32, #tpu.memory_space<vmem>>, vector<1x73x32xf32>
    %88 = vector.shape_cast %87 : vector<1x73x32xf32> to vector<73x32xf32>
    %cst_89 = arith.constant dense<0.000000e+00> : vector<65x32xf32>
    %89 = tpu.matmul %86, %88, %cst_89 {dimension_numbers = #tpu.dot_dimension_numbers<[1], [0], [0], [1], [0, 0, 1, 1], [], []>} : vector<65x73xf32>, vector<73x32xf32>, vector<65x32xf32> -> vector<65x32xf32>
    %90 = arith.addf %84, %89 : vector<65x32xf32>
    %c0_90 = arith.constant 0 : index
    %c15 = arith.constant 15 : index
    %c0_91 = arith.constant 0 : index
    %91 = tpu.strided_load %arg1[%c0_90, %c15, %c0_91] {strides = array<i32: 1, 3, 1>} : memref<1x220x73xf32, #tpu.memory_space<vmem>>, vector<1x65x73xf32>
    %92 = vector.shape_cast %91 : vector<1x65x73xf32> to vector<65x73xf32>
    %c15_92 = arith.constant 15 : index
    %c0_93 = arith.constant 0 : index
    %c0_94 = arith.constant 0 : index
    %93 = vector.load %arg2[%c15_92, %c0_93, %c0_94] : memref<28x73x32xf32, #tpu.memory_space<vmem>>, vector<1x73x32xf32>
    %94 = vector.shape_cast %93 : vector<1x73x32xf32> to vector<73x32xf32>
    %cst_95 = arith.constant dense<0.000000e+00> : vector<65x32xf32>
    %95 = tpu.matmul %92, %94, %cst_95 {dimension_numbers = #tpu.dot_dimension_numbers<[1], [0], [0], [1], [0, 0, 1, 1], [], []>} : vector<65x73xf32>, vector<73x32xf32>, vector<65x32xf32> -> vector<65x32xf32>
    %96 = arith.addf %90, %95 : vector<65x32xf32>
    %c0_96 = arith.constant 0 : index
    %c16 = arith.constant 16 : index
    %c0_97 = arith.constant 0 : index
    %97 = tpu.strided_load %arg1[%c0_96, %c16, %c0_97] {strides = array<i32: 1, 3, 1>} : memref<1x220x73xf32, #tpu.memory_space<vmem>>, vector<1x65x73xf32>
    %98 = vector.shape_cast %97 : vector<1x65x73xf32> to vector<65x73xf32>
    %c16_98 = arith.constant 16 : index
    %c0_99 = arith.constant 0 : index
    %c0_100 = arith.constant 0 : index
    %99 = vector.load %arg2[%c16_98, %c0_99, %c0_100] : memref<28x73x32xf32, #tpu.memory_space<vmem>>, vector<1x73x32xf32>
    %100 = vector.shape_cast %99 : vector<1x73x32xf32> to vector<73x32xf32>
    %cst_101 = arith.constant dense<0.000000e+00> : vector<65x32xf32>
    %101 = tpu.matmul %98, %100, %cst_101 {dimension_numbers = #tpu.dot_dimension_numbers<[1], [0], [0], [1], [0, 0, 1, 1], [], []>} : vector<65x73xf32>, vector<73x32xf32>, vector<65x32xf32> -> vector<65x32xf32>
    %102 = arith.addf %96, %101 : vector<65x32xf32>
    %c0_102 = arith.constant 0 : index
    %c17 = arith.constant 17 : index
    %c0_103 = arith.constant 0 : index
    %103 = tpu.strided_load %arg1[%c0_102, %c17, %c0_103] {strides = array<i32: 1, 3, 1>} : memref<1x220x73xf32, #tpu.memory_space<vmem>>, vector<1x65x73xf32>
    %104 = vector.shape_cast %103 : vector<1x65x73xf32> to vector<65x73xf32>
    %c17_104 = arith.constant 17 : index
    %c0_105 = arith.constant 0 : index
    %c0_106 = arith.constant 0 : index
    %105 = vector.load %arg2[%c17_104, %c0_105, %c0_106] : memref<28x73x32xf32, #tpu.memory_space<vmem>>, vector<1x73x32xf32>
    %106 = vector.shape_cast %105 : vector<1x73x32xf32> to vector<73x32xf32>
    %cst_107 = arith.constant dense<0.000000e+00> : vector<65x32xf32>
    %107 = tpu.matmul %104, %106, %cst_107 {dimension_numbers = #tpu.dot_dimension_numbers<[1], [0], [0], [1], [0, 0, 1, 1], [], []>} : vector<65x73xf32>, vector<73x32xf32>, vector<65x32xf32> -> vector<65x32xf32>
    %108 = arith.addf %102, %107 : vector<65x32xf32>
    %c0_108 = arith.constant 0 : index
    %c18 = arith.constant 18 : index
    %c0_109 = arith.constant 0 : index
    %109 = tpu.strided_load %arg1[%c0_108, %c18, %c0_109] {strides = array<i32: 1, 3, 1>} : memref<1x220x73xf32, #tpu.memory_space<vmem>>, vector<1x65x73xf32>
    %110 = vector.shape_cast %109 : vector<1x65x73xf32> to vector<65x73xf32>
    %c18_110 = arith.constant 18 : index
    %c0_111 = arith.constant 0 : index
    %c0_112 = arith.constant 0 : index
    %111 = vector.load %arg2[%c18_110, %c0_111, %c0_112] : memref<28x73x32xf32, #tpu.memory_space<vmem>>, vector<1x73x32xf32>
    %112 = vector.shape_cast %111 : vector<1x73x32xf32> to vector<73x32xf32>
    %cst_113 = arith.constant dense<0.000000e+00> : vector<65x32xf32>
    %113 = tpu.matmul %110, %112, %cst_113 {dimension_numbers = #tpu.dot_dimension_numbers<[1], [0], [0], [1], [0, 0, 1, 1], [], []>} : vector<65x73xf32>, vector<73x32xf32>, vector<65x32xf32> -> vector<65x32xf32>
    %114 = arith.addf %108, %113 : vector<65x32xf32>
    %c0_114 = arith.constant 0 : index
    %c19 = arith.constant 19 : index
    %c0_115 = arith.constant 0 : index
    %115 = tpu.strided_load %arg1[%c0_114, %c19, %c0_115] {strides = array<i32: 1, 3, 1>} : memref<1x220x73xf32, #tpu.memory_space<vmem>>, vector<1x65x73xf32>
    %116 = vector.shape_cast %115 : vector<1x65x73xf32> to vector<65x73xf32>
    %c19_116 = arith.constant 19 : index
    %c0_117 = arith.constant 0 : index
    %c0_118 = arith.constant 0 : index
    %117 = vector.load %arg2[%c19_116, %c0_117, %c0_118] : memref<28x73x32xf32, #tpu.memory_space<vmem>>, vector<1x73x32xf32>
    %118 = vector.shape_cast %117 : vector<1x73x32xf32> to vector<73x32xf32>
    %cst_119 = arith.constant dense<0.000000e+00> : vector<65x32xf32>
    %119 = tpu.matmul %116, %118, %cst_119 {dimension_numbers = #tpu.dot_dimension_numbers<[1], [0], [0], [1], [0, 0, 1, 1], [], []>} : vector<65x73xf32>, vector<73x32xf32>, vector<65x32xf32> -> vector<65x32xf32>
    %120 = arith.addf %114, %119 : vector<65x32xf32>
    %c0_120 = arith.constant 0 : index
    %c20 = arith.constant 20 : index
    %c0_121 = arith.constant 0 : index
    %121 = tpu.strided_load %arg1[%c0_120, %c20, %c0_121] {strides = array<i32: 1, 3, 1>} : memref<1x220x73xf32, #tpu.memory_space<vmem>>, vector<1x65x73xf32>
    %122 = vector.shape_cast %121 : vector<1x65x73xf32> to vector<65x73xf32>
    %c20_122 = arith.constant 20 : index
    %c0_123 = arith.constant 0 : index
    %c0_124 = arith.constant 0 : index
    %123 = vector.load %arg2[%c20_122, %c0_123, %c0_124] : memref<28x73x32xf32, #tpu.memory_space<vmem>>, vector<1x73x32xf32>
    %124 = vector.shape_cast %123 : vector<1x73x32xf32> to vector<73x32xf32>
    %cst_125 = arith.constant dense<0.000000e+00> : vector<65x32xf32>
    %125 = tpu.matmul %122, %124, %cst_125 {dimension_numbers = #tpu.dot_dimension_numbers<[1], [0], [0], [1], [0, 0, 1, 1], [], []>} : vector<65x73xf32>, vector<73x32xf32>, vector<65x32xf32> -> vector<65x32xf32>
    %126 = arith.addf %120, %125 : vector<65x32xf32>
    %c0_126 = arith.constant 0 : index
    %c21 = arith.constant 21 : index
    %c0_127 = arith.constant 0 : index
    %127 = tpu.strided_load %arg1[%c0_126, %c21, %c0_127] {strides = array<i32: 1, 3, 1>} : memref<1x220x73xf32, #tpu.memory_space<vmem>>, vector<1x65x73xf32>
    %128 = vector.shape_cast %127 : vector<1x65x73xf32> to vector<65x73xf32>
    %c21_128 = arith.constant 21 : index
    %c0_129 = arith.constant 0 : index
    %c0_130 = arith.constant 0 : index
    %129 = vector.load %arg2[%c21_128, %c0_129, %c0_130] : memref<28x73x32xf32, #tpu.memory_space<vmem>>, vector<1x73x32xf32>
    %130 = vector.shape_cast %129 : vector<1x73x32xf32> to vector<73x32xf32>
    %cst_131 = arith.constant dense<0.000000e+00> : vector<65x32xf32>
    %131 = tpu.matmul %128, %130, %cst_131 {dimension_numbers = #tpu.dot_dimension_numbers<[1], [0], [0], [1], [0, 0, 1, 1], [], []>} : vector<65x73xf32>, vector<73x32xf32>, vector<65x32xf32> -> vector<65x32xf32>
    %132 = arith.addf %126, %131 : vector<65x32xf32>
    %c0_132 = arith.constant 0 : index
    %c22 = arith.constant 22 : index
    %c0_133 = arith.constant 0 : index
    %133 = tpu.strided_load %arg1[%c0_132, %c22, %c0_133] {strides = array<i32: 1, 3, 1>} : memref<1x220x73xf32, #tpu.memory_space<vmem>>, vector<1x65x73xf32>
    %134 = vector.shape_cast %133 : vector<1x65x73xf32> to vector<65x73xf32>
    %c22_134 = arith.constant 22 : index
    %c0_135 = arith.constant 0 : index
    %c0_136 = arith.constant 0 : index
    %135 = vector.load %arg2[%c22_134, %c0_135, %c0_136] : memref<28x73x32xf32, #tpu.memory_space<vmem>>, vector<1x73x32xf32>
    %136 = vector.shape_cast %135 : vector<1x73x32xf32> to vector<73x32xf32>
    %cst_137 = arith.constant dense<0.000000e+00> : vector<65x32xf32>
    %137 = tpu.matmul %134, %136, %cst_137 {dimension_numbers = #tpu.dot_dimension_numbers<[1], [0], [0], [1], [0, 0, 1, 1], [], []>} : vector<65x73xf32>, vector<73x32xf32>, vector<65x32xf32> -> vector<65x32xf32>
    %138 = arith.addf %132, %137 : vector<65x32xf32>
    %c0_138 = arith.constant 0 : index
    %c23 = arith.constant 23 : index
    %c0_139 = arith.constant 0 : index
    %139 = tpu.strided_load %arg1[%c0_138, %c23, %c0_139] {strides = array<i32: 1, 3, 1>} : memref<1x220x73xf32, #tpu.memory_space<vmem>>, vector<1x65x73xf32>
    %140 = vector.shape_cast %139 : vector<1x65x73xf32> to vector<65x73xf32>
    %c23_140 = arith.constant 23 : index
    %c0_141 = arith.constant 0 : index
    %c0_142 = arith.constant 0 : index
    %141 = vector.load %arg2[%c23_140, %c0_141, %c0_142] : memref<28x73x32xf32, #tpu.memory_space<vmem>>, vector<1x73x32xf32>
    %142 = vector.shape_cast %141 : vector<1x73x32xf32> to vector<73x32xf32>
    %cst_143 = arith.constant dense<0.000000e+00> : vector<65x32xf32>
    %143 = tpu.matmul %140, %142, %cst_143 {dimension_numbers = #tpu.dot_dimension_numbers<[1], [0], [0], [1], [0, 0, 1, 1], [], []>} : vector<65x73xf32>, vector<73x32xf32>, vector<65x32xf32> -> vector<65x32xf32>
    %144 = arith.addf %138, %143 : vector<65x32xf32>
    %c0_144 = arith.constant 0 : index
    %c24 = arith.constant 24 : index
    %c0_145 = arith.constant 0 : index
    %145 = tpu.strided_load %arg1[%c0_144, %c24, %c0_145] {strides = array<i32: 1, 3, 1>} : memref<1x220x73xf32, #tpu.memory_space<vmem>>, vector<1x65x73xf32>
    %146 = vector.shape_cast %145 : vector<1x65x73xf32> to vector<65x73xf32>
    %c24_146 = arith.constant 24 : index
    %c0_147 = arith.constant 0 : index
    %c0_148 = arith.constant 0 : index
    %147 = vector.load %arg2[%c24_146, %c0_147, %c0_148] : memref<28x73x32xf32, #tpu.memory_space<vmem>>, vector<1x73x32xf32>
    %148 = vector.shape_cast %147 : vector<1x73x32xf32> to vector<73x32xf32>
    %cst_149 = arith.constant dense<0.000000e+00> : vector<65x32xf32>
    %149 = tpu.matmul %146, %148, %cst_149 {dimension_numbers = #tpu.dot_dimension_numbers<[1], [0], [0], [1], [0, 0, 1, 1], [], []>} : vector<65x73xf32>, vector<73x32xf32>, vector<65x32xf32> -> vector<65x32xf32>
    %150 = arith.addf %144, %149 : vector<65x32xf32>
    %c0_150 = arith.constant 0 : index
    %c25 = arith.constant 25 : index
    %c0_151 = arith.constant 0 : index
    %151 = tpu.strided_load %arg1[%c0_150, %c25, %c0_151] {strides = array<i32: 1, 3, 1>} : memref<1x220x73xf32, #tpu.memory_space<vmem>>, vector<1x65x73xf32>
    %152 = vector.shape_cast %151 : vector<1x65x73xf32> to vector<65x73xf32>
    %c25_152 = arith.constant 25 : index
    %c0_153 = arith.constant 0 : index
    %c0_154 = arith.constant 0 : index
    %153 = vector.load %arg2[%c25_152, %c0_153, %c0_154] : memref<28x73x32xf32, #tpu.memory_space<vmem>>, vector<1x73x32xf32>
    %154 = vector.shape_cast %153 : vector<1x73x32xf32> to vector<73x32xf32>
    %cst_155 = arith.constant dense<0.000000e+00> : vector<65x32xf32>
    %155 = tpu.matmul %152, %154, %cst_155 {dimension_numbers = #tpu.dot_dimension_numbers<[1], [0], [0], [1], [0, 0, 1, 1], [], []>} : vector<65x73xf32>, vector<73x32xf32>, vector<65x32xf32> -> vector<65x32xf32>
    %156 = arith.addf %150, %155 : vector<65x32xf32>
    %c0_156 = arith.constant 0 : index
    %c26 = arith.constant 26 : index
    %c0_157 = arith.constant 0 : index
    %157 = tpu.strided_load %arg1[%c0_156, %c26, %c0_157] {strides = array<i32: 1, 3, 1>} : memref<1x220x73xf32, #tpu.memory_space<vmem>>, vector<1x65x73xf32>
    %158 = vector.shape_cast %157 : vector<1x65x73xf32> to vector<65x73xf32>
    %c26_158 = arith.constant 26 : index
    %c0_159 = arith.constant 0 : index
    %c0_160 = arith.constant 0 : index
    %159 = vector.load %arg2[%c26_158, %c0_159, %c0_160] : memref<28x73x32xf32, #tpu.memory_space<vmem>>, vector<1x73x32xf32>
    %160 = vector.shape_cast %159 : vector<1x73x32xf32> to vector<73x32xf32>
    %cst_161 = arith.constant dense<0.000000e+00> : vector<65x32xf32>
    %161 = tpu.matmul %158, %160, %cst_161 {dimension_numbers = #tpu.dot_dimension_numbers<[1], [0], [0], [1], [0, 0, 1, 1], [], []>} : vector<65x73xf32>, vector<73x32xf32>, vector<65x32xf32> -> vector<65x32xf32>
    %162 = arith.addf %156, %161 : vector<65x32xf32>
    %c0_162 = arith.constant 0 : index
    %c27 = arith.constant 27 : index
    %c0_163 = arith.constant 0 : index
    %163 = tpu.strided_load %arg1[%c0_162, %c27, %c0_163] {strides = array<i32: 1, 3, 1>} : memref<1x220x73xf32, #tpu.memory_space<vmem>>, vector<1x65x73xf32>
    %164 = vector.shape_cast %163 : vector<1x65x73xf32> to vector<65x73xf32>
    %c27_164 = arith.constant 27 : index
    %c0_165 = arith.constant 0 : index
    %c0_166 = arith.constant 0 : index
    %165 = vector.load %arg2[%c27_164, %c0_165, %c0_166] : memref<28x73x32xf32, #tpu.memory_space<vmem>>, vector<1x73x32xf32>
    %166 = vector.shape_cast %165 : vector<1x73x32xf32> to vector<73x32xf32>
    %cst_167 = arith.constant dense<0.000000e+00> : vector<65x32xf32>
    %167 = tpu.matmul %164, %166, %cst_167 {dimension_numbers = #tpu.dot_dimension_numbers<[1], [0], [0], [1], [0, 0, 1, 1], [], []>} : vector<65x73xf32>, vector<73x32xf32>, vector<65x32xf32> -> vector<65x32xf32>
    %168 = arith.addf %162, %167 : vector<65x32xf32>
    %c0_168 = arith.constant 0 : index
    %c0_169 = arith.constant 0 : index
    %169 = vector.load %arg3[%c0_168, %c0_169] : memref<1x32xf32, #tpu.memory_space<vmem>>, vector<1x32xf32>
    %170 = vector.broadcast %169 : vector<1x32xf32> to vector<65x32xf32>
    %171 = arith.addf %168, %170 : vector<65x32xf32>
    %c0_170 = arith.constant 0 : index
    %c0_171 = arith.constant 0 : index
    %c0_172 = arith.constant 0 : index
    %172 = vector.load %arg4[%c0_170, %c0_171, %c0_172] : memref<1x65x32xf32, #tpu.memory_space<vmem>>, vector<1x65x32xf32>
    %173 = vector.shape_cast %172 : vector<1x65x32xf32> to vector<65x32xf32>
    %174 = vector.shape_cast %171 : vector<65x32xf32> to vector<1x65x32xf32>
    tpu.vector_store %arg4[%c0_170, %c0_171, %c0_172], %174 {strides = array<i32>} : memref<1x65x32xf32, #tpu.memory_space<vmem>>, vector<1x65x32xf32>,
    return
  }
  func.func @transform_0(%arg0: i32) -> (i32, i32, i32) {
    %c0_i32 = arith.constant 0 : i32
    %c0_i32_0 = arith.constant 0 : i32
    %c0_i32_1 = arith.constant 0 : i32
    return %arg0, %c0_i32, %c0_i32_0 : i32, i32, i32
  }
  func.func @transform_1(%arg0: i32) -> (i32, i32, i32) {
    %c0_i32 = arith.constant 0 : i32
    %c0_i32_0 = arith.constant 0 : i32
    %c0_i32_1 = arith.constant 0 : i32
    %c0_i32_2 = arith.constant 0 : i32
    return %c0_i32, %c0_i32_0, %c0_i32_1 : i32, i32, i32
  }
  func.func @transform_2(%arg0: i32) -> (i32, i32) {
    %c0_i32 = arith.constant 0 : i32
    %c0_i32_0 = arith.constant 0 : i32
    %c0_i32_1 = arith.constant 0 : i32
    return %c0_i32, %c0_i32_0 : i32, i32
  }
  func.func @transform_3(%arg0: i32) -> (i32, i32, i32) {
    %c0_i32 = arith.constant 0 : i32
    %c0_i32_0 = arith.constant 0 : i32
    %c0_i32_1 = arith.constant 0 : i32
    return %arg0, %c0_i32, %c0_i32_0 : i32, i32, i32
  }
}

</mosaic_0001>

<llo_original>
// kernel: conv1d_nlc.1
$region0: #{conv1d_nlc.1}
  #allocation0 [shape = 'u32[]', space=smem, size = 0x4, offset = 0x4, fixed_abs, tag = 'smem constant byte address 0x4 - core index']
  #allocation1 [shape = 'u32[144,128]{1,0:T(1,128)}', space=vmem, size = 0x12000, scoped, tag = 'internal scratch']
  %s0 = inlined_call_operand.vmem [shape: f32[2,220,73], index: 0, kind: input, shape index: {}]
  %s1 = inlined_call_operand.vmem [shape: f32[28,73,32], index: 1, kind: input, shape index: {}]
  %s2 = inlined_call_operand.vmem [shape: f32[1,32], index: 2, kind: input, shape index: {}]
  %s3 = inlined_call_operand.vmem [shape: f32[2,65,32], index: 3, kind: output, shape index: {}]
  %s4 = sld [smem:[#allocation0]]
  $region45: #{conv1d_nlc.1} parent=0
    _
  %s6 = ssub.s32 1, %s4
  %s7 = scalar_select 0, %s6, %s4
  loop: start=0, step=1, limit=4
  $region2: #{conv1d_nlc.1} parent=0 // loop_pre_header
    _
  $region3: #{conv1d_nlc.1} parent=0 // loop_header
    %s9 = sphi 0, %s13
    %p10 = scmp.ge.s32.totalorder %s9, 4
    %s19 = sphi 0, %s21
    %s22 = sphi 0, %s19
    %s23 = sphi 0, %s22
    %s39 = sphi 0, %s23
    %s43 = sphi 0, %s43
    %s45 = sphi 0, %s43
    %s46 = sphi 0, %s45
    %s60 = sphi 0, %s46
    %s64 = sphi 0, %s64
    %s66 = sphi 0, %s64
    %s67 = sphi 0, %s66
    %s81 = sphi 0, %s67
    %s87 = sphi 0, %s89
    %s90 = sphi 0, %s87
    %s91 = sphi 0, %s90
    %s107 = sphi 0, %s91
  $region4: #{conv1d_nlc.1} parent=0 // loop_header_branch
    %12 = sbr.rel (%p10) target = $region8
  $region5: #{conv1d_nlc.1} parent=0 // loop_body
    %s14 = ssub.s32 %s9, 1
    %s15 = ssub.s32 %s9, 2
    %s16 = sadd.s32 %s9, 1
    %s17 = ssub.s32 %s9, %s16
    %p18 = scmp.eq.s32.totalorder %s17, 0
    %s20 = sadd.s32 %s19, 1
    %s21 = scalar_select %p18, %s19, %s20
    %p24 = pneg %p18
    %p25 = scmp.eq.s32.totalorder %s9, 1
    %p26 = por %p24, %p25
    %p27 = scmp.ne.s32.totalorder %s19, %s22
    %p28 = scmp.eq.s32.totalorder %s9, 0
    %p29 = por %p27, %p28
    %p30 = scmp.ne.s32.totalorder %s19, %s22
    %p31 = scmp.eq.s32.totalorder %s14, 1
    %p32 = por %p30, %p31
    %p33 = scmp.ne.s32.totalorder %s22, %s23
    %p34 = scmp.eq.s32.totalorder %s14, 0
    %p35 = por %p33, %p34
    %p36 = scmp.ne.s32.totalorder %s22, %s23
    %p37 = scmp.eq.s32.totalorder %s15, 1
    %p38 = por %p36, %p37
    %p40 = scmp.ne.s32.totalorder %s23, %s39
    %p41 = scmp.eq.s32.totalorder %s15, 0
    %p42 = por %p40, %p41
    %s44 = sadd.s32 %s43, 1
    %p47 = scmp.eq.s32.totalorder %s9, 1
    %p48 = scmp.ne.s32.totalorder %s43, %s45
    %p49 = scmp.eq.s32.totalorder %s9, 0
    %p50 = por %p48, %p49
    %p51 = scmp.ne.s32.totalorder %s43, %s45
    %p52 = scmp.eq.s32.totalorder %s14, 1
    %p53 = por %p51, %p52
    %p54 = scmp.ne.s32.totalorder %s45, %s46
    %p55 = scmp.eq.s32.totalorder %s14, 0
    %p56 = por %p54, %p55
    %p57 = scmp.ne.s32.totalorder %s45, %s46
    %p58 = scmp.eq.s32.totalorder %s15, 1
    %p59 = por %p57, %p58
    %p61 = scmp.ne.s32.totalorder %s46, %s60
    %p62 = scmp.eq.s32.totalorder %s15, 0
    %p63 = por %p61, %p62
    %s65 = sadd.s32 %s64, 1
    %p68 = scmp.eq.s32.totalorder %s9, 1
    %p69 = scmp.ne.s32.totalorder %s64, %s66
    %p70 = scmp.eq.s32.totalorder %s9, 0
    %p71 = por %p69, %p70
    %p72 = scmp.ne.s32.totalorder %s64, %s66
    %p73 = scmp.eq.s32.totalorder %s14, 1
    %p74 = por %p72, %p73
    %p75 = scmp.ne.s32.totalorder %s66, %s67
    %p76 = scmp.eq.s32.totalorder %s14, 0
    %p77 = por %p75, %p76
    %p78 = scmp.ne.s32.totalorder %s66, %s67
    %p79 = scmp.eq.s32.totalorder %s15, 1
    %p80 = por %p78, %p79
    %p82 = scmp.ne.s32.totalorder %s67, %s81
    %p83 = scmp.eq.s32.totalorder %s15, 0
    %p84 = por %p82, %p83
    %s85 = ssub.s32 %s9, %s16
    %p86 = scmp.eq.s32.totalorder %s85, 0
    %s88 = sadd.s32 %s87, 1
    %s89 = scalar_select %p86, %s87, %s88
    %p92 = pneg %p86
    %p93 = scmp.eq.s32.totalorder %s9, 1
    %p94 = por %p92, %p93
    %p95 = scmp.ne.s32.totalorder %s87, %s90
    %p96 = scmp.eq.s32.totalorder %s9, 0
    %p97 = por %p95, %p96
    %p98 = scmp.ne.s32.totalorder %s87, %s90
    %p99 = scmp.eq.s32.totalorder %s14, 1
    %p100 = por %p98, %p99
    %p101 = scmp.ne.s32.totalorder %s90, %s91
    %p102 = scmp.eq.s32.totalorder %s14, 0
    %p103 = por %p101, %p102
    %p104 = scmp.ne.s32.totalorder %s90, %s91
    %p105 = scmp.eq.s32.totalorder %s15, 1
    %p106 = por %p104, %p105
    %p108 = scmp.ne.s32.totalorder %s91, %s107
    %p109 = scmp.eq.s32.totalorder %s15, 0
    %p110 = por %p108, %p109
    %p111 = scmp.le.s32.totalorder 1, %s9
    %p112 = scmp.lt.s32.totalorder %s9, 3
    %p113 = pnand %p111, %p112
    %p114 = pneg %p113
    // Predicated region
    $region9: #{conv1d_nlc.1} parent=5 // pred_check
      _
    $region10: #{conv1d_nlc.1} parent=5 // pred_check_branch
      %116 = sbr.rel (%p113) target = $region12
    $region11: #{conv1d_nlc.1} parent=5 // pred_region
      %s117 = ssub.s32 %s9, 1
      // Predicated region
      $region13: #{conv1d_nlc.1} parent=11 // pred_check
        %p118 = pneg %p56
      $region14: #{conv1d_nlc.1} parent=11 // pred_check_branch
        %120 = sbr.rel (%p118) target = $region16
      $region15: #{conv1d_nlc.1} parent=11 // pred_region
        _
      $region16: #{conv1d_nlc.1} parent=11 // pred_fallthru
        _
      // Predicated region
      $region17: #{conv1d_nlc.1} parent=11 // pred_check
        %p121 = pneg %p77
      $region18: #{conv1d_nlc.1} parent=11 // pred_check_branch
        %123 = sbr.rel (%p121) target = $region20
      $region19: #{conv1d_nlc.1} parent=11 // pred_region
        _
      $region20: #{conv1d_nlc.1} parent=11 // pred_fallthru
        _
    $region12: #{conv1d_nlc.1} parent=5 // pred_fallthru
      _
    %p124 = scmp.lt.s32.totalorder %s9, 2
    // Predicated region
    $region21: #{conv1d_nlc.1} parent=5 // pred_check
      %p125 = pneg %p124
    $region22: #{conv1d_nlc.1} parent=5 // pred_check_branch
      %127 = sbr.rel (%p125) target = $region24
    $region23: #{conv1d_nlc.1} parent=5 // pred_region
      // Predicated region
      $region25: #{conv1d_nlc.1} parent=23 // pred_check
        %p128 = pneg %p29
      $region26: #{conv1d_nlc.1} parent=23 // pred_check_branch
        %130 = sbr.rel (%p128) target = $region28
      $region27: #{conv1d_nlc.1} parent=23 // pred_region
        %p131 = scmp.lt.s32.totalorder %s9, 1
        %s132 = scalar_select %p131, %s9, 1
        %s133 = smul.addr %s132, 28
        %s134 = smul.addr %s133, 8
        %s135 = scalar_lea.vmem %s0, %s134
      $region28: #{conv1d_nlc.1} parent=23 // pred_fallthru
        _
    $region24: #{conv1d_nlc.1} parent=5 // pred_fallthru
      _
    %p136 = scmp.le.s32.totalorder 1, %s9
    %p137 = scmp.lt.s32.totalorder %s9, 3
    %p138 = pnand %p136, %p137
    %p139 = pneg %p138
    // Predicated region
    $region29: #{conv1d_nlc.1} parent=5 // pred_check
      _
    $region30: #{conv1d_nlc.1} parent=5 // pred_check_branch
      %141 = sbr.rel (%p138) target = $region32
    $region31: #{conv1d_nlc.1} parent=5 // pred_region
      %s142 = ssub.s32 %s9, 1
      %p143 = scmp.lt.s32.totalorder %s14, 1
      %s144 = scalar_select %p143, %s14, 1
      %s145 = smul.addr %s144, 28
      %s146 = smul.addr %s145, 8
      %s147 = scalar_lea.vmem %s0, %s146
      %p148 = pneg %p35
      %p149 = pneg %p32
      %p150 = pneg %p56
      %p151 = pneg %p53
      %p152 = pneg %p77
      %p153 = pneg %p74
      %p154 = pneg %p103
      %p155 = pneg %p100
      %p156 = scmp.lt.s32.totalorder %s14, 1
      %s157 = scalar_select %p156, %s14, 1
      %s158 = smul.addr %s157, 9
      %s159 = smul.addr %s158, 8
      %s160 = scalar_lea.vmem %s3, %s159
      %p161 = scmp.lt.s32.totalorder %s14, 1
      %s162 = scalar_select %p161, %s14, 1
      %s163 = smul.addr %s162, 28
      %s164 = smul.addr %s163, 8
      %s165 = scalar_lea.vmem %s0, %s164
      %p166 = scmp.lt.s32.totalorder %s14, 1
      %s167 = scalar_select %p166, %s14, 1
      %s168 = smul.addr %s167, 9
      %s169 = smul.addr %s168, 8
      %s170 = scalar_lea.vmem %s3, %s169
      %v171 = vld [vmem:[%s165] ss:$3 sm:$0xff]
      %s172 = scalar_lea.vmem %s165, 24
      %v173 = vld [vmem:[%s172] ss:$3 sm:$0xff]
      %s174 = scalar_lea.vmem %s165, 48
      %v175 = vld [vmem:[%s174] ss:$3 sm:$0xff]
      %s176 = scalar_lea.vmem %s165, 72
      %v177 = vld [vmem:[%s176] ss:$3 sm:$0xff]
      %s178 = scalar_lea.vmem %s165, 96
      %v179 = vld [vmem:[%s178] ss:$3 sm:$0xff]
      %s180 = scalar_lea.vmem %s165, 120
      %v181 = vld [vmem:[%s180] ss:$3 sm:$0xff]
      %s182 = scalar_lea.vmem %s165, 144
      %v183 = vld [vmem:[%s182] ss:$3 sm:$0xff]
      %s184 = scalar_lea.vmem %s165, 168
      %v185 = vld [vmem:[%s184] ss:$3 sm:$0xff]
      %s186 = scalar_lea.vmem %s165, 192
      %v187 = vld [vmem:[%s186] ss:$3 sm:$0x1]
      %v188 = vld [vmem:[%s1] sm:$0xff]
      %v189 = vld [vmem:[%s1 + $0x8] sm:$0xff]
      %v190 = vld [vmem:[%s1 + $0x10] sm:$0xff]
      %v191 = vld [vmem:[%s1 + $0x18] sm:$0xff]
      %v192 = vld [vmem:[%s1 + $0x20] sm:$0xff]
      %v193 = vld [vmem:[%s1 + $0x28] sm:$0xff]
      %v194 = vld [vmem:[%s1 + $0x30] sm:$0xff]
      %v195 = vld [vmem:[%s1 + $0x38] sm:$0xff]
      %v196 = vld [vmem:[%s1 + $0x40] sm:$0xff]
      %v197 = vld [vmem:[%s1 + $0x48] sm:$0x1]
      %s198 = scalar_lea.vmem %s165, 1
      %v199 = vld [vmem:[%s198] ss:$3 sm:$0xff]
      %s200 = scalar_lea.vmem %s165, 25
      %v201 = vld [vmem:[%s200] ss:$3 sm:$0xff]
      %s202 = scalar_lea.vmem %s165, 49
      %v203 = vld [vmem:[%s202] ss:$3 sm:$0xff]
      %s204 = scalar_lea.vmem %s165, 73
      %v205 = vld [vmem:[%s204] ss:$3 sm:$0xff]
      %s206 = scalar_lea.vmem %s165, 97
      %v207 = vld [vmem:[%s206] ss:$3 sm:$0xff]
      %s208 = scalar_lea.vmem %s165, 121
      %v209 = vld [vmem:[%s208] ss:$3 sm:$0xff]
      %s210 = scalar_lea.vmem %s165, 145
      %v211 = vld [vmem:[%s210] ss:$3 sm:$0xff]
      %s212 = scalar_lea.vmem %s165, 169
      %v213 = vld [vmem:[%s212] ss:$3 sm:$0xff]
      %s214 = scalar_lea.vmem %s165, 193
      %v215 = vld [vmem:[%s214] ss:$3 sm:$0x1]
      %s216 = scalar_lea.vmem %s1, 80
      %v217 = vld [vmem:[%s216] sm:$0xff]
      %v218 = vld [vmem:[%s216 + $0x8] sm:$0xff]
      %v219 = vld [vmem:[%s216 + $0x10] sm:$0xff]
      %v220 = vld [vmem:[%s216 + $0x18] sm:$0xff]
      %v221 = vld [vmem:[%s216 + $0x20] sm:$0xff]
      %v222 = vld [vmem:[%s216 + $0x28] sm:$0xff]
      %v223 = vld [vmem:[%s216 + $0x30] sm:$0xff]
      %v224 = vld [vmem:[%s216 + $0x38] sm:$0xff]
      %v225 = vld [vmem:[%s216 + $0x40] sm:$0xff]
      %v226 = vld [vmem:[%s216 + $0x48] sm:$0x1]
      %vm227 = vcmask 596992
      %v229 = vsel %vm227, %v199, 0
      %v232 = vsel %vm227, %v201, 0
      %v235 = vsel %vm227, %v203, 0
      %v238 = vsel %vm227, %v205, 0
      %v241 = vsel %vm227, %v207, 0
      %v244 = vsel %vm227, %v209, 0
      %v247 = vsel %vm227, %v211, 0
      %v250 = vsel %vm227, %v213, 0
      %v253 = vsel %vm227, %v215, 0
      %vm255 = vcmask 1040384
      %v257 = vsel %vm255, %v226, 0
      %259 = vmatprep.subr.mxu0 0.0
      %260 = vmatpush1.msra.mxu0 %v217
      %261 = vmatprep.subr.mxu0 0.0
      %262 = vmatpush1.msra.mxu0 %v218
      %263 = vmatprep.subr.mxu0 0.0
      %264 = vmatpush1.msra.mxu0 %v219
      %265 = vmatprep.subr.mxu0 0.0
      %266 = vmatpush1.msra.mxu0 %v220
      %267 = vmatprep.subr.mxu0 0.0
      %268 = vmatpush1.msra.mxu0 %v221
      %269 = vmatprep.subr.mxu0 0.0
      %270 = vmatpush1.msra.mxu0 %v222
      %271 = vmatprep.subr.mxu0 0.0
      %272 = vmatpush1.msra.mxu0 %v223
      %273 = vmatprep.subr.mxu0 0.0
      %274 = vmatpush1.msra.mxu0 %v224
      %275 = vmatprep.subr.mxu0 0.0
      %276 = vmatpush1.msra.mxu0 %v225
      %277 = vmatprep.subr.mxu0 0.0
      %278 = vmatpush1.msra.mxu0 %v257
      %279 = vmatprep.subr.mxu0 0.0
      %280 = vmatpush1.msra.mxu0 0.0
      %281 = vmatprep.subr.mxu0 0.0
      %282 = vmatpush1.msra.mxu0 0.0
      %283 = vmatprep.subr.mxu0 0.0
      %284 = vmatpush1.msra.mxu0 0.0
      %285 = vmatprep.subr.mxu0 0.0
      %286 = vmatpush1.msra.mxu0 0.0
      %287 = vmatprep.subr.mxu0 0.0
      %288 = vmatpush1.msra.mxu0 0.0
      %289 = vmatprep.subr.mxu0 0.0
      %290 = vmatpush1.msra.mxu0 0.0
      %291 = vmatprep.subr.mxu0 0.0
      %292 = vmatpush1.msra.mxu0 0.0
      %293 = vmatprep.subr.mxu0 0.0
      %294 = vmatpush1.msra.mxu0 0.0
      %295 = vmatprep.subr.mxu0 0.0
      %296 = vmatpush1.msra.mxu0 0.0
      %297 = vmatprep.subr.mxu0 0.0
      %298 = vmatpush1.msra.mxu0 0.0
      %299 = vmatprep.subr.mxu0 0.0
      %300 = vmatpush1.msra.mxu0 0.0
      %301 = vmatprep.subr.mxu0 0.0
      %302 = vmatpush1.msra.mxu0 0.0
      %303 = vmatprep.subr.mxu0 0.0
      %304 = vmatpush1.msra.mxu0 0.0
      %305 = vmatprep.subr.mxu0 0.0
      %306 = vmatpush1.msra.mxu0 0.0
      %307 = vmatprep.subr.mxu0 0.0
      %308 = vmatpush1.msra.mxu0 0.0
      %309 = vmatprep.subr.mxu0 0.0
      %310 = vmatpush1.msra.mxu0 0.0
      %311 = vmatprep.subr.mxu0 0.0
      %312 = vmatpush1.msra.mxu0 0.0
      %313 = vmatprep.subr.mxu0 0.0
      %314 = vmatpush1.msra.mxu0 0.0
      %315 = vmatprep.subr.mxu0 0.0
      %316 = vmatpush1.msra.mxu0 0.0
      %317 = vmatprep.subr.mxu0 0.0
      %318 = vmatpush1.msra.mxu0 0.0
      %319 = vmatprep.subr.mxu0 0.0
      %320 = vmatpush1.msra.mxu0 0.0
      %321 = vmatprep.subr.mxu0 0.0
      %322 = vmatpush1.msra.mxu0 0.0
      %323 = vmatprep.mubr.f32.mxu0 0.0
      %324 = vmatmul.mubr.f32.gmra.mrb[0].mxu0 %v229
      %v325 = vpop.f32.mrb[0].mxu0
      %v326 = vadd.f32 0.0, %v325
      %v327 = vpop.f32.mrb[0].mxu0
      %328 = vmatprep.mubr.f32.mxu0 0.0
      %329 = vmatmul.mubr.f32.gmra.mrb[0].mxu0 %v232
      %v330 = vpop.f32.mrb[0].mxu0
      %v331 = vadd.f32 0.0, %v330
      %v332 = vpop.f32.mrb[0].mxu0
      %333 = vmatprep.mubr.f32.mxu0 0.0
      %334 = vmatmul.mubr.f32.gmra.mrb[0].mxu0 %v235
      %v335 = vpop.f32.mrb[0].mxu0
      %v336 = vadd.f32 0.0, %v335
      %v337 = vpop.f32.mrb[0].mxu0
      %338 = vmatprep.mubr.f32.mxu0 0.0
      %339 = vmatmul.mubr.f32.gmra.mrb[0].mxu0 %v238
      %v340 = vpop.f32.mrb[0].mxu0
      %v341 = vadd.f32 0.0, %v340
      %v342 = vpop.f32.mrb[0].mxu0
      %343 = vmatprep.mubr.f32.mxu0 0.0
      %344 = vmatmul.mubr.f32.gmra.mrb[0].mxu0 %v241
      %v345 = vpop.f32.mrb[0].mxu0
      %v346 = vadd.f32 0.0, %v345
      %v347 = vpop.f32.mrb[0].mxu0
      %348 = vmatprep.mubr.f32.mxu0 0.0
      %349 = vmatmul.mubr.f32.gmra.mrb[0].mxu0 %v244
      %v350 = vpop.f32.mrb[0].mxu0
      %v351 = vadd.f32 0.0, %v350
      %v352 = vpop.f32.mrb[0].mxu0
      %353 = vmatprep.mubr.f32.mxu0 0.0
      %354 = vmatmul.mubr.f32.gmra.mrb[0].mxu0 %v247
      %v355 = vpop.f32.mrb[0].mxu0
      %v356 = vadd.f32 0.0, %v355
      %v357 = vpop.f32.mrb[0].mxu0
      %358 = vmatprep.mubr.f32.mxu0 0.0
      %359 = vmatmul.mubr.f32.gmra.mrb[0].mxu0 %v250
      %v360 = vpop.f32.mrb[0].mxu0
      %v361 = vadd.f32 0.0, %v360
      %v362 = vpop.f32.mrb[0].mxu0
      %363 = vmatprep.mubr.f32.mxu0 0.0
      %364 = vmatmul.mubr.f32.gmra.mrb[0].mxu0 %v253
      %v365 = vpop.f32.mrb[0].mxu0
      %v366 = vadd.f32 0.0, %v365
      %v367 = vpop.f32.mrb[0].mxu0
      %368 = vdwg.mxu0
      %v370 = vsel %vm227, %v171, 0
      %v373 = vsel %vm227, %v173, 0
      %v376 = vsel %vm227, %v175, 0
      %v379 = vsel %vm227, %v177, 0
      %v382 = vsel %vm227, %v179, 0
      %v385 = vsel %vm227, %v181, 0
      %v388 = vsel %vm227, %v183, 0
      %v391 = vsel %vm227, %v185, 0
      %v394 = vsel %vm227, %v187, 0
      %v397 = vsel %vm255, %v197, 0
      %399 = vmatprep.subr.mxu0 0.0
      %400 = vmatpush1.msra.mxu0 %v188
      %401 = vmatprep.subr.mxu0 0.0
      %402 = vmatpush1.msra.mxu0 %v189
      %403 = vmatprep.subr.mxu0 0.0
      %404 = vmatpush1.msra.mxu0 %v190
      %405 = vmatprep.subr.mxu0 0.0
      %406 = vmatpush1.msra.mxu0 %v191
      %407 = vmatprep.subr.mxu0 0.0
      %408 = vmatpush1.msra.mxu0 %v192
      %409 = vmatprep.subr.mxu0 0.0
      %410 = vmatpush1.msra.mxu0 %v193
      %411 = vmatprep.subr.mxu0 0.0
      %412 = vmatpush1.msra.mxu0 %v194
      %413 = vmatprep.subr.mxu0 0.0
      %414 = vmatpush1.msra.mxu0 %v195
      %415 = vmatprep.subr.mxu0 0.0
      %416 = vmatpush1.msra.mxu0 %v196
      %417 = vmatprep.subr.mxu0 0.0
      %418 = vmatpush1.msra.mxu0 %v397
      %419 = vmatprep.subr.mxu0 0.0
      %420 = vmatpush1.msra.mxu0 0.0
      %421 = vmatprep.subr.mxu0 0.0
      %422 = vmatpush1.msra.mxu0 0.0
      %423 = vmatprep.subr.mxu0 0.0
      %424 = vmatpush1.msra.mxu0 0.0
      %425 = vmatprep.subr.mxu0 0.0
      %426 = vmatpush1.msra.mxu0 0.0
      %427 = vmatprep.subr.mxu0 0.0
      %428 = vmatpush1.msra.mxu0 0.0
      %429 = vmatprep.subr.mxu0 0.0
      %430 = vmatpush1.msra.mxu0 0.0
      %431 = vmatprep.subr.mxu0 0.0
      %432 = vmatpush1.msra.mxu0 0.0
      %433 = vmatprep.subr.mxu0 0.0
      %434 = vmatpush1.msra.mxu0 0.0
      %435 = vmatprep.subr.mxu0 0.0
      %436 = vmatpush1.msra.mxu0 0.0
      %437 = vmatprep.subr.mxu0 0.0
      %438 = vmatpush1.msra.mxu0 0.0
      %439 = vmatprep.subr.mxu0 0.0
      %440 = vmatpush1.msra.mxu0 0.0
      %441 = vmatprep.subr.mxu0 0.0
      %442 = vmatpush1.msra.mxu0 0.0
      %443 = vmatprep.subr.mxu0 0.0
      %444 = vmatpush1.msra.mxu0 0.0
      %445 = vmatprep.subr.mxu0 0.0
      %446 = vmatpush1.msra.mxu0 0.0
      %447 = vmatprep.subr.mxu0 0.0
      %448 = vmatpush1.msra.mxu0 0.0
      %449 = vmatprep.subr.mxu0 0.0
      %450 = vmatpush1.msra.mxu0 0.0
      %451 = vmatprep.subr.mxu0 0.0
      %452 = vmatpush1.msra.mxu0 0.0
      %453 = vmatprep.subr.mxu0 0.0
      %454 = vmatpush1.msra.mxu0 0.0
      %455 = vmatprep.subr.mxu0 0.0
      %456 = vmatpush1.msra.mxu0 0.0
      %457 = vmatprep.subr.mxu0 0.0
      %458 = vmatpush1.msra.mxu0 0.0
      %459 = vmatprep.subr.mxu0 0.0
      %460 = vmatpush1.msra.mxu0 0.0
      %461 = vmatprep.subr.mxu0 0.0
      %462 = vmatpush1.msra.mxu0 0.0
      %463 = vmatprep.mubr.f32.mxu0 0.0
      %464 = vmatmul.mubr.f32.gmra.mrb[0].mxu0 %v370
      %v465 = vpop.f32.mrb[0].mxu0
      %v466 = vadd.f32 %v326, %v465
      %v467 = vpop.f32.mrb[0].mxu0
      %468 = vmatprep.mubr.f32.mxu0 0.0
      %469 = vmatmul.mubr.f32.gmra.mrb[0].mxu0 %v373
      %v470 = vpop.f32.mrb[0].mxu0
      %v471 = vadd.f32 %v331, %v470
      %v472 = vpop.f32.mrb[0].mxu0
      %473 = vmatprep.mubr.f32.mxu0 0.0
      %474 = vmatmul.mubr.f32.gmra.mrb[0].mxu0 %v376
      %v475 = vpop.f32.mrb[0].mxu0
      %v476 = vadd.f32 %v336, %v475
      %v477 = vpop.f32.mrb[0].mxu0
      %478 = vmatprep.mubr.f32.mxu0 0.0
      %479 = vmatmul.mubr.f32.gmra.mrb[0].mxu0 %v379
      %v480 = vpop.f32.mrb[0].mxu0
      %v481 = vadd.f32 %v341, %v480
      %v482 = vpop.f32.mrb[0].mxu0
      %483 = vmatprep.mubr.f32.mxu0 0.0
      %484 = vmatmul.mubr.f32.gmra.mrb[0].mxu0 %v382
      %v485 = vpop.f32.mrb[0].mxu0
      %v486 = vadd.f32 %v346, %v485
      %v487 = vpop.f32.mrb[0].mxu0
      %488 = vmatprep.mubr.f32.mxu0 0.0
      %489 = vmatmul.mubr.f32.gmra.mrb[0].mxu0 %v385
      %v490 = vpop.f32.mrb[0].mxu0
      %v491 = vadd.f32 %v351, %v490
      %v492 = vpop.f32.mrb[0].mxu0
      %493 = vmatprep.mubr.f32.mxu0 0.0
      %494 = vmatmul.mubr.f32.gmra.mrb[0].mxu0 %v388
      %v495 = vpop.f32.mrb[0].mxu0
      %v496 = vadd.f32 %v356, %v495
      %v497 = vpop.f32.mrb[0].mxu0
      %498 = vmatprep.mubr.f32.mxu0 0.0
      %499 = vmatmul.mubr.f32.gmra.mrb[0].mxu0 %v391
      %v500 = vpop.f32.mrb[0].mxu0
      %v501 = vadd.f32 %v361, %v500
      %v502 = vpop.f32.mrb[0].mxu0
      %503 = vmatprep.mubr.f32.mxu0 0.0
      %504 = vmatmul.mubr.f32.gmra.mrb[0].mxu0 %v394
      %v505 = vpop.f32.mrb[0].mxu0
      %v506 = vadd.f32 %v366, %v505
      %v507 = vpop.f32.mrb[0].mxu0
      %508 = vdwg.mxu0
      %s509 = scalar_lea.vmem %s165, 2
      %v510 = vld [vmem:[%s509] ss:$3 sm:$0xff]
      %s511 = scalar_lea.vmem %s165, 26
      %v512 = vld [vmem:[%s511] ss:$3 sm:$0xff]
      %s513 = scalar_lea.vmem %s165, 50
      %v514 = vld [vmem:[%s513] ss:$3 sm:$0xff]
      %s515 = scalar_lea.vmem %s165, 74
      %v516 = vld [vmem:[%s515] ss:$3 sm:$0xff]
      %s517 = scalar_lea.vmem %s165, 98
      %v518 = vld [vmem:[%s517] ss:$3 sm:$0xff]
      %s519 = scalar_lea.vmem %s165, 122
      %v520 = vld [vmem:[%s519] ss:$3 sm:$0xff]
      %s521 = scalar_lea.vmem %s165, 146
      %v522 = vld [vmem:[%s521] ss:$3 sm:$0xff]
      %s523 = scalar_lea.vmem %s165, 170
      %v524 = vld [vmem:[%s523] ss:$3 sm:$0xff]
      %s525 = scalar_lea.vmem %s165, 194
      %v526 = vld [vmem:[%s525] ss:$3 sm:$0x1]
      %s527 = scalar_lea.vmem %s1, 160
      %v528 = vld [vmem:[%s527] sm:$0xff]
      %v529 = vld [vmem:[%s527 + $0x8] sm:$0xff]
      %v530 = vld [vmem:[%s527 + $0x10] sm:$0xff]
      %v531 = vld [vmem:[%s527 + $0x18] sm:$0xff]
      %v532 = vld [vmem:[%s527 + $0x20] sm:$0xff]
      %v533 = vld [vmem:[%s527 + $0x28] sm:$0xff]
      %v534 = vld [vmem:[%s527 + $0x30] sm:$0xff]
      %v535 = vld [vmem:[%s527 + $0x38] sm:$0xff]
      %v536 = vld [vmem:[%s527 + $0x40] sm:$0xff]
      %v537 = vld [vmem:[%s527 + $0x48] sm:$0x1]
      %v539 = vsel %vm227, %v510, 0
      %v542 = vsel %vm227, %v512, 0
      %v545 = vsel %vm227, %v514, 0
      %v548 = vsel %vm227, %v516, 0
      %v551 = vsel %vm227, %v518, 0
      %v554 = vsel %vm227, %v520, 0
      %v557 = vsel %vm227, %v522, 0
      %v560 = vsel %vm227, %v524, 0
      %v563 = vsel %vm227, %v526, 0
      %v566 = vsel %vm255, %v537, 0
      %568 = vmatprep.subr.mxu0 0.0
      %569 = vmatpush1.msra.mxu0 %v528
      %570 = vmatprep.subr.mxu0 0.0
      %571 = vmatpush1.msra.mxu0 %v529
      %572 = vmatprep.subr.mxu0 0.0
      %573 = vmatpush1.msra.mxu0 %v530
      %574 = vmatprep.subr.mxu0 0.0
      %575 = vmatpush1.msra.mxu0 %v531
      %576 = vmatprep.subr.mxu0 0.0
      %577 = vmatpush1.msra.mxu0 %v532
      %578 = vmatprep.subr.mxu0 0.0
      %579 = vmatpush1.msra.mxu0 %v533
      %580 = vmatprep.subr.mxu0 0.0
      %581 = vmatpush1.msra.mxu0 %v534
      %582 = vmatprep.subr.mxu0 0.0
      %583 = vmatpush1.msra.mxu0 %v535
      %584 = vmatprep.subr.mxu0 0.0
      %585 = vmatpush1.msra.mxu0 %v536
      %586 = vmatprep.subr.mxu0 0.0
      %587 = vmatpush1.msra.mxu0 %v566
      %588 = vmatprep.subr.mxu0 0.0
      %589 = vmatpush1.msra.mxu0 0.0
      %590 = vmatprep.subr.mxu0 0.0
      %591 = vmatpush1.msra.mxu0 0.0
      %592 = vmatprep.subr.mxu0 0.0
      %593 = vmatpush1.msra.mxu0 0.0
      %594 = vmatprep.subr.mxu0 0.0
      %595 = vmatpush1.msra.mxu0 0.0
      %596 = vmatprep.subr.mxu0 0.0
      %597 = vmatpush1.msra.mxu0 0.0
      %598 = vmatprep.subr.mxu0 0.0
      %599 = vmatpush1.msra.mxu0 0.0
      %600 = vmatprep.subr.mxu0 0.0
      %601 = vmatpush1.msra.mxu0 0.0
      %602 = vmatprep.subr.mxu0 0.0
      %603 = vmatpush1.msra.mxu0 0.0
      %604 = vmatprep.subr.mxu0 0.0
      %605 = vmatpush1.msra.mxu0 0.0
      %606 = vmatprep.subr.mxu0 0.0
      %607 = vmatpush1.msra.mxu0 0.0
      %608 = vmatprep.subr.mxu0 0.0
      %609 = vmatpush1.msra.mxu0 0.0
      %610 = vmatprep.subr.mxu0 0.0
      %611 = vmatpush1.msra.mxu0 0.0
      %612 = vmatprep.subr.mxu0 0.0
      %613 = vmatpush1.msra.mxu0 0.0
      %614 = vmatprep.subr.mxu0 0.0
      %615 = vmatpush1.msra.mxu0 0.0
      %616 = vmatprep.subr.mxu0 0.0
      %617 = vmatpush1.msra.mxu0 0.0
      %618 = vmatprep.subr.mxu0 0.0
      %619 = vmatpush1.msra.mxu0 0.0
      %620 = vmatprep.subr.mxu0 0.0
      %621 = vmatpush1.msra.mxu0 0.0
      %622 = vmatprep.subr.mxu0 0.0
      %623 = vmatpush1.msra.mxu0 0.0
      %624 = vmatprep.subr.mxu0 0.0
      %625 = vmatpush1.msra.mxu0 0.0
      %626 = vmatprep.subr.mxu0 0.0
      %627 = vmatpush1.msra.mxu0 0.0
      %628 = vmatprep.subr.mxu0 0.0
      %629 = vmatpush1.msra.mxu0 0.0
      %630 = vmatprep.subr.mxu0 0.0
      %631 = vmatpush1.msra.mxu0 0.0
      %632 = vmatprep.mubr.f32.mxu0 0.0
      %633 = vmatmul.mubr.f32.gmra.mrb[0].mxu0 %v539
      %v634 = vpop.f32.mrb[0].mxu0
      %v635 = vadd.f32 0.0, %v634
      %v636 = vpop.f32.mrb[0].mxu0
      %637 = vmatprep.mubr.f32.mxu0 0.0
      %638 = vmatmul.mubr.f32.gmra.mrb[0].mxu0 %v542
      %v639 = vpop.f32.mrb[0].mxu0
      %v640 = vadd.f32 0.0, %v639
      %v641 = vpop.f32.mrb[0].mxu0
      %642 = vmatprep.mubr.f32.mxu0 0.0
      %643 = vmatmul.mubr.f32.gmra.mrb[0].mxu0 %v545
      %v644 = vpop.f32.mrb[0].mxu0
      %v645 = vadd.f32 0.0, %v644
      %v646 = vpop.f32.mrb[0].mxu0
      %647 = vmatprep.mubr.f32.mxu0 0.0
      %648 = vmatmul.mubr.f32.gmra.mrb[0].mxu0 %v548
      %v649 = vpop.f32.mrb[0].mxu0
      %v650 = vadd.f32 0.0, %v649
      %v651 = vpop.f32.mrb[0].mxu0
      %652 = vmatprep.mubr.f32.mxu0 0.0
      %653 = vmatmul.mubr.f32.gmra.mrb[0].mxu0 %v551
      %v654 = vpop.f32.mrb[0].mxu0
      %v655 = vadd.f32 0.0, %v654
      %v656 = vpop.f32.mrb[0].mxu0
      %657 = vmatprep.mubr.f32.mxu0 0.0
      %658 = vmatmul.mubr.f32.gmra.mrb[0].mxu0 %v554
      %v659 = vpop.f32.mrb[0].mxu0
      %v660 = vadd.f32 0.0, %v659
      %v661 = vpop.f32.mrb[0].mxu0
      %662 = vmatprep.mubr.f32.mxu0 0.0
      %663 = vmatmul.mubr.f32.gmra.mrb[0].mxu0 %v557
      %v664 = vpop.f32.mrb[0].mxu0
      %v665 = vadd.f32 0.0, %v664
      %v666 = vpop.f32.mrb[0].mxu0
      %667 = vmatprep.mubr.f32.mxu0 0.0
      %668 = vmatmul.mubr.f32.gmra.mrb[0].mxu0 %v560
      %v669 = vpop.f32.mrb[0].mxu0
      %v670 = vadd.f32 0.0, %v669
      %v671 = vpop.f32.mrb[0].mxu0
      %672 = vmatprep.mubr.f32.mxu0 0.0
      %673 = vmatmul.mubr.f32.gmra.mrb[0].mxu0 %v563
      %v674 = vpop.f32.mrb[0].mxu0
      %v675 = vadd.f32 0.0, %v674
      %v676 = vpop.f32.mrb[0].mxu0
      %677 = vdwg.mxu0
      %v678 = vadd.f32 %v466, %v635
      %v679 = vadd.f32 %v471, %v640
      %v680 = vadd.f32 %v476, %v645
      %v681 = vadd.f32 %v481, %v650
      %v682 = vadd.f32 %v486, %v655
      %v683 = vadd.f32 %v491, %v660
      %v684 = vadd.f32 %v496, %v665
      %v685 = vadd.f32 %v501, %v670
      %v686 = vadd.f32 %v506, %v675
      %s687 = scalar_lea.vmem %s165, 3
      %v688 = vld [vmem:[%s687] ss:$3 sm:$0xff]
      %s689 = scalar_lea.vmem %s165, 27
      %v690 = vld [vmem:[%s689] ss:$3 sm:$0xff]
      %s691 = scalar_lea.vmem %s165, 51
      %v692 = vld [vmem:[%s691] ss:$3 sm:$0xff]
      %s693 = scalar_lea.vmem %s165, 75
      %v694 = vld [vmem:[%s693] ss:$3 sm:$0xff]
      %s695 = scalar_lea.vmem %s165, 99
      %v696 = vld [vmem:[%s695] ss:$3 sm:$0xff]
      %s697 = scalar_lea.vmem %s165, 123
      %v698 = vld [vmem:[%s697] ss:$3 sm:$0xff]
      %s699 = scalar_lea.vmem %s165, 147
      %v700 = vld [vmem:[%s699] ss:$3 sm:$0xff]
      %s701 = scalar_lea.vmem %s165, 171
      %v702 = vld [vmem:[%s701] ss:$3 sm:$0xff]
      %s703 = scalar_lea.vmem %s165, 195
      %v704 = vld [vmem:[%s703] ss:$3 sm:$0x1]
      %s705 = scalar_lea.vmem %s1, 240
      %v706 = vld [vmem:[%s705] sm:$0xff]
      %v707 = vld [vmem:[%s705 + $0x8] sm:$0xff]
      %v708 = vld [vmem:[%s705 + $0x10] sm:$0xff]
      %v709 = vld [vmem:[%s705 + $0x18] sm:$0xff]
      %v710 = vld [vmem:[%s705 + $0x20] sm:$0xff]
      %v711 = vld [vmem:[%s705 + $0x28] sm:$0xff]
      %v712 = vld [vmem:[%s705 + $0x30] sm:$0xff]
      %v713 = vld [vmem:[%s705 + $0x38] sm:$0xff]
      %v714 = vld [vmem:[%s705 + $0x40] sm:$0xff]
      %v715 = vld [vmem:[%s705 + $0x48] sm:$0x1]
      %v717 = vsel %vm227, %v688, 0
      %v720 = vsel %vm227, %v690, 0
      %v723 = vsel %vm227, %v692, 0
      %v726 = vsel %vm227, %v694, 0
      %v729 = vsel %vm227, %v696, 0
      %v732 = vsel %vm227, %v698, 0
      %v735 = vsel %vm227, %v700, 0
      %v738 = vsel %vm227, %v702, 0
      %v741 = vsel %vm227, %v704, 0
      %v744 = vsel %vm255, %v715, 0
      %746 = vmatprep.subr.mxu0 0.0
      %747 = vmatpush1.msra.mxu0 %v706
      %748 = vmatprep.subr.mxu0 0.0
      %749 = vmatpush1.msra.mxu0 %v707
      %750 = vmatprep.subr.mxu0 0.0
      %751 = vmatpush1.msra.mxu0 %v708
      %752 = vmatprep.subr.mxu0 0.0
      %753 = vmatpush1.msra.mxu0 %v709
      %754 = vmatprep.subr.mxu0 0.0
      %755 = vmatpush1.msra.mxu0 %v710
      %756 = vmatprep.subr.mxu0 0.0
      %757 = vmatpush1.msra.mxu0 %v711
      %758 = vmatprep.subr.mxu0 0.0
      %759 = vmatpush1.msra.mxu0 %v712
      %760 = vmatprep.subr.mxu0 0.0
      %761 = vmatpush1.msra.mxu0 %v713
      %762 = vmatprep.subr.mxu0 0.0
      %763 = vmatpush1.msra.mxu0 %v714
      %764 = vmatprep.subr.mxu0 0.0
      %765 = vmatpush1.msra.mxu0 %v744
      %766 = vmatprep.subr.mxu0 0.0
      %767 = vmatpush1.msra.mxu0 0.0
      %768 = vmatprep.subr.mxu0 0.0
      %769 = vmatpush1.msra.mxu0 0.0
      %770 = vmatprep.subr.mxu0 0.0
      %771 = vmatpush1.msra.mxu0 0.0
      %772 = vmatprep.subr.mxu0 0.0
      %773 = vmatpush1.msra.mxu0 0.0
      %774 = vmatprep.subr.mxu0 0.0
      %775 = vmatpush1.msra.mxu0 0.0
      %776 = vmatprep.subr.mxu0 0.0
      %777 = vmatpush1.msra.mxu0 0.0
      %778 = vmatprep.subr.mxu0 0.0
      %779 = vmatpush1.msra.mxu0 0.0
      %780 = vmatprep.subr.mxu0 0.0
      %781 = vmatpush1.msra.mxu0 0.0
      %782 = vmatprep.subr.mxu0 0.0
      %783 = vmatpush1.msra.mxu0 0.0
      %784 = vmatprep.subr.mxu0 0.0
      %785 = vmatpush1.msra.mxu0 0.0
      %786 = vmatprep.subr.mxu0 0.0
      %787 = vmatpush1.msra.mxu0 0.0
      %788 = vmatprep.subr.mxu0 0.0
      %789 = vmatpush1.msra.mxu0 0.0
      %790 = vmatprep.subr.mxu0 0.0
      %791 = vmatpush1.msra.mxu0 0.0
      %792 = vmatprep.subr.mxu0 0.0
      %793 = vmatpush1.msra.mxu0 0.0
      %794 = vmatprep.subr.mxu0 0.0
      %795 = vmatpush1.msra.mxu0 0.0
      %796 = vmatprep.subr.mxu0 0.0
      %797 = vmatpush1.msra.mxu0 0.0
      %798 = vmatprep.subr.mxu0 0.0
      %799 = vmatpush1.msra.mxu0 0.0
      %800 = vmatprep.subr.mxu0 0.0
      %801 = vmatpush1.msra.mxu0 0.0
      %802 = vmatprep.subr.mxu0 0.0
      %803 = vmatpush1.msra.mxu0 0.0
      %804 = vmatprep.subr.mxu0 0.0
      %805 = vmatpush1.msra.mxu0 0.0
      %806 = vmatprep.subr.mxu0 0.0
      %807 = vmatpush1.msra.mxu0 0.0
      %808 = vmatprep.subr.mxu0 0.0
      %809 = vmatpush1.msra.mxu0 0.0
      %810 = vmatprep.mubr.f32.mxu0 0.0
      %811 = vmatmul.mubr.f32.gmra.mrb[0].mxu0 %v717
      %v812 = vpop.f32.mrb[0].mxu0
      %v813 = vadd.f32 0.0, %v812
      %v814 = vpop.f32.mrb[0].mxu0
      %815 = vmatprep.mubr.f32.mxu0 0.0
      %816 = vmatmul.mubr.f32.gmra.mrb[0].mxu0 %v720
      %v817 = vpop.f32.mrb[0].mxu0
      %v818 = vadd.f32 0.0, %v817
      %v819 = vpop.f32.mrb[0].mxu0
      %820 = vmatprep.mubr.f32.mxu0 0.0
      %821 = vmatmul.mubr.f32.gmra.mrb[0].mxu0 %v723
      %v822 = vpop.f32.mrb[0].mxu0
      %v823 = vadd.f32 0.0, %v822
      %v824 = vpop.f32.mrb[0].mxu0
      %825 = vmatprep.mubr.f32.mxu0 0.0
      %826 = vmatmul.mubr.f32.gmra.mrb[0].mxu0 %v726
      %v827 = vpop.f32.mrb[0].mxu0
      %v828 = vadd.f32 0.0, %v827
      %v829 = vpop.f32.mrb[0].mxu0
      %830 = vmatprep.mubr.f32.mxu0 0.0
      %831 = vmatmul.mubr.f32.gmra.mrb[0].mxu0 %v729
      %v832 = vpop.f32.mrb[0].mxu0
      %v833 = vadd.f32 0.0, %v832
      %v834 = vpop.f32.mrb[0].mxu0
      %835 = vmatprep.mubr.f32.mxu0 0.0
      %836 = vmatmul.mubr.f32.gmra.mrb[0].mxu0 %v732
      %v837 = vpop.f32.mrb[0].mxu0
      %v838 = vadd.f32 0.0, %v837
      %v839 = vpop.f32.mrb[0].mxu0
      %840 = vmatprep.mubr.f32.mxu0 0.0
      %841 = vmatmul.mubr.f32.gmra.mrb[0].mxu0 %v735
      %v842 = vpop.f32.mrb[0].mxu0
      %v843 = vadd.f32 0.0, %v842
      %v844 = vpop.f32.mrb[0].mxu0
      %845 = vmatprep.mubr.f32.mxu0 0.0
      %846 = vmatmul.mubr.f32.gmra.mrb[0].mxu0 %v738
      %v847 = vpop.f32.mrb[0].mxu0
      %v848 = vadd.f32 0.0, %v847
      %v849 = vpop.f32.mrb[0].mxu0
      %850 = vmatprep.mubr.f32.mxu0 0.0
      %851 = vmatmul.mubr.f32.gmra.mrb[0].mxu0 %v741
      %v852 = vpop.f32.mrb[0].mxu0
      %v853 = vadd.f32 0.0, %v852
      %v854 = vpop.f32.mrb[0].mxu0
      %855 = vdwg.mxu0
      %v856 = vadd.f32 %v678, %v813
      %v857 = vadd.f32 %v679, %v818
      %v858 = vadd.f32 %v680, %v823
      %v859 = vadd.f32 %v681, %v828
      %v860 = vadd.f32 %v682, %v833
      %v861 = vadd.f32 %v683, %v838
      %v862 = vadd.f32 %v684, %v843
      %v863 = vadd.f32 %v685, %v848
      %v864 = vadd.f32 %v686, %v853
      %s865 = scalar_lea.vmem %s165, 4
      %v866 = vld [vmem:[%s865] ss:$3 sm:$0xff]
      %s867 = scalar_lea.vmem %s165, 28
      %v868 = vld [vmem:[%s867] ss:$3 sm:$0xff]
      %s869 = scalar_lea.vmem %s165, 52
      %v870 = vld [vmem:[%s869] ss:$3 sm:$0xff]
      %s871 = scalar_lea.vmem %s165, 76
      %v872 = vld [vmem:[%s871] ss:$3 sm:$0xff]
      %s873 = scalar_lea.vmem %s165, 100
      %v874 = vld [vmem:[%s873] ss:$3 sm:$0xff]
      %s875 = scalar_lea.vmem %s165, 124
      %v876 = vld [vmem:[%s875] ss:$3 sm:$0xff]
      %s877 = scalar_lea.vmem %s165, 148
      %v878 = vld [vmem:[%s877] ss:$3 sm:$0xff]
      %s879 = scalar_lea.vmem %s165, 172
      %v880 = vld [vmem:[%s879] ss:$3 sm:$0xff]
      %s881 = scalar_lea.vmem %s165, 196
      %v882 = vld [vmem:[%s881] ss:$3 sm:$0x1]
      %s883 = scalar_lea.vmem %s1, 320
      %v884 = vld [vmem:[%s883] sm:$0xff]
      %v885 = vld [vmem:[%s883 + $0x8] sm:$0xff]
      %v886 = vld [vmem:[%s883 + $0x10] sm:$0xff]
      %v887 = vld [vmem:[%s883 + $0x18] sm:$0xff]
      %v888 = vld [vmem:[%s883 + $0x20] sm:$0xff]
      %v889 = vld [vmem:[%s883 + $0x28] sm:$0xff]
      %v890 = vld [vmem:[%s883 + $0x30] sm:$0xff]
      %v891 = vld [vmem:[%s883 + $0x38] sm:$0xff]
      %v892 = vld [vmem:[%s883 + $0x40] sm:$0xff]
      %v893 = vld [vmem:[%s883 + $0x48] sm:$0x1]
      %v895 = vsel %vm227, %v866, 0
      %v898 = vsel %vm227, %v868, 0
      %v901 = vsel %vm227, %v870, 0
      %v904 = vsel %vm227, %v872, 0
      %v907 = vsel %vm227, %v874, 0
      %v910 = vsel %vm227, %v876, 0
      %v913 = vsel %vm227, %v878, 0
      %v916 = vsel %vm227, %v880, 0
      %v919 = vsel %vm227, %v882, 0
      %v922 = vsel %vm255, %v893, 0
      %924 = vmatprep.subr.mxu0 0.0
      %925 = vmatpush1.msra.mxu0 %v884
      %926 = vmatprep.subr.mxu0 0.0
      %927 = vmatpush1.msra.mxu0 %v885
      %928 = vmatprep.subr.mxu0 0.0
      %929 = vmatpush1.msra.mxu0 %v886
      %930 = vmatprep.subr.mxu0 0.0
      %931 = vmatpush1.msra.mxu0 %v887
      %932 = vmatprep.subr.mxu0 0.0
      %933 = vmatpush1.msra.mxu0 %v888
      %934 = vmatprep.subr.mxu0 0.0
      %935 = vmatpush1.msra.mxu0 %v889
      %936 = vmatprep.subr.mxu0 0.0
      %937 = vmatpush1.msra.mxu0 %v890
      %938 = vmatprep.subr.mxu0 0.0
      %939 = vmatpush1.msra.mxu0 %v891
      %940 = vmatprep.subr.mxu0 0.0
      %941 = vmatpush1.msra.mxu0 %v892
      %942 = vmatprep.subr.mxu0 0.0
      %943 = vmatpush1.msra.mxu0 %v922
      %944 = vmatprep.subr.mxu0 0.0
      %945 = vmatpush1.msra.mxu0 0.0
      %946 = vmatprep.subr.mxu0 0.0
      %947 = vmatpush1.msra.mxu0 0.0
      %948 = vmatprep.subr.mxu0 0.0
      %949 = vmatpush1.msra.mxu0 0.0
      %950 = vmatprep.subr.mxu0 0.0
      %951 = vmatpush1.msra.mxu0 0.0
      %952 = vmatprep.subr.mxu0 0.0
      %953 = vmatpush1.msra.mxu0 0.0
      %954 = vmatprep.subr.mxu0 0.0
      %955 = vmatpush1.msra.mxu0 0.0
      %956 = vmatprep.subr.mxu0 0.0
      %957 = vmatpush1.msra.mxu0 0.0
      %958 = vmatprep.subr.mxu0 0.0
      %959 = vmatpush1.msra.mxu0 0.0
      %960 = vmatprep.subr.mxu0 0.0
      %961 = vmatpush1.msra.mxu0 0.0
      %962 = vmatprep.subr.mxu0 0.0
      %963 = vmatpush1.msra.mxu0 0.0
      %964 = vmatprep.subr.mxu0 0.0
      %965 = vmatpush1.msra.mxu0 0.0
      %966 = vmatprep.subr.mxu0 0.0
      %967 = vmatpush1.msra.mxu0 0.0
      %968 = vmatprep.subr.mxu0 0.0
      %969 = vmatpush1.msra.mxu0 0.0
      %970 = vmatprep.subr.mxu0 0.0
      %971 = vmatpush1.msra.mxu0 0.0
      %972 = vmatprep.subr.mxu0 0.0
      %973 = vmatpush1.msra.mxu0 0.0
      %974 = vmatprep.subr.mxu0 0.0
      %975 = vmatpush1.msra.mxu0 0.0
      %976 = vmatprep.subr.mxu0 0.0
      %977 = vmatpush1.msra.mxu0 0.0
      %978 = vmatprep.subr.mxu0 0.0
      %979 = vmatpush1.msra.mxu0 0.0
      %980 = vmatprep.subr.mxu0 0.0
      %981 = vmatpush1.msra.mxu0 0.0
      %982 = vmatprep.subr.mxu0 0.0
      %983 = vmatpush1.msra.mxu0 0.0
      %984 = vmatprep.subr.mxu0 0.0
      %985 = vmatpush1.msra.mxu0 0.0
      %986 = vmatprep.subr.mxu0 0.0
      %987 = vmatpush1.msra.mxu0 0.0
      %988 = vmatprep.mubr.f32.mxu0 0.0
      %989 = vmatmul.mubr.f32.gmra.mrb[0].mxu0 %v895
      %v990 = vpop.f32.mrb[0].mxu0
      %v991 = vadd.f32 0.0, %v990
      %v992 = vpop.f32.mrb[0].mxu0
      %993 = vmatprep.mubr.f32.mxu0 0.0
      %994 = vmatmul.mubr.f32.gmra.mrb[0].mxu0 %v898
      %v995 = vpop.f32.mrb[0].mxu0
      %v996 = vadd.f32 0.0, %v995
      %v997 = vpop.f32.mrb[0].mxu0
      %998 = vmatprep.mubr.f32.mxu0 0.0
      %999 = vmatmul.mubr.f32.gmra.mrb[0].mxu0 %v901
      %v1000 = vpop.f32.mrb[0].mxu0
      %v1001 = vadd.f32 0.0, %v1000
      %v1002 = vpop.f32.mrb[0].mxu0
      %1003 = vmatprep.mubr.f32.mxu0 0.0
      %1004 = vmatmul.mubr.f32.gmra.mrb[0].mxu0 %v904
      %v1005 = vpop.f32.mrb[0].mxu0
      %v1006 = vadd.f32 0.0, %v1005
      %v1007 = vpop.f32.mrb[0].mxu0
      %1008 = vmatprep.mubr.f32.mxu0 0.0
      %1009 = vmatmul.mubr.f32.gmra.mrb[0].mxu0 %v907
      %v1010 = vpop.f32.mrb[0].mxu0
      %v1011 = vadd.f32 0.0, %v1010
      %v1012 = vpop.f32.mrb[0].mxu0
      %1013 = vmatprep.mubr.f32.mxu0 0.0
      %1014 = vmatmul.mubr.f32.gmra.mrb[0].mxu0 %v910
      %v1015 = vpop.f32.mrb[0].mxu0
      %v1016 = vadd.f32 0.0, %v1015
      %v1017 = vpop.f32.mrb[0].mxu0
      %1018 = vmatprep.mubr.f32.mxu0 0.0
      %1019 = vmatmul.mubr.f32.gmra.mrb[0].mxu0 %v913
      %v1020 = vpop.f32.mrb[0].mxu0
      %v1021 = vadd.f32 0.0, %v1020
      %v1022 = vpop.f32.mrb[0].mxu0
      %1023 = vmatprep.mubr.f32.mxu0 0.0
      %1024 = vmatmul.mubr.f32.gmra.mrb[0].mxu0 %v916
      %v1025 = vpop.f32.mrb[0].mxu0
      %v1026 = vadd.f32 0.0, %v1025
      %v1027 = vpop.f32.mrb[0].mxu0
      %1028 = vmatprep.mubr.f32.mxu0 0.0
      %1029 = vmatmul.mubr.f32.gmra.mrb[0].mxu0 %v919
      %v1030 = vpop.f32.mrb[0].mxu0
      %v1031 = vadd.f32 0.0, %v1030
      %v1032 = vpop.f32.mrb[0].mxu0
      %1033 = vdwg.mxu0
      %v1034 = vadd.f32 %v856, %v991
      %v1035 = vadd.f32 %v857, %v996
      %v1036 = vadd.f32 %v858, %v1001
      %v1037 = vadd.f32 %v859, %v1006
      %v1038 = vadd.f32 %v860, %v1011
      %v1039 = vadd.f32 %v861, %v1016
      %v1040 = vadd.f32 %v862, %v1021
      %v1041 = vadd.f32 %v863, %v1026
      %v1042 = vadd.f32 %v864, %v1031
      %s1043 = scalar_lea.vmem %s165, 5
      %v1044 = vld [vmem:[%s1043] ss:$3 sm:$0xff]
      %s1045 = scalar_lea.vmem %s165, 29
      %v1046 = vld [vmem:[%s1045] ss:$3 sm:$0xff]
      %s1047 = scalar_lea.vmem %s165, 53
      %v1048 = vld [vmem:[%s1047] ss:$3 sm:$0xff]
      %s1049 = scalar_lea.vmem %s165, 77
      %v1050 = vld [vmem:[%s1049] ss:$3 sm:$0xff]
      %s1051 = scalar_lea.vmem %s165, 101
      %v1052 = vld [vmem:[%s1051] ss:$3 sm:$0xff]
      %s1053 = scalar_lea.vmem %s165, 125
      %v1054 = vld [vmem:[%s1053] ss:$3 sm:$0xff]
      %s1055 = scalar_lea.vmem %s165, 149
      %v1056 = vld [vmem:[%s1055] ss:$3 sm:$0xff]
      %s1057 = scalar_lea.vmem %s165, 173
      %v1058 = vld [vmem:[%s1057] ss:$3 sm:$0xff]
      %s1059 = scalar_lea.vmem %s165, 197
      %v1060 = vld [vmem:[%s1059] ss:$3 sm:$0x1]
      %s1061 = scalar_lea.vmem %s1, 400
      %v1062 = vld [vmem:[%s1061] sm:$0xff]
      %v1063 = vld [vmem:[%s1061 + $0x8] sm:$0xff]
      %v1064 = vld [vmem:[%s1061 + $0x10] sm:$0xff]
      %v1065 = vld [vmem:[%s1061 + $0x18] sm:$0xff]
      %v1066 = vld [vmem:[%s1061 + $0x20] sm:$0xff]
      %v1067 = vld [vmem:[%s1061 + $0x28] sm:$0xff]
      %v1068 = vld [vmem:[%s1061 + $0x30] sm:$0xff]
      %v1069 = vld [vmem:[%s1061 + $0x38] sm:$0xff]
      %v1070 = vld [vmem:[%s1061 + $0x40] sm:$0xff]
      %v1071 = vld [vmem:[%s1061 + $0x48] sm:$0x1]
      %v1073 = vsel %vm227, %v1044, 0
      %v1076 = vsel %vm227, %v1046, 0
      %v1079 = vsel %vm227, %v1048, 0
      %v1082 = vsel %vm227, %v1050, 0
      %v1085 = vsel %vm227, %v1052, 0
      %v1088 = vsel %vm227, %v1054, 0
      %v1091 = vsel %vm227, %v1056, 0
      %v1094 = vsel %vm227, %v1058, 0
      %v1097 = vsel %vm227, %v1060, 0
      %v1100 = vsel %vm255, %v1071, 0
      %1102 = vmatprep.subr.mxu0 0.0
      %1103 = vmatpush1.msra.mxu0 %v1062
      %1104 = vmatprep.subr.mxu0 0.0
      %1105 = vmatpush1.msra.mxu0 %v1063
      %1106 = vmatprep.subr.mxu0 0.0
      %1107 = vmatpush1.msra.mxu0 %v1064
      %1108 = vmatprep.subr.mxu0 0.0
      %1109 = vmatpush1.msra.mxu0 %v1065
      %1110 = vmatprep.subr.mxu0 0.0
      %1111 = vmatpush1.msra.mxu0 %v1066
      %1112 = vmatprep.subr.mxu0 0.0
      %1113 = vmatpush1.msra.mxu0 %v1067
      %1114 = vmatprep.subr.mxu0 0.0
      %1115 = vmatpush1.msra.mxu0 %v1068
      %1116 = vmatprep.subr.mxu0 0.0
      %1117 = vmatpush1.msra.mxu0 %v1069
      %1118 = vmatprep.subr.mxu0 0.0
      %1119 = vmatpush1.msra.mxu0 %v1070
      %1120 = vmatprep.subr.mxu0 0.0
      %1121 = vmatpush1.msra.mxu0 %v1100
      %1122 = vmatprep.subr.mxu0 0.0
      %1123 = vmatpush1.msra.mxu0 0.0
      %1124 = vmatprep.subr.mxu0 0.0
      %1125 = vmatpush1.msra.mxu0 0.0
      %1126 = vmatprep.subr.mxu0 0.0
      %1127 = vmatpush1.msra.mxu0 0.0
      %1128 = vmatprep.subr.mxu0 0.0
      %1129 = vmatpush1.msra.mxu0 0.0
      %1130 = vmatprep.subr.mxu0 0.0
      %1131 = vmatpush1.msra.mxu0 0.0
      %1132 = vmatprep.subr.mxu0 0.0
      %1133 = vmatpush1.msra.mxu0 0.0
      %1134 = vmatprep.subr.mxu0 0.0
      %1135 = vmatpush1.msra.mxu0 0.0
      %1136 = vmatprep.subr.mxu0 0.0
      %1137 = vmatpush1.msra.mxu0 0.0
      %1138 = vmatprep.subr.mxu0 0.0
      %1139 = vmatpush1.msra.mxu0 0.0
      %1140 = vmatprep.subr.mxu0 0.0
      %1141 = vmatpush1.msra.mxu0 0.0
      %1142 = vmatprep.subr.mxu0 0.0
      %1143 = vmatpush1.msra.mxu0 0.0
      %1144 = vmatprep.subr.mxu0 0.0
      %1145 = vmatpush1.msra.mxu0 0.0
      %1146 = vmatprep.subr.mxu0 0.0
      %1147 = vmatpush1.msra.mxu0 0.0
      %1148 = vmatprep.subr.mxu0 0.0
      %1149 = vmatpush1.msra.mxu0 0.0
      %1150 = vmatprep.subr.mxu0 0.0
      %1151 = vmatpush1.msra.mxu0 0.0
      %1152 = vmatprep.subr.mxu0 0.0
      %1153 = vmatpush1.msra.mxu0 0.0
      %1154 = vmatprep.subr.mxu0 0.0
      %1155 = vmatpush1.msra.mxu0 0.0
      %1156 = vmatprep.subr.mxu0 0.0
      %1157 = vmatpush1.msra.mxu0 0.0
      %1158 = vmatprep.subr.mxu0 0.0
      %1159 = vmatpush1.msra.mxu0 0.0
      %1160 = vmatprep.subr.mxu0 0.0
      %1161 = vmatpush1.msra.mxu0 0.0
      %1162 = vmatprep.subr.mxu0 0.0
      %1163 = vmatpush1.msra.mxu0 0.0
      %1164 = vmatprep.subr.mxu0 0.0
      %1165 = vmatpush1.msra.mxu0 0.0
      %1166 = vmatprep.mubr.f32.mxu0 0.0
      %1167 = vmatmul.mubr.f32.gmra.mrb[0].mxu0 %v1073
      %v1168 = vpop.f32.mrb[0].mxu0
      %v1169 = vadd.f32 0.0, %v1168
      %v1170 = vpop.f32.mrb[0].mxu0
      %1171 = vmatprep.mubr.f32.mxu0 0.0
      %1172 = vmatmul.mubr.f32.gmra.mrb[0].mxu0 %v1076
      %v1173 = vpop.f32.mrb[0].mxu0
      %v1174 = vadd.f32 0.0, %v1173
      %v1175 = vpop.f32.mrb[0].mxu0
      %1176 = vmatprep.mubr.f32.mxu0 0.0
      %1177 = vmatmul.mubr.f32.gmra.mrb[0].mxu0 %v1079
      %v1178 = vpop.f32.mrb[0].mxu0
      %v1179 = vadd.f32 0.0, %v1178
      %v1180 = vpop.f32.mrb[0].mxu0
      %1181 = vmatprep.mubr.f32.mxu0 0.0
      %1182 = vmatmul.mubr.f32.gmra.mrb[0].mxu0 %v1082
      %v1183 = vpop.f32.mrb[0].mxu0
      %v1184 = vadd.f32 0.0, %v1183
      %v1185 = vpop.f32.mrb[0].mxu0
      %1186 = vmatprep.mubr.f32.mxu0 0.0
      %1187 = vmatmul.mubr.f32.gmra.mrb[0].mxu0 %v1085
      %v1188 = vpop.f32.mrb[0].mxu0
      %v1189 = vadd.f32 0.0, %v1188
      %v1190 = vpop.f32.mrb[0].mxu0
      %1191 = vmatprep.mubr.f32.mxu0 0.0
      %1192 = vmatmul.mubr.f32.gmra.mrb[0].mxu0 %v1088
      %v1193 = vpop.f32.mrb[0].mxu0
      %v1194 = vadd.f32 0.0, %v1193
      %v1195 = vpop.f32.mrb[0].mxu0
      %1196 = vmatprep.mubr.f32.mxu0 0.0
      %1197 = vmatmul.mubr.f32.gmra.mrb[0].mxu0 %v1091
      %v1198 = vpop.f32.mrb[0].mxu0
      %v1199 = vadd.f32 0.0, %v1198
      %v1200 = vpop.f32.mrb[0].mxu0
      %1201 = vmatprep.mubr.f32.mxu0 0.0
      %1202 = vmatmul.mubr.f32.gmra.mrb[0].mxu0 %v1094
      %v1203 = vpop.f32.mrb[0].mxu0
      %v1204 = vadd.f32 0.0, %v1203
      %v1205 = vpop.f32.mrb[0].mxu0
      %1206 = vmatprep.mubr.f32.mxu0 0.0
      %1207 = vmatmul.mubr.f32.gmra.mrb[0].mxu0 %v1097
      %v1208 = vpop.f32.mrb[0].mxu0
      %v1209 = vadd.f32 0.0, %v1208
      %v1210 = vpop.f32.mrb[0].mxu0
      %1211 = vdwg.mxu0
      %v1212 = vadd.f32 %v1034, %v1169
      %v1213 = vadd.f32 %v1035, %v1174
      %v1214 = vadd.f32 %v1036, %v1179
      %v1215 = vadd.f32 %v1037, %v1184
      %v1216 = vadd.f32 %v1038, %v1189
      %v1217 = vadd.f32 %v1039, %v1194
      %v1218 = vadd.f32 %v1040, %v1199
      %v1219 = vadd.f32 %v1041, %v1204
      %v1220 = vadd.f32 %v1042, %v1209
      %s1221 = scalar_lea.vmem %s165, 6
      %v1222 = vld [vmem:[%s1221] ss:$3 sm:$0xff]
      %s1223 = scalar_lea.vmem %s165, 30
      %v1224 = vld [vmem:[%s1223] ss:$3 sm:$0xff]
      %s1225 = scalar_lea.vmem %s165, 54
      %v1226 = vld [vmem:[%s1225] ss:$3 sm:$0xff]
      %s1227 = scalar_lea.vmem %s165, 78
      %v1228 = vld [vmem:[%s1227] ss:$3 sm:$0xff]
      %s1229 = scalar_lea.vmem %s165, 102
      %v1230 = vld [vmem:[%s1229] ss:$3 sm:$0xff]
      %s1231 = scalar_lea.vmem %s165, 126
      %v1232 = vld [vmem:[%s1231] ss:$3 sm:$0xff]
      %s1233 = scalar_lea.vmem %s165, 150
      %v1234 = vld [vmem:[%s1233] ss:$3 sm:$0xff]
      %s1235 = scalar_lea.vmem %s165, 174
      %v1236 = vld [vmem:[%s1235] ss:$3 sm:$0xff]
      %s1237 = scalar_lea.vmem %s165, 198
      %v1238 = vld [vmem:[%s1237] ss:$3 sm:$0x1]
      %s1239 = scalar_lea.vmem %s1, 480
      %v1240 = vld [vmem:[%s1239] sm:$0xff]
      %v1241 = vld [vmem:[%s1239 + $0x8] sm:$0xff]
      %v1242 = vld [vmem:[%s1239 + $0x10] sm:$0xff]
      %v1243 = vld [vmem:[%s1239 + $0x18] sm:$0xff]
      %v1244 = vld [vmem:[%s1239 + $0x20] sm:$0xff]
      %v1245 = vld [vmem:[%s1239 + $0x28] sm:$0xff]
      %v1246 = vld [vmem:[%s1239 + $0x30] sm:$0xff]
      %v1247 = vld [vmem:[%s1239 + $0x38] sm:$0xff]
      %v1248 = vld [vmem:[%s1239 + $0x40] sm:$0xff]
      %v1249 = vld [vmem:[%s1239 + $0x48] sm:$0x1]
      %v1251 = vsel %vm227, %v1222, 0
      %v1254 = vsel %vm227, %v1224, 0
      %v1257 = vsel %vm227, %v1226, 0
      %v1260 = vsel %vm227, %v1228, 0
      %v1263 = vsel %vm227, %v1230, 0
      %v1266 = vsel %vm227, %v1232, 0
      %v1269 = vsel %vm227, %v1234, 0
      %v1272 = vsel %vm227, %v1236, 0
      %v1275 = vsel %vm227, %v1238, 0
      %v1278 = vsel %vm255, %v1249, 0
      %1280 = vmatprep.subr.mxu0 0.0
      %1281 = vmatpush1.msra.mxu0 %v1240
      %1282 = vmatprep.subr.mxu0 0.0
      %1283 = vmatpush1.msra.mxu0 %v1241
      %1284 = vmatprep.subr.mxu0 0.0
      %1285 = vmatpush1.msra.mxu0 %v1242
      %1286 = vmatprep.subr.mxu0 0.0
      %1287 = vmatpush1.msra.mxu0 %v1243
      %1288 = vmatprep.subr.mxu0 0.0
      %1289 = vmatpush1.msra.mxu0 %v1244
      %1290 = vmatprep.subr.mxu0 0.0
      %1291 = vmatpush1.msra.mxu0 %v1245
      %1292 = vmatprep.subr.mxu0 0.0
      %1293 = vmatpush1.msra.mxu0 %v1246
      %1294 = vmatprep.subr.mxu0 0.0
      %1295 = vmatpush1.msra.mxu0 %v1247
      %1296 = vmatprep.subr.mxu0 0.0
      %1297 = vmatpush1.msra.mxu0 %v1248
      %1298 = vmatprep.subr.mxu0 0.0
      %1299 = vmatpush1.msra.mxu0 %v1278
      %1300 = vmatprep.subr.mxu0 0.0
      %1301 = vmatpush1.msra.mxu0 0.0
      %1302 = vmatprep.subr.mxu0 0.0
      %1303 = vmatpush1.msra.mxu0 0.0
      %1304 = vmatprep.subr.mxu0 0.0
      %1305 = vmatpush1.msra.mxu0 0.0
      %1306 = vmatprep.subr.mxu0 0.0
      %1307 = vmatpush1.msra.mxu0 0.0
      %1308 = vmatprep.subr.mxu0 0.0
      %1309 = vmatpush1.msra.mxu0 0.0
      %1310 = vmatprep.subr.mxu0 0.0
      %1311 = vmatpush1.msra.mxu0 0.0
      %1312 = vmatprep.subr.mxu0 0.0
      %1313 = vmatpush1.msra.mxu0 0.0
      %1314 = vmatprep.subr.mxu0 0.0
      %1315 = vmatpush1.msra.mxu0 0.0
      %1316 = vmatprep.subr.mxu0 0.0
      %1317 = vmatpush1.msra.mxu0 0.0
      %1318 = vmatprep.subr.mxu0 0.0
      %1319 = vmatpush1.msra.mxu0 0.0
      %1320 = vmatprep.subr.mxu0 0.0
      %1321 = vmatpush1.msra.mxu0 0.0
      %1322 = vmatprep.subr.mxu0 0.0
      %1323 = vmatpush1.msra.mxu0 0.0
      %1324 = vmatprep.subr.mxu0 0.0
      %1325 = vmatpush1.msra.mxu0 0.0
      %1326 = vmatprep.subr.mxu0 0.0
      %1327 = vmatpush1.msra.mxu0 0.0
      %1328 = vmatprep.subr.mxu0 0.0
      %1329 = vmatpush1.msra.mxu0 0.0
      %1330 = vmatprep.subr.mxu0 0.0
      %1331 = vmatpush1.msra.mxu0 0.0
      %1332 = vmatprep.subr.mxu0 0.0
      %1333 = vmatpush1.msra.mxu0 0.0
      %1334 = vmatprep.subr.mxu0 0.0
      %1335 = vmatpush1.msra.mxu0 0.0
      %1336 = vmatprep.subr.mxu0 0.0
      %1337 = vmatpush1.msra.mxu0 0.0
      %1338 = vmatprep.subr.mxu0 0.0
      %1339 = vmatpush1.msra.mxu0 0.0
      %1340 = vmatprep.subr.mxu0 0.0
      %1341 = vmatpush1.msra.mxu0 0.0
      %1342 = vmatprep.subr.mxu0 0.0
      %1343 = vmatpush1.msra.mxu0 0.0
      %1344 = vmatprep.mubr.f32.mxu0 0.0
      %1345 = vmatmul.mubr.f32.gmra.mrb[0].mxu0 %v1251
      %v1346 = vpop.f32.mrb[0].mxu0
      %v1347 = vadd.f32 0.0, %v1346
      %v1348 = vpop.f32.mrb[0].mxu0
      %1349 = vmatprep.mubr.f32.mxu0 0.0
      %1350 = vmatmul.mubr.f32.gmra.mrb[0].mxu0 %v1254
      %v1351 = vpop.f32.mrb[0].mxu0
      %v1352 = vadd.f32 0.0, %v1351
      %v1353 = vpop.f32.mrb[0].mxu0
      %1354 = vmatprep.mubr.f32.mxu0 0.0
      %1355 = vmatmul.mubr.f32.gmra.mrb[0].mxu0 %v1257
      %v1356 = vpop.f32.mrb[0].mxu0
      %v1357 = vadd.f32 0.0, %v1356
      %v1358 = vpop.f32.mrb[0].mxu0
      %1359 = vmatprep.mubr.f32.mxu0 0.0
      %1360 = vmatmul.mubr.f32.gmra.mrb[0].mxu0 %v1260
      %v1361 = vpop.f32.mrb[0].mxu0
      %v1362 = vadd.f32 0.0, %v1361
      %v1363 = vpop.f32.mrb[0].mxu0
      %1364 = vmatprep.mubr.f32.mxu0 0.0
      %1365 = vmatmul.mubr.f32.gmra.mrb[0].mxu0 %v1263
      %v1366 = vpop.f32.mrb[0].mxu0
      %v1367 = vadd.f32 0.0, %v1366
      %v1368 = vpop.f32.mrb[0].mxu0
      %1369 = vmatprep.mubr.f32.mxu0 0.0
      %1370 = vmatmul.mubr.f32.gmra.mrb[0].mxu0 %v1266
      %v1371 = vpop.f32.mrb[0].mxu0
      %v1372 = vadd.f32 0.0, %v1371
      %v1373 = vpop.f32.mrb[0].mxu0
      %1374 = vmatprep.mubr.f32.mxu0 0.0
      %1375 = vmatmul.mubr.f32.gmra.mrb[0].mxu0 %v1269
      %v1376 = vpop.f32.mrb[0].mxu0
      %v1377 = vadd.f32 0.0, %v1376
      %v1378 = vpop.f32.mrb[0].mxu0
      %1379 = vmatprep.mubr.f32.mxu0 0.0
      %1380 = vmatmul.mubr.f32.gmra.mrb[0].mxu0 %v1272
      %v1381 = vpop.f32.mrb[0].mxu0
      %v1382 = vadd.f32 0.0, %v1381
      %v1383 = vpop.f32.mrb[0].mxu0
      %1384 = vmatprep.mubr.f32.mxu0 0.0
      %1385 = vmatmul.mubr.f32.gmra.mrb[0].mxu0 %v1275
      %v1386 = vpop.f32.mrb[0].mxu0
      %v1387 = vadd.f32 0.0, %v1386
      %v1388 = vpop.f32.mrb[0].mxu0
      %1389 = vdwg.mxu0
      %v1390 = vadd.f32 %v1212, %v1347
      %v1391 = vadd.f32 %v1213, %v1352
      %v1392 = vadd.f32 %v1214, %v1357
      %v1393 = vadd.f32 %v1215, %v1362
      %v1394 = vadd.f32 %v1216, %v1367
      %v1395 = vadd.f32 %v1217, %v1372
      %v1396 = vadd.f32 %v1218, %v1377
      %v1397 = vadd.f32 %v1219, %v1382
      %v1398 = vadd.f32 %v1220, %v1387
      %s1399 = scalar_lea.vmem %s165, 7
      %v1400 = vld [vmem:[%s1399] ss:$3 sm:$0xff]
      %s1401 = scalar_lea.vmem %s165, 31
      %v1402 = vld [vmem:[%s1401] ss:$3 sm:$0xff]
      %s1403 = scalar_lea.vmem %s165, 55
      %v1404 = vld [vmem:[%s1403] ss:$3 sm:$0xff]
      %s1405 = scalar_lea.vmem %s165, 79
      %v1406 = vld [vmem:[%s1405] ss:$3 sm:$0xff]
      %s1407 = scalar_lea.vmem %s165, 103
      %v1408 = vld [vmem:[%s1407] ss:$3 sm:$0xff]
      %s1409 = scalar_lea.vmem %s165, 127
      %v1410 = vld [vmem:[%s1409] ss:$3 sm:$0xff]
      %s1411 = scalar_lea.vmem %s165, 151
      %v1412 = vld [vmem:[%s1411] ss:$3 sm:$0xff]
      %s1413 = scalar_lea.vmem %s165, 175
      %v1414 = vld [vmem:[%s1413] ss:$3 sm:$0xff]
      %s1415 = scalar_lea.vmem %s165, 199
      %v1416 = vld [vmem:[%s1415] ss:$3 sm:$0x1]
      %s1417 = scalar_lea.vmem %s1, 560
      %v1418 = vld [vmem:[%s1417] sm:$0xff]
      %v1419 = vld [vmem:[%s1417 + $0x8] sm:$0xff]
      %v1420 = vld [vmem:[%s1417 + $0x10] sm:$0xff]
      %v1421 = vld [vmem:[%s1417 + $0x18] sm:$0xff]
      %v1422 = vld [vmem:[%s1417 + $0x20] sm:$0xff]
      %v1423 = vld [vmem:[%s1417 + $0x28] sm:$0xff]
      %v1424 = vld [vmem:[%s1417 + $0x30] sm:$0xff]
      %v1425 = vld [vmem:[%s1417 + $0x38] sm:$0xff]
      %v1426 = vld [vmem:[%s1417 + $0x40] sm:$0xff]
      %v1427 = vld [vmem:[%s1417 + $0x48] sm:$0x1]
      %v1429 = vsel %vm227, %v1400, 0
      %v1432 = vsel %vm227, %v1402, 0
      %v1435 = vsel %vm227, %v1404, 0
      %v1438 = vsel %vm227, %v1406, 0
      %v1441 = vsel %vm227, %v1408, 0
      %v1444 = vsel %vm227, %v1410, 0
      %v1447 = vsel %vm227, %v1412, 0
      %v1450 = vsel %vm227, %v1414, 0
      %v1453 = vsel %vm227, %v1416, 0
      %v1456 = vsel %vm255, %v1427, 0
      %1458 = vmatprep.subr.mxu0 0.0
      %1459 = vmatpush1.msra.mxu0 %v1418
      %1460 = vmatprep.subr.mxu0 0.0
      %1461 = vmatpush1.msra.mxu0 %v1419
      %1462 = vmatprep.subr.mxu0 0.0
      %1463 = vmatpush1.msra.mxu0 %v1420
      %1464 = vmatprep.subr.mxu0 0.0
      %1465 = vmatpush1.msra.mxu0 %v1421
      %1466 = vmatprep.subr.mxu0 0.0
      %1467 = vmatpush1.msra.mxu0 %v1422
      %1468 = vmatprep.subr.mxu0 0.0
      %1469 = vmatpush1.msra.mxu0 %v1423
      %1470 = vmatprep.subr.mxu0 0.0
      %1471 = vmatpush1.msra.mxu0 %v1424
      %1472 = vmatprep.subr.mxu0 0.0
      %1473 = vmatpush1.msra.mxu0 %v1425
      %1474 = vmatprep.subr.mxu0 0.0
      %1475 = vmatpush1.msra.mxu0 %v1426
      %1476 = vmatprep.subr.mxu0 0.0
      %1477 = vmatpush1.msra.mxu0 %v1456
      %1478 = vmatprep.subr.mxu0 0.0
      %1479 = vmatpush1.msra.mxu0 0.0
      %1480 = vmatprep.subr.mxu0 0.0
      %1481 = vmatpush1.msra.mxu0 0.0
      %1482 = vmatprep.subr.mxu0 0.0
      %1483 = vmatpush1.msra.mxu0 0.0
      %1484 = vmatprep.subr.mxu0 0.0
      %1485 = vmatpush1.msra.mxu0 0.0
      %1486 = vmatprep.subr.mxu0 0.0
      %1487 = vmatpush1.msra.mxu0 0.0
      %1488 = vmatprep.subr.mxu0 0.0
      %1489 = vmatpush1.msra.mxu0 0.0
      %1490 = vmatprep.subr.mxu0 0.0
      %1491 = vmatpush1.msra.mxu0 0.0
      %1492 = vmatprep.subr.mxu0 0.0
      %1493 = vmatpush1.msra.mxu0 0.0
      %1494 = vmatprep.subr.mxu0 0.0
      %1495 = vmatpush1.msra.mxu0 0.0
      %1496 = vmatprep.subr.mxu0 0.0
      %1497 = vmatpush1.msra.mxu0 0.0
      %1498 = vmatprep.subr.mxu0 0.0
      %1499 = vmatpush1.msra.mxu0 0.0
      %1500 = vmatprep.subr.mxu0 0.0
      %1501 = vmatpush1.msra.mxu0 0.0
      %1502 = vmatprep.subr.mxu0 0.0
      %1503 = vmatpush1.msra.mxu0 0.0
      %1504 = vmatprep.subr.mxu0 0.0
      %1505 = vmatpush1.msra.mxu0 0.0
      %1506 = vmatprep.subr.mxu0 0.0
      %1507 = vmatpush1.msra.mxu0 0.0
      %1508 = vmatprep.subr.mxu0 0.0
      %1509 = vmatpush1.msra.mxu0 0.0
      %1510 = vmatprep.subr.mxu0 0.0
      %1511 = vmatpush1.msra.mxu0 0.0
      %1512 = vmatprep.subr.mxu0 0.0
      %1513 = vmatpush1.msra.mxu0 0.0
      %1514 = vmatprep.subr.mxu0 0.0
      %1515 = vmatpush1.msra.mxu0 0.0
      %1516 = vmatprep.subr.mxu0 0.0
      %1517 = vmatpush1.msra.mxu0 0.0
      %1518 = vmatprep.subr.mxu0 0.0
      %1519 = vmatpush1.msra.mxu0 0.0
      %1520 = vmatprep.subr.mxu0 0.0
      %1521 = vmatpush1.msra.mxu0 0.0
      %1522 = vmatprep.mubr.f32.mxu0 0.0
      %1523 = vmatmul.mubr.f32.gmra.mrb[0].mxu0 %v1429
      %v1524 = vpop.f32.mrb[0].mxu0
      %v1525 = vadd.f32 0.0, %v1524
      %v1526 = vpop.f32.mrb[0].mxu0
      %1527 = vmatprep.mubr.f32.mxu0 0.0
      %1528 = vmatmul.mubr.f32.gmra.mrb[0].mxu0 %v1432
      %v1529 = vpop.f32.mrb[0].mxu0
      %v1530 = vadd.f32 0.0, %v1529
      %v1531 = vpop.f32.mrb[0].mxu0
      %1532 = vmatprep.mubr.f32.mxu0 0.0
      %1533 = vmatmul.mubr.f32.gmra.mrb[0].mxu0 %v1435
      %v1534 = vpop.f32.mrb[0].mxu0
      %v1535 = vadd.f32 0.0, %v1534
      %v1536 = vpop.f32.mrb[0].mxu0
      %1537 = vmatprep.mubr.f32.mxu0 0.0
      %1538 = vmatmul.mubr.f32.gmra.mrb[0].mxu0 %v1438
      %v1539 = vpop.f32.mrb[0].mxu0
      %v1540 = vadd.f32 0.0, %v1539
      %v1541 = vpop.f32.mrb[0].mxu0
      %1542 = vmatprep.mubr.f32.mxu0 0.0
      %1543 = vmatmul.mubr.f32.gmra.mrb[0].mxu0 %v1441
      %v1544 = vpop.f32.mrb[0].mxu0
      %v1545 = vadd.f32 0.0, %v1544
      %v1546 = vpop.f32.mrb[0].mxu0
      %1547 = vmatprep.mubr.f32.mxu0 0.0
      %1548 = vmatmul.mubr.f32.gmra.mrb[0].mxu0 %v1444
      %v1549 = vpop.f32.mrb[0].mxu0
      %v1550 = vadd.f32 0.0, %v1549
      %v1551 = vpop.f32.mrb[0].mxu0
      %1552 = vmatprep.mubr.f32.mxu0 0.0
      %1553 = vmatmul.mubr.f32.gmra.mrb[0].mxu0 %v1447
      %v1554 = vpop.f32.mrb[0].mxu0
      %v1555 = vadd.f32 0.0, %v1554
      %v1556 = vpop.f32.mrb[0].mxu0
      %1557 = vmatprep.mubr.f32.mxu0 0.0
      %1558 = vmatmul.mubr.f32.gmra.mrb[0].mxu0 %v1450
      %v1559 = vpop.f32.mrb[0].mxu0
      %v1560 = vadd.f32 0.0, %v1559
      %v1561 = vpop.f32.mrb[0].mxu0
      %1562 = vmatprep.mubr.f32.mxu0 0.0
      %1563 = vmatmul.mubr.f32.gmra.mrb[0].mxu0 %v1453
      %v1564 = vpop.f32.mrb[0].mxu0
      %v1565 = vadd.f32 0.0, %v1564
      %v1566 = vpop.f32.mrb[0].mxu0
      %1567 = vdwg.mxu0
      %v1568 = vadd.f32 %v1390, %v1525
      %v1569 = vadd.f32 %v1391, %v1530
      %v1570 = vadd.f32 %v1392, %v1535
      %v1571 = vadd.f32 %v1393, %v1540
      %v1572 = vadd.f32 %v1394, %v1545
      %v1573 = vadd.f32 %v1395, %v1550
      %v1574 = vadd.f32 %v1396, %v1555
      %v1575 = vadd.f32 %v1397, %v1560
      %v1576 = vadd.f32 %v1398, %v1565
      %s1577 = scalar_lea.vmem %s165, 8
      %v1578 = vld [vmem:[%s1577] ss:$3 sm:$0xff]
      %s1579 = scalar_lea.vmem %s165, 32
      %v1580 = vld [vmem:[%s1579] ss:$3 sm:$0xff]
      %s1581 = scalar_lea.vmem %s165, 56
      %v1582 = vld [vmem:[%s1581] ss:$3 sm:$0xff]
      %s1583 = scalar_lea.vmem %s165, 80
      %v1584 = vld [vmem:[%s1583] ss:$3 sm:$0xff]
      %s1585 = scalar_lea.vmem %s165, 104
      %v1586 = vld [vmem:[%s1585] ss:$3 sm:$0xff]
      %s1587 = scalar_lea.vmem %s165, 128
      %v1588 = vld [vmem:[%s1587] ss:$3 sm:$0xff]
      %s1589 = scalar_lea.vmem %s165, 152
      %v1590 = vld [vmem:[%s1589] ss:$3 sm:$0xff]
      %s1591 = scalar_lea.vmem %s165, 176
      %v1592 = vld [vmem:[%s1591] ss:$3 sm:$0xff]
      %s1593 = scalar_lea.vmem %s165, 200
      %v1594 = vld [vmem:[%s1593] ss:$3 sm:$0x1]
      %s1595 = scalar_lea.vmem %s1, 640
      %v1596 = vld [vmem:[%s1595] sm:$0xff]
      %v1597 = vld [vmem:[%s1595 + $0x8] sm:$0xff]
      %v1598 = vld [vmem:[%s1595 + $0x10] sm:$0xff]
      %v1599 = vld [vmem:[%s1595 + $0x18] sm:$0xff]
      %v1600 = vld [vmem:[%s1595 + $0x20] sm:$0xff]
      %v1601 = vld [vmem:[%s1595 + $0x28] sm:$0xff]
      %v1602 = vld [vmem:[%s1595 + $0x30] sm:$0xff]
      %v1603 = vld [vmem:[%s1595 + $0x38] sm:$0xff]
      %v1604 = vld [vmem:[%s1595 + $0x40] sm:$0xff]
      %v1605 = vld [vmem:[%s1595 + $0x48] sm:$0x1]
      %v1607 = vsel %vm227, %v1578, 0
      %v1610 = vsel %vm227, %v1580, 0
      %v1613 = vsel %vm227, %v1582, 0
      %v1616 = vsel %vm227, %v1584, 0
      %v1619 = vsel %vm227, %v1586, 0
      %v1622 = vsel %vm227, %v1588, 0
      %v1625 = vsel %vm227, %v1590, 0
      %v1628 = vsel %vm227, %v1592, 0
      %v1631 = vsel %vm227, %v1594, 0
      %v1634 = vsel %vm255, %v1605, 0
      %1636 = vmatprep.subr.mxu0 0.0
      %1637 = vmatpush1.msra.mxu0 %v1596
      %1638 = vmatprep.subr.mxu0 0.0
      %1639 = vmatpush1.msra.mxu0 %v1597
      %1640 = vmatprep.subr.mxu0 0.0
      %1641 = vmatpush1.msra.mxu0 %v1598
      %1642 = vmatprep.subr.mxu0 0.0
      %1643 = vmatpush1.msra.mxu0 %v1599
      %1644 = vmatprep.subr.mxu0 0.0
      %1645 = vmatpush1.msra.mxu0 %v1600
      %1646 = vmatprep.subr.mxu0 0.0
      %1647 = vmatpush1.msra.mxu0 %v1601
      %1648 = vmatprep.subr.mxu0 0.0
      %1649 = vmatpush1.msra.mxu0 %v1602
      %1650 = vmatprep.subr.mxu0 0.0
      %1651 = vmatpush1.msra.mxu0 %v1603
      %1652 = vmatprep.subr.mxu0 0.0
      %1653 = vmatpush1.msra.mxu0 %v1604
      %1654 = vmatprep.subr.mxu0 0.0
      %1655 = vmatpush1.msra.mxu0 %v1634
      %1656 = vmatprep.subr.mxu0 0.0
      %1657 = vmatpush1.msra.mxu0 0.0
      %1658 = vmatprep.subr.mxu0 0.0
      %1659 = vmatpush1.msra.mxu0 0.0
      %1660 = vmatprep.subr.mxu0 0.0
      %1661 = vmatpush1.msra.mxu0 0.0
      %1662 = vmatprep.subr.mxu0 0.0
      %1663 = vmatpush1.msra.mxu0 0.0
      %1664 = vmatprep.subr.mxu0 0.0
      %1665 = vmatpush1.msra.mxu0 0.0
      %1666 = vmatprep.subr.mxu0 0.0
      %1667 = vmatpush1.msra.mxu0 0.0
      %1668 = vmatprep.subr.mxu0 0.0
      %1669 = vmatpush1.msra.mxu0 0.0
      %1670 = vmatprep.subr.mxu0 0.0
      %1671 = vmatpush1.msra.mxu0 0.0
      %1672 = vmatprep.subr.mxu0 0.0
      %1673 = vmatpush1.msra.mxu0 0.0
      %1674 = vmatprep.subr.mxu0 0.0
      %1675 = vmatpush1.msra.mxu0 0.0
      %1676 = vmatprep.subr.mxu0 0.0
      %1677 = vmatpush1.msra.mxu0 0.0
      %1678 = vmatprep.subr.mxu0 0.0
      %1679 = vmatpush1.msra.mxu0 0.0
      %1680 = vmatprep.subr.mxu0 0.0
      %1681 = vmatpush1.msra.mxu0 0.0
      %1682 = vmatprep.subr.mxu0 0.0
      %1683 = vmatpush1.msra.mxu0 0.0
      %1684 = vmatprep.subr.mxu0 0.0
      %1685 = vmatpush1.msra.mxu0 0.0
      %1686 = vmatprep.subr.mxu0 0.0
      %1687 = vmatpush1.msra.mxu0 0.0
      %1688 = vmatprep.subr.mxu0 0.0
      %1689 = vmatpush1.msra.mxu0 0.0
      %1690 = vmatprep.subr.mxu0 0.0
      %1691 = vmatpush1.msra.mxu0 0.0
      %1692 = vmatprep.subr.mxu0 0.0
      %1693 = vmatpush1.msra.mxu0 0.0
      %1694 = vmatprep.subr.mxu0 0.0
      %1695 = vmatpush1.msra.mxu0 0.0
      %1696 = vmatprep.subr.mxu0 0.0
      %1697 = vmatpush1.msra.mxu0 0.0
      %1698 = vmatprep.subr.mxu0 0.0
      %1699 = vmatpush1.msra.mxu0 0.0
      %1700 = vmatprep.mubr.f32.mxu0 0.0
      %1701 = vmatmul.mubr.f32.gmra.mrb[0].mxu0 %v1607
      %v1702 = vpop.f32.mrb[0].mxu0
      %v1703 = vadd.f32 0.0, %v1702
      %v1704 = vpop.f32.mrb[0].mxu0
      %1705 = vmatprep.mubr.f32.mxu0 0.0
      %1706 = vmatmul.mubr.f32.gmra.mrb[0].mxu0 %v1610
      %v1707 = vpop.f32.mrb[0].mxu0
      %v1708 = vadd.f32 0.0, %v1707
      %v1709 = vpop.f32.mrb[0].mxu0
      %1710 = vmatprep.mubr.f32.mxu0 0.0
      %1711 = vmatmul.mubr.f32.gmra.mrb[0].mxu0 %v1613
      %v1712 = vpop.f32.mrb[0].mxu0
      %v1713 = vadd.f32 0.0, %v1712
      %v1714 = vpop.f32.mrb[0].mxu0
      %1715 = vmatprep.mubr.f32.mxu0 0.0
      %1716 = vmatmul.mubr.f32.gmra.mrb[0].mxu0 %v1616
      %v1717 = vpop.f32.mrb[0].mxu0
      %v1718 = vadd.f32 0.0, %v1717
      %v1719 = vpop.f32.mrb[0].mxu0
      %1720 = vmatprep.mubr.f32.mxu0 0.0
      %1721 = vmatmul.mubr.f32.gmra.mrb[0].mxu0 %v1619
      %v1722 = vpop.f32.mrb[0].mxu0
      %v1723 = vadd.f32 0.0, %v1722
      %v1724 = vpop.f32.mrb[0].mxu0
      %1725 = vmatprep.mubr.f32.mxu0 0.0
      %1726 = vmatmul.mubr.f32.gmra.mrb[0].mxu0 %v1622
      %v1727 = vpop.f32.mrb[0].mxu0
      %v1728 = vadd.f32 0.0, %v1727
      %v1729 = vpop.f32.mrb[0].mxu0
      %1730 = vmatprep.mubr.f32.mxu0 0.0
      %1731 = vmatmul.mubr.f32.gmra.mrb[0].mxu0 %v1625
      %v1732 = vpop.f32.mrb[0].mxu0
      %v1733 = vadd.f32 0.0, %v1732
      %v1734 = vpop.f32.mrb[0].mxu0
      %1735 = vmatprep.mubr.f32.mxu0 0.0
      %1736 = vmatmul.mubr.f32.gmra.mrb[0].mxu0 %v1628
      %v1737 = vpop.f32.mrb[0].mxu0
      %v1738 = vadd.f32 0.0, %v1737
      %v1739 = vpop.f32.mrb[0].mxu0
      %1740 = vmatprep.mubr.f32.mxu0 0.0
      %1741 = vmatmul.mubr.f32.gmra.mrb[0].mxu0 %v1631
      %v1742 = vpop.f32.mrb[0].mxu0
      %v1743 = vadd.f32 0.0, %v1742
      %v1744 = vpop.f32.mrb[0].mxu0
      %1745 = vdwg.mxu0
      %v1746 = vadd.f32 %v1568, %v1703
      %v1747 = vadd.f32 %v1569, %v1708
      %v1748 = vadd.f32 %v1570, %v1713
      %v1749 = vadd.f32 %v1571, %v1718
      %v1750 = vadd.f32 %v1572, %v1723
      %v1751 = vadd.f32 %v1573, %v1728
      %v1752 = vadd.f32 %v1574, %v1733
      %v1753 = vadd.f32 %v1575, %v1738
      %v1754 = vadd.f32 %v1576, %v1743
      %s1755 = scalar_lea.vmem %s165, 9
      %v1756 = vld [vmem:[%s1755] ss:$3 sm:$0xff]
      %s1757 = scalar_lea.vmem %s165, 33
      %v1758 = vld [vmem:[%s1757] ss:$3 sm:$0xff]
      %s1759 = scalar_lea.vmem %s165, 57
      %v1760 = vld [vmem:[%s1759] ss:$3 sm:$0xff]
      %s1761 = scalar_lea.vmem %s165, 81
      %v1762 = vld [vmem:[%s1761] ss:$3 sm:$0xff]
      %s1763 = scalar_lea.vmem %s165, 105
      %v1764 = vld [vmem:[%s1763] ss:$3 sm:$0xff]
      %s1765 = scalar_lea.vmem %s165, 129
      %v1766 = vld [vmem:[%s1765] ss:$3 sm:$0xff]
      %s1767 = scalar_lea.vmem %s165, 153
      %v1768 = vld [vmem:[%s1767] ss:$3 sm:$0xff]
      %s1769 = scalar_lea.vmem %s165, 177
      %v1770 = vld [vmem:[%s1769] ss:$3 sm:$0xff]
      %s1771 = scalar_lea.vmem %s165, 201
      %v1772 = vld [vmem:[%s1771] ss:$3 sm:$0x1]
      %s1773 = scalar_lea.vmem %s1, 720
      %v1774 = vld [vmem:[%s1773] sm:$0xff]
      %v1775 = vld [vmem:[%s1773 + $0x8] sm:$0xff]
      %v1776 = vld [vmem:[%s1773 + $0x10] sm:$0xff]
      %v1777 = vld [vmem:[%s1773 + $0x18] sm:$0xff]
      %v1778 = vld [vmem:[%s1773 + $0x20] sm:$0xff]
      %v1779 = vld [vmem:[%s1773 + $0x28] sm:$0xff]
      %v1780 = vld [vmem:[%s1773 + $0x30] sm:$0xff]
      %v1781 = vld [vmem:[%s1773 + $0x38] sm:$0xff]
      %v1782 = vld [vmem:[%s1773 + $0x40] sm:$0xff]
      %v1783 = vld [vmem:[%s1773 + $0x48] sm:$0x1]
      %v1785 = vsel %vm227, %v1756, 0
      %v1788 = vsel %vm227, %v1758, 0
      %v1791 = vsel %vm227, %v1760, 0
      %v1794 = vsel %vm227, %v1762, 0
      %v1797 = vsel %vm227, %v1764, 0
      %v1800 = vsel %vm227, %v1766, 0
      %v1803 = vsel %vm227, %v1768, 0
      %v1806 = vsel %vm227, %v1770, 0
      %v1809 = vsel %vm227, %v1772, 0
      %v1812 = vsel %vm255, %v1783, 0
      %1814 = vmatprep.subr.mxu0 0.0
      %1815 = vmatpush1.msra.mxu0 %v1774
      %1816 = vmatprep.subr.mxu0 0.0
      %1817 = vmatpush1.msra.mxu0 %v1775
      %1818 = vmatprep.subr.mxu0 0.0
      %1819 = vmatpush1.msra.mxu0 %v1776
      %1820 = vmatprep.subr.mxu0 0.0
      %1821 = vmatpush1.msra.mxu0 %v1777
      %1822 = vmatprep.subr.mxu0 0.0
      %1823 = vmatpush1.msra.mxu0 %v1778
      %1824 = vmatprep.subr.mxu0 0.0
      %1825 = vmatpush1.msra.mxu0 %v1779
      %1826 = vmatprep.subr.mxu0 0.0
      %1827 = vmatpush1.msra.mxu0 %v1780
      %1828 = vmatprep.subr.mxu0 0.0
      %1829 = vmatpush1.msra.mxu0 %v1781
      %1830 = vmatprep.subr.mxu0 0.0
      %1831 = vmatpush1.msra.mxu0 %v1782
      %1832 = vmatprep.subr.mxu0 0.0
      %1833 = vmatpush1.msra.mxu0 %v1812
      %1834 = vmatprep.subr.mxu0 0.0
      %1835 = vmatpush1.msra.mxu0 0.0
      %1836 = vmatprep.subr.mxu0 0.0
      %1837 = vmatpush1.msra.mxu0 0.0
      %1838 = vmatprep.subr.mxu0 0.0
      %1839 = vmatpush1.msra.mxu0 0.0
      %1840 = vmatprep.subr.mxu0 0.0
      %1841 = vmatpush1.msra.mxu0 0.0
      %1842 = vmatprep.subr.mxu0 0.0
      %1843 = vmatpush1.msra.mxu0 0.0
      %1844 = vmatprep.subr.mxu0 0.0
      %1845 = vmatpush1.msra.mxu0 0.0
      %1846 = vmatprep.subr.mxu0 0.0
      %1847 = vmatpush1.msra.mxu0 0.0
      %1848 = vmatprep.subr.mxu0 0.0
      %1849 = vmatpush1.msra.mxu0 0.0
      %1850 = vmatprep.subr.mxu0 0.0
      %1851 = vmatpush1.msra.mxu0 0.0
      %1852 = vmatprep.subr.mxu0 0.0
      %1853 = vmatpush1.msra.mxu0 0.0
      %1854 = vmatprep.subr.mxu0 0.0
      %1855 = vmatpush1.msra.mxu0 0.0
      %1856 = vmatprep.subr.mxu0 0.0
      %1857 = vmatpush1.msra.mxu0 0.0
      %1858 = vmatprep.subr.mxu0 0.0
      %1859 = vmatpush1.msra.mxu0 0.0
      %1860 = vmatprep.subr.mxu0 0.0
      %1861 = vmatpush1.msra.mxu0 0.0
      %1862 = vmatprep.subr.mxu0 0.0
      %1863 = vmatpush1.msra.mxu0 0.0
      %1864 = vmatprep.subr.mxu0 0.0
      %1865 = vmatpush1.msra.mxu0 0.0
      %1866 = vmatprep.subr.mxu0 0.0
      %1867 = vmatpush1.msra.mxu0 0.0
      %1868 = vmatprep.subr.mxu0 0.0
      %1869 = vmatpush1.msra.mxu0 0.0
      %1870 = vmatprep.subr.mxu0 0.0
      %1871 = vmatpush1.msra.mxu0 0.0
      %1872 = vmatprep.subr.mxu0 0.0
      %1873 = vmatpush1.msra.mxu0 0.0
      %1874 = vmatprep.subr.mxu0 0.0
      %1875 = vmatpush1.msra.mxu0 0.0
      %1876 = vmatprep.subr.mxu0 0.0
      %1877 = vmatpush1.msra.mxu0 0.0
      %1878 = vmatprep.mubr.f32.mxu0 0.0
      %1879 = vmatmul.mubr.f32.gmra.mrb[0].mxu0 %v1785
      %v1880 = vpop.f32.mrb[0].mxu0
      %v1881 = vadd.f32 0.0, %v1880
      %v1882 = vpop.f32.mrb[0].mxu0
      %1883 = vmatprep.mubr.f32.mxu0 0.0
      %1884 = vmatmul.mubr.f32.gmra.mrb[0].mxu0 %v1788
      %v1885 = vpop.f32.mrb[0].mxu0
      %v1886 = vadd.f32 0.0, %v1885
      %v1887 = vpop.f32.mrb[0].mxu0
      %1888 = vmatprep.mubr.f32.mxu0 0.0
      %1889 = vmatmul.mubr.f32.gmra.mrb[0].mxu0 %v1791
      %v1890 = vpop.f32.mrb[0].mxu0
      %v1891 = vadd.f32 0.0, %v1890
      %v1892 = vpop.f32.mrb[0].mxu0
      %1893 = vmatprep.mubr.f32.mxu0 0.0
      %1894 = vmatmul.mubr.f32.gmra.mrb[0].mxu0 %v1794
      %v1895 = vpop.f32.mrb[0].mxu0
      %v1896 = vadd.f32 0.0, %v1895
      %v1897 = vpop.f32.mrb[0].mxu0
      %1898 = vmatprep.mubr.f32.mxu0 0.0
      %1899 = vmatmul.mubr.f32.gmra.mrb[0].mxu0 %v1797
      %v1900 = vpop.f32.mrb[0].mxu0
      %v1901 = vadd.f32 0.0, %v1900
      %v1902 = vpop.f32.mrb[0].mxu0
      %1903 = vmatprep.mubr.f32.mxu0 0.0
      %1904 = vmatmul.mubr.f32.gmra.mrb[0].mxu0 %v1800
      %v1905 = vpop.f32.mrb[0].mxu0
      %v1906 = vadd.f32 0.0, %v1905
      %v1907 = vpop.f32.mrb[0].mxu0
      %1908 = vmatprep.mubr.f32.mxu0 0.0
      %1909 = vmatmul.mubr.f32.gmra.mrb[0].mxu0 %v1803
      %v1910 = vpop.f32.mrb[0].mxu0
      %v1911 = vadd.f32 0.0, %v1910
      %v1912 = vpop.f32.mrb[0].mxu0
      %1913 = vmatprep.mubr.f32.mxu0 0.0
      %1914 = vmatmul.mubr.f32.gmra.mrb[0].mxu0 %v1806
      %v1915 = vpop.f32.mrb[0].mxu0
      %v1916 = vadd.f32 0.0, %v1915
      %v1917 = vpop.f32.mrb[0].mxu0
      %1918 = vmatprep.mubr.f32.mxu0 0.0
      %1919 = vmatmul.mubr.f32.gmra.mrb[0].mxu0 %v1809
      %v1920 = vpop.f32.mrb[0].mxu0
      %v1921 = vadd.f32 0.0, %v1920
      %v1922 = vpop.f32.mrb[0].mxu0
      %1923 = vdwg.mxu0
      %v1924 = vadd.f32 %v1746, %v1881
      %v1925 = vadd.f32 %v1747, %v1886
      %v1926 = vadd.f32 %v1748, %v1891
      %v1927 = vadd.f32 %v1749, %v1896
      %v1928 = vadd.f32 %v1750, %v1901
      %v1929 = vadd.f32 %v1751, %v1906
      %v1930 = vadd.f32 %v1752, %v1911
      %v1931 = vadd.f32 %v1753, %v1916
      %v1932 = vadd.f32 %v1754, %v1921
      %s1933 = scalar_lea.vmem %s165, 10
      %v1934 = vld [vmem:[%s1933] ss:$3 sm:$0xff]
      %s1935 = scalar_lea.vmem %s165, 34
      %v1936 = vld [vmem:[%s1935] ss:$3 sm:$0xff]
      %s1937 = scalar_lea.vmem %s165, 58
      %v1938 = vld [vmem:[%s1937] ss:$3 sm:$0xff]
      %s1939 = scalar_lea.vmem %s165, 82
      %v1940 = vld [vmem:[%s1939] ss:$3 sm:$0xff]
      %s1941 = scalar_lea.vmem %s165, 106
      %v1942 = vld [vmem:[%s1941] ss:$3 sm:$0xff]
      %s1943 = scalar_lea.vmem %s165, 130
      %v1944 = vld [vmem:[%s1943] ss:$3 sm:$0xff]
      %s1945 = scalar_lea.vmem %s165, 154
      %v1946 = vld [vmem:[%s1945] ss:$3 sm:$0xff]
      %s1947 = scalar_lea.vmem %s165, 178
      %v1948 = vld [vmem:[%s1947] ss:$3 sm:$0xff]
      %s1949 = scalar_lea.vmem %s165, 202
      %v1950 = vld [vmem:[%s1949] ss:$3 sm:$0x1]
      %s1951 = scalar_lea.vmem %s1, 800
      %v1952 = vld [vmem:[%s1951] sm:$0xff]
      %v1953 = vld [vmem:[%s1951 + $0x8] sm:$0xff]
      %v1954 = vld [vmem:[%s1951 + $0x10] sm:$0xff]
      %v1955 = vld [vmem:[%s1951 + $0x18] sm:$0xff]
      %v1956 = vld [vmem:[%s1951 + $0x20] sm:$0xff]
      %v1957 = vld [vmem:[%s1951 + $0x28] sm:$0xff]
      %v1958 = vld [vmem:[%s1951 + $0x30] sm:$0xff]
      %v1959 = vld [vmem:[%s1951 + $0x38] sm:$0xff]
      %v1960 = vld [vmem:[%s1951 + $0x40] sm:$0xff]
      %v1961 = vld [vmem:[%s1951 + $0x48] sm:$0x1]
      %v1963 = vsel %vm227, %v1934, 0
      %v1966 = vsel %vm227, %v1936, 0
      %v1969 = vsel %vm227, %v1938, 0
      %v1972 = vsel %vm227, %v1940, 0
      %v1975 = vsel %vm227, %v1942, 0
      %v1978 = vsel %vm227, %v1944, 0
      %v1981 = vsel %vm227, %v1946, 0
      %v1984 = vsel %vm227, %v1948, 0
      %v1987 = vsel %vm227, %v1950, 0
      %v1990 = vsel %vm255, %v1961, 0
      %1992 = vmatprep.subr.mxu0 0.0
      %1993 = vmatpush1.msra.mxu0 %v1952
      %1994 = vmatprep.subr.mxu0 0.0
      %1995 = vmatpush1.msra.mxu0 %v1953
      %1996 = vmatprep.subr.mxu0 0.0
      %1997 = vmatpush1.msra.mxu0 %v1954
      %1998 = vmatprep.subr.mxu0 0.0
      %1999 = vmatpush1.msra.mxu0 %v1955
      %2000 = vmatprep.subr.mxu0 0.0
      %2001 = vmatpush1.msra.mxu0 %v1956
      %2002 = vmatprep.subr.mxu0 0.0
      %2003 = vmatpush1.msra.mxu0 %v1957
      %2004 = vmatprep.subr.mxu0 0.0
      %2005 = vmatpush1.msra.mxu0 %v1958
      %2006 = vmatprep.subr.mxu0 0.0
      %2007 = vmatpush1.msra.mxu0 %v1959
      %2008 = vmatprep.subr.mxu0 0.0
      %2009 = vmatpush1.msra.mxu0 %v1960
      %2010 = vmatprep.subr.mxu0 0.0
      %2011 = vmatpush1.msra.mxu0 %v1990
      %2012 = vmatprep.subr.mxu0 0.0
      %2013 = vmatpush1.msra.mxu0 0.0
      %2014 = vmatprep.subr.mxu0 0.0
      %2015 = vmatpush1.msra.mxu0 0.0
      %2016 = vmatprep.subr.mxu0 0.0
      %2017 = vmatpush1.msra.mxu0 0.0
      %2018 = vmatprep.subr.mxu0 0.0
      %2019 = vmatpush1.msra.mxu0 0.0
      %2020 = vmatprep.subr.mxu0 0.0
      %2021 = vmatpush1.msra.mxu0 0.0
      %2022 = vmatprep.subr.mxu0 0.0
      %2023 = vmatpush1.msra.mxu0 0.0
      %2024 = vmatprep.subr.mxu0 0.0
      %2025 = vmatpush1.msra.mxu0 0.0
      %2026 = vmatprep.subr.mxu0 0.0
      %2027 = vmatpush1.msra.mxu0 0.0
      %2028 = vmatprep.subr.mxu0 0.0
      %2029 = vmatpush1.msra.mxu0 0.0
      %2030 = vmatprep.subr.mxu0 0.0
      %2031 = vmatpush1.msra.mxu0 0.0
      %2032 = vmatprep.subr.mxu0 0.0
      %2033 = vmatpush1.msra.mxu0 0.0
      %2034 = vmatprep.subr.mxu0 0.0
      %2035 = vmatpush1.msra.mxu0 0.0
      %2036 = vmatprep.subr.mxu0 0.0
      %2037 = vmatpush1.msra.mxu0 0.0
      %2038 = vmatprep.subr.mxu0 0.0
      %2039 = vmatpush1.msra.mxu0 0.0
      %2040 = vmatprep.subr.mxu0 0.0
      %2041 = vmatpush1.msra.mxu0 0.0
      %2042 = vmatprep.subr.mxu0 0.0
      %2043 = vmatpush1.msra.mxu0 0.0
      %2044 = vmatprep.subr.mxu0 0.0
      %2045 = vmatpush1.msra.mxu0 0.0
      %2046 = vmatprep.subr.mxu0 0.0
      %2047 = vmatpush1.msra.mxu0 0.0
      %2048 = vmatprep.subr.mxu0 0.0
      %2049 = vmatpush1.msra.mxu0 0.0
      %2050 = vmatprep.subr.mxu0 0.0
      %2051 = vmatpush1.msra.mxu0 0.0
      %2052 = vmatprep.subr.mxu0 0.0
      %2053 = vmatpush1.msra.mxu0 0.0
      %2054 = vmatprep.subr.mxu0 0.0
      %2055 = vmatpush1.msra.mxu0 0.0
      %2056 = vmatprep.mubr.f32.mxu0 0.0
      %2057 = vmatmul.mubr.f32.gmra.mrb[0].mxu0 %v1963
      %v2058 = vpop.f32.mrb[0].mxu0
      %v2059 = vadd.f32 0.0, %v2058
      %v2060 = vpop.f32.mrb[0].mxu0
      %2061 = vmatprep.mubr.f32.mxu0 0.0
      %2062 = vmatmul.mubr.f32.gmra.mrb[0].mxu0 %v1966
      %v2063 = vpop.f32.mrb[0].mxu0
      %v2064 = vadd.f32 0.0, %v2063
      %v2065 = vpop.f32.mrb[0].mxu0
      %2066 = vmatprep.mubr.f32.mxu0 0.0
      %2067 = vmatmul.mubr.f32.gmra.mrb[0].mxu0 %v1969
      %v2068 = vpop.f32.mrb[0].mxu0
      %v2069 = vadd.f32 0.0, %v2068
      %v2070 = vpop.f32.mrb[0].mxu0
      %2071 = vmatprep.mubr.f32.mxu0 0.0
      %2072 = vmatmul.mubr.f32.gmra.mrb[0].mxu0 %v1972
      %v2073 = vpop.f32.mrb[0].mxu0
      %v2074 = vadd.f32 0.0, %v2073
      %v2075 = vpop.f32.mrb[0].mxu0
      %2076 = vmatprep.mubr.f32.mxu0 0.0
      %2077 = vmatmul.mubr.f32.gmra.mrb[0].mxu0 %v1975
      %v2078 = vpop.f32.mrb[0].mxu0
      %v2079 = vadd.f32 0.0, %v2078
      %v2080 = vpop.f32.mrb[0].mxu0
      %2081 = vmatprep.mubr.f32.mxu0 0.0
      %2082 = vmatmul.mubr.f32.gmra.mrb[0].mxu0 %v1978
      %v2083 = vpop.f32.mrb[0].mxu0
      %v2084 = vadd.f32 0.0, %v2083
      %v2085 = vpop.f32.mrb[0].mxu0
      %2086 = vmatprep.mubr.f32.mxu0 0.0
      %2087 = vmatmul.mubr.f32.gmra.mrb[0].mxu0 %v1981
      %v2088 = vpop.f32.mrb[0].mxu0
      %v2089 = vadd.f32 0.0, %v2088
      %v2090 = vpop.f32.mrb[0].mxu0
      %2091 = vmatprep.mubr.f32.mxu0 0.0
      %2092 = vmatmul.mubr.f32.gmra.mrb[0].mxu0 %v1984
      %v2093 = vpop.f32.mrb[0].mxu0
      %v2094 = vadd.f32 0.0, %v2093
      %v2095 = vpop.f32.mrb[0].mxu0
      %2096 = vmatprep.mubr.f32.mxu0 0.0
      %2097 = vmatmul.mubr.f32.gmra.mrb[0].mxu0 %v1987
      %v2098 = vpop.f32.mrb[0].mxu0
      %v2099 = vadd.f32 0.0, %v2098
      %v2100 = vpop.f32.mrb[0].mxu0
      %2101 = vdwg.mxu0
      %v2102 = vadd.f32 %v1924, %v2059
      %v2103 = vadd.f32 %v1925, %v2064
      %v2104 = vadd.f32 %v1926, %v2069
      %v2105 = vadd.f32 %v1927, %v2074
      %v2106 = vadd.f32 %v1928, %v2079
      %v2107 = vadd.f32 %v1929, %v2084
      %v2108 = vadd.f32 %v1930, %v2089
      %v2109 = vadd.f32 %v1931, %v2094
      %v2110 = vadd.f32 %v1932, %v2099
      %s2111 = scalar_lea.vmem %s165, 11
      %v2112 = vld [vmem:[%s2111] ss:$3 sm:$0xff]
      %s2113 = scalar_lea.vmem %s165, 35
      %v2114 = vld [vmem:[%s2113] ss:$3 sm:$0xff]
      %s2115 = scalar_lea.vmem %s165, 59
      %v2116 = vld [vmem:[%s2115] ss:$3 sm:$0xff]
      %s2117 = scalar_lea.vmem %s165, 83
      %v2118 = vld [vmem:[%s2117] ss:$3 sm:$0xff]
      %s2119 = scalar_lea.vmem %s165, 107
      %v2120 = vld [vmem:[%s2119] ss:$3 sm:$0xff]
      %s2121 = scalar_lea.vmem %s165, 131
      %v2122 = vld [vmem:[%s2121] ss:$3 sm:$0xff]
      %s2123 = scalar_lea.vmem %s165, 155
      %v2124 = vld [vmem:[%s2123] ss:$3 sm:$0xff]
      %s2125 = scalar_lea.vmem %s165, 179
      %v2126 = vld [vmem:[%s2125] ss:$3 sm:$0xff]
      %s2127 = scalar_lea.vmem %s165, 203
      %v2128 = vld [vmem:[%s2127] ss:$3 sm:$0x1]
      %s2129 = scalar_lea.vmem %s1, 880
      %v2130 = vld [vmem:[%s2129] sm:$0xff]
      %v2131 = vld [vmem:[%s2129 + $0x8] sm:$0xff]
      %v2132 = vld [vmem:[%s2129 + $0x10] sm:$0xff]
      %v2133 = vld [vmem:[%s2129 + $0x18] sm:$0xff]
      %v2134 = vld [vmem:[%s2129 + $0x20] sm:$0xff]
      %v2135 = vld [vmem:[%s2129 + $0x28] sm:$0xff]
      %v2136 = vld [vmem:[%s2129 + $0x30] sm:$0xff]
      %v2137 = vld [vmem:[%s2129 + $0x38] sm:$0xff]
      %v2138 = vld [vmem:[%s2129 + $0x40] sm:$0xff]
      %v2139 = vld [vmem:[%s2129 + $0x48] sm:$0x1]
      %v2141 = vsel %vm227, %v2112, 0
      %v2144 = vsel %vm227, %v2114, 0
      %v2147 = vsel %vm227, %v2116, 0
      %v2150 = vsel %vm227, %v2118, 0
      %v2153 = vsel %vm227, %v2120, 0
      %v2156 = vsel %vm227, %v2122, 0
      %v2159 = vsel %vm227, %v2124, 0
      %v2162 = vsel %vm227, %v2126, 0
      %v2165 = vsel %vm227, %v2128, 0
      %v2168 = vsel %vm255, %v2139, 0
      %2170 = vmatprep.subr.mxu0 0.0
      %2171 = vmatpush1.msra.mxu0 %v2130
      %2172 = vmatprep.subr.mxu0 0.0
      %2173 = vmatpush1.msra.mxu0 %v2131
      %2174 = vmatprep.subr.mxu0 0.0
      %2175 = vmatpush1.msra.mxu0 %v2132
      %2176 = vmatprep.subr.mxu0 0.0
      %2177 = vmatpush1.msra.mxu0 %v2133
      %2178 = vmatprep.subr.mxu0 0.0
      %2179 = vmatpush1.msra.mxu0 %v2134
      %2180 = vmatprep.subr.mxu0 0.0
      %2181 = vmatpush1.msra.mxu0 %v2135
      %2182 = vmatprep.subr.mxu0 0.0
      %2183 = vmatpush1.msra.mxu0 %v2136
      %2184 = vmatprep.subr.mxu0 0.0
      %2185 = vmatpush1.msra.mxu0 %v2137
      %2186 = vmatprep.subr.mxu0 0.0
      %2187 = vmatpush1.msra.mxu0 %v2138
      %2188 = vmatprep.subr.mxu0 0.0
      %2189 = vmatpush1.msra.mxu0 %v2168
      %2190 = vmatprep.subr.mxu0 0.0
      %2191 = vmatpush1.msra.mxu0 0.0
      %2192 = vmatprep.subr.mxu0 0.0
      %2193 = vmatpush1.msra.mxu0 0.0
      %2194 = vmatprep.subr.mxu0 0.0
      %2195 = vmatpush1.msra.mxu0 0.0
      %2196 = vmatprep.subr.mxu0 0.0
      %2197 = vmatpush1.msra.mxu0 0.0
      %2198 = vmatprep.subr.mxu0 0.0
      %2199 = vmatpush1.msra.mxu0 0.0
      %2200 = vmatprep.subr.mxu0 0.0
      %2201 = vmatpush1.msra.mxu0 0.0
      %2202 = vmatprep.subr.mxu0 0.0
      %2203 = vmatpush1.msra.mxu0 0.0
      %2204 = vmatprep.subr.mxu0 0.0
      %2205 = vmatpush1.msra.mxu0 0.0
      %2206 = vmatprep.subr.mxu0 0.0
      %2207 = vmatpush1.msra.mxu0 0.0
      %2208 = vmatprep.subr.mxu0 0.0
      %2209 = vmatpush1.msra.mxu0 0.0
      %2210 = vmatprep.subr.mxu0 0.0
      %2211 = vmatpush1.msra.mxu0 0.0
      %2212 = vmatprep.subr.mxu0 0.0
      %2213 = vmatpush1.msra.mxu0 0.0
      %2214 = vmatprep.subr.mxu0 0.0
      %2215 = vmatpush1.msra.mxu0 0.0
      %2216 = vmatprep.subr.mxu0 0.0
      %2217 = vmatpush1.msra.mxu0 0.0
      %2218 = vmatprep.subr.mxu0 0.0
      %2219 = vmatpush1.msra.mxu0 0.0
      %2220 = vmatprep.subr.mxu0 0.0
      %2221 = vmatpush1.msra.mxu0 0.0
      %2222 = vmatprep.subr.mxu0 0.0
      %2223 = vmatpush1.msra.mxu0 0.0
      %2224 = vmatprep.subr.mxu0 0.0
      %2225 = vmatpush1.msra.mxu0 0.0
      %2226 = vmatprep.subr.mxu0 0.0
      %2227 = vmatpush1.msra.mxu0 0.0
      %2228 = vmatprep.subr.mxu0 0.0
      %2229 = vmatpush1.msra.mxu0 0.0
      %2230 = vmatprep.subr.mxu0 0.0
      %2231 = vmatpush1.msra.mxu0 0.0
      %2232 = vmatprep.subr.mxu0 0.0
      %2233 = vmatpush1.msra.mxu0 0.0
      %2234 = vmatprep.mubr.f32.mxu0 0.0
      %2235 = vmatmul.mubr.f32.gmra.mrb[0].mxu0 %v2141
      %v2236 = vpop.f32.mrb[0].mxu0
      %v2237 = vadd.f32 0.0, %v2236
      %v2238 = vpop.f32.mrb[0].mxu0
      %2239 = vmatprep.mubr.f32.mxu0 0.0
      %2240 = vmatmul.mubr.f32.gmra.mrb[0].mxu0 %v2144
      %v2241 = vpop.f32.mrb[0].mxu0
      %v2242 = vadd.f32 0.0, %v2241
      %v2243 = vpop.f32.mrb[0].mxu0
      %2244 = vmatprep.mubr.f32.mxu0 0.0
      %2245 = vmatmul.mubr.f32.gmra.mrb[0].mxu0 %v2147
      %v2246 = vpop.f32.mrb[0].mxu0
      %v2247 = vadd.f32 0.0, %v2246
      %v2248 = vpop.f32.mrb[0].mxu0
      %2249 = vmatprep.mubr.f32.mxu0 0.0
      %2250 = vmatmul.mubr.f32.gmra.mrb[0].mxu0 %v2150
      %v2251 = vpop.f32.mrb[0].mxu0
      %v2252 = vadd.f32 0.0, %v2251
      %v2253 = vpop.f32.mrb[0].mxu0
      %2254 = vmatprep.mubr.f32.mxu0 0.0
      %2255 = vmatmul.mubr.f32.gmra.mrb[0].mxu0 %v2153
      %v2256 = vpop.f32.mrb[0].mxu0
      %v2257 = vadd.f32 0.0, %v2256
      %v2258 = vpop.f32.mrb[0].mxu0
      %2259 = vmatprep.mubr.f32.mxu0 0.0
      %2260 = vmatmul.mubr.f32.gmra.mrb[0].mxu0 %v2156
      %v2261 = vpop.f32.mrb[0].mxu0
      %v2262 = vadd.f32 0.0, %v2261
      %v2263 = vpop.f32.mrb[0].mxu0
      %2264 = vmatprep.mubr.f32.mxu0 0.0
      %2265 = vmatmul.mubr.f32.gmra.mrb[0].mxu0 %v2159
      %v2266 = vpop.f32.mrb[0].mxu0
      %v2267 = vadd.f32 0.0, %v2266
      %v2268 = vpop.f32.mrb[0].mxu0
      %2269 = vmatprep.mubr.f32.mxu0 0.0
      %2270 = vmatmul.mubr.f32.gmra.mrb[0].mxu0 %v2162
      %v2271 = vpop.f32.mrb[0].mxu0
      %v2272 = vadd.f32 0.0, %v2271
      %v2273 = vpop.f32.mrb[0].mxu0
      %2274 = vmatprep.mubr.f32.mxu0 0.0
      %2275 = vmatmul.mubr.f32.gmra.mrb[0].mxu0 %v2165
      %v2276 = vpop.f32.mrb[0].mxu0
      %v2277 = vadd.f32 0.0, %v2276
      %v2278 = vpop.f32.mrb[0].mxu0
      %2279 = vdwg.mxu0
      %v2280 = vadd.f32 %v2102, %v2237
      %v2281 = vadd.f32 %v2103, %v2242
      %v2282 = vadd.f32 %v2104, %v2247
      %v2283 = vadd.f32 %v2105, %v2252
      %v2284 = vadd.f32 %v2106, %v2257
      %v2285 = vadd.f32 %v2107, %v2262
      %v2286 = vadd.f32 %v2108, %v2267
      %v2287 = vadd.f32 %v2109, %v2272
      %v2288 = vadd.f32 %v2110, %v2277
      %s2289 = scalar_lea.vmem %s165, 12
      %v2290 = vld [vmem:[%s2289] ss:$3 sm:$0xff]
      %s2291 = scalar_lea.vmem %s165, 36
      %v2292 = vld [vmem:[%s2291] ss:$3 sm:$0xff]
      %s2293 = scalar_lea.vmem %s165, 60
      %v2294 = vld [vmem:[%s2293] ss:$3 sm:$0xff]
      %s2295 = scalar_lea.vmem %s165, 84
      %v2296 = vld [vmem:[%s2295] ss:$3 sm:$0xff]
      %s2297 = scalar_lea.vmem %s165, 108
      %v2298 = vld [vmem:[%s2297] ss:$3 sm:$0xff]
      %s2299 = scalar_lea.vmem %s165, 132
      %v2300 = vld [vmem:[%s2299] ss:$3 sm:$0xff]
      %s2301 = scalar_lea.vmem %s165, 156
      %v2302 = vld [vmem:[%s2301] ss:$3 sm:$0xff]
      %s2303 = scalar_lea.vmem %s165, 180
      %v2304 = vld [vmem:[%s2303] ss:$3 sm:$0xff]
      %s2305 = scalar_lea.vmem %s165, 204
      %v2306 = vld [vmem:[%s2305] ss:$3 sm:$0x1]
      %s2307 = scalar_lea.vmem %s1, 960
      %v2308 = vld [vmem:[%s2307] sm:$0xff]
      %v2309 = vld [vmem:[%s2307 + $0x8] sm:$0xff]
      %v2310 = vld [vmem:[%s2307 + $0x10] sm:$0xff]
      %v2311 = vld [vmem:[%s2307 + $0x18] sm:$0xff]
      %v2312 = vld [vmem:[%s2307 + $0x20] sm:$0xff]
      %v2313 = vld [vmem:[%s2307 + $0x28] sm:$0xff]
      %v2314 = vld [vmem:[%s2307 + $0x30] sm:$0xff]
      %v2315 = vld [vmem:[%s2307 + $0x38] sm:$0xff]
      %v2316 = vld [vmem:[%s2307 + $0x40] sm:$0xff]
      %v2317 = vld [vmem:[%s2307 + $0x48] sm:$0x1]
      %v2319 = vsel %vm227, %v2290, 0
      %v2322 = vsel %vm227, %v2292, 0
      %v2325 = vsel %vm227, %v2294, 0
      %v2328 = vsel %vm227, %v2296, 0
      %v2331 = vsel %vm227, %v2298, 0
      %v2334 = vsel %vm227, %v2300, 0
      %v2337 = vsel %vm227, %v2302, 0
      %v2340 = vsel %vm227, %v2304, 0
      %v2343 = vsel %vm227, %v2306, 0
      %v2346 = vsel %vm255, %v2317, 0
      %2348 = vmatprep.subr.mxu0 0.0
      %2349 = vmatpush1.msra.mxu0 %v2308
      %2350 = vmatprep.subr.mxu0 0.0
      %2351 = vmatpush1.msra.mxu0 %v2309
      %2352 = vmatprep.subr.mxu0 0.0
      %2353 = vmatpush1.msra.mxu0 %v2310
      %2354 = vmatprep.subr.mxu0 0.0
      %2355 = vmatpush1.msra.mxu0 %v2311
      %2356 = vmatprep.subr.mxu0 0.0
      %2357 = vmatpush1.msra.mxu0 %v2312
      %2358 = vmatprep.subr.mxu0 0.0
      %2359 = vmatpush1.msra.mxu0 %v2313
      %2360 = vmatprep.subr.mxu0 0.0
      %2361 = vmatpush1.msra.mxu0 %v2314
      %2362 = vmatprep.subr.mxu0 0.0
      %2363 = vmatpush1.msra.mxu0 %v2315
      %2364 = vmatprep.subr.mxu0 0.0
      %2365 = vmatpush1.msra.mxu0 %v2316
      %2366 = vmatprep.subr.mxu0 0.0
      %2367 = vmatpush1.msra.mxu0 %v2346
      %2368 = vmatprep.subr.mxu0 0.0
      %2369 = vmatpush1.msra.mxu0 0.0
      %2370 = vmatprep.subr.mxu0 0.0
      %2371 = vmatpush1.msra.mxu0 0.0
      %2372 = vmatprep.subr.mxu0 0.0
      %2373 = vmatpush1.msra.mxu0 0.0
      %2374 = vmatprep.subr.mxu0 0.0
      %2375 = vmatpush1.msra.mxu0 0.0
      %2376 = vmatprep.subr.mxu0 0.0
      %2377 = vmatpush1.msra.mxu0 0.0
      %2378 = vmatprep.subr.mxu0 0.0
      %2379 = vmatpush1.msra.mxu0 0.0
      %2380 = vmatprep.subr.mxu0 0.0
      %2381 = vmatpush1.msra.mxu0 0.0
      %2382 = vmatprep.subr.mxu0 0.0
      %2383 = vmatpush1.msra.mxu0 0.0
      %2384 = vmatprep.subr.mxu0 0.0
      %2385 = vmatpush1.msra.mxu0 0.0
      %2386 = vmatprep.subr.mxu0 0.0
      %2387 = vmatpush1.msra.mxu0 0.0
      %2388 = vmatprep.subr.mxu0 0.0
      %2389 = vmatpush1.msra.mxu0 0.0
      %2390 = vmatprep.subr.mxu0 0.0
      %2391 = vmatpush1.msra.mxu0 0.0
      %2392 = vmatprep.subr.mxu0 0.0
      %2393 = vmatpush1.msra.mxu0 0.0
      %2394 = vmatprep.subr.mxu0 0.0
      %2395 = vmatpush1.msra.mxu0 0.0
      %2396 = vmatprep.subr.mxu0 0.0
      %2397 = vmatpush1.msra.mxu0 0.0
      %2398 = vmatprep.subr.mxu0 0.0
      %2399 = vmatpush1.msra.mxu0 0.0
      %2400 = vmatprep.subr.mxu0 0.0
      %2401 = vmatpush1.msra.mxu0 0.0
      %2402 = vmatprep.subr.mxu0 0.0
      %2403 = vmatpush1.msra.mxu0 0.0
      %2404 = vmatprep.subr.mxu0 0.0
      %2405 = vmatpush1.msra.mxu0 0.0
      %2406 = vmatprep.subr.mxu0 0.0
      %2407 = vmatpush1.msra.mxu0 0.0
      %2408 = vmatprep.subr.mxu0 0.0
      %2409 = vmatpush1.msra.mxu0 0.0
      %2410 = vmatprep.subr.mxu0 0.0
      %2411 = vmatpush1.msra.mxu0 0.0
      %2412 = vmatprep.mubr.f32.mxu0 0.0
      %2413 = vmatmul.mubr.f32.gmra.mrb[0].mxu0 %v2319
      %v2414 = vpop.f32.mrb[0].mxu0
      %v2415 = vadd.f32 0.0, %v2414
      %v2416 = vpop.f32.mrb[0].mxu0
      %2417 = vmatprep.mubr.f32.mxu0 0.0
      %2418 = vmatmul.mubr.f32.gmra.mrb[0].mxu0 %v2322
      %v2419 = vpop.f32.mrb[0].mxu0
      %v2420 = vadd.f32 0.0, %v2419
      %v2421 = vpop.f32.mrb[0].mxu0
      %2422 = vmatprep.mubr.f32.mxu0 0.0
      %2423 = vmatmul.mubr.f32.gmra.mrb[0].mxu0 %v2325
      %v2424 = vpop.f32.mrb[0].mxu0
      %v2425 = vadd.f32 0.0, %v2424
      %v2426 = vpop.f32.mrb[0].mxu0
      %2427 = vmatprep.mubr.f32.mxu0 0.0
      %2428 = vmatmul.mubr.f32.gmra.mrb[0].mxu0 %v2328
      %v2429 = vpop.f32.mrb[0].mxu0
      %v2430 = vadd.f32 0.0, %v2429
      %v2431 = vpop.f32.mrb[0].mxu0
      %2432 = vmatprep.mubr.f32.mxu0 0.0
      %2433 = vmatmul.mubr.f32.gmra.mrb[0].mxu0 %v2331
      %v2434 = vpop.f32.mrb[0].mxu0
      %v2435 = vadd.f32 0.0, %v2434
      %v2436 = vpop.f32.mrb[0].mxu0
      %2437 = vmatprep.mubr.f32.mxu0 0.0
      %2438 = vmatmul.mubr.f32.gmra.mrb[0].mxu0 %v2334
      %v2439 = vpop.f32.mrb[0].mxu0
      %v2440 = vadd.f32 0.0, %v2439
      %v2441 = vpop.f32.mrb[0].mxu0
      %2442 = vmatprep.mubr.f32.mxu0 0.0
      %2443 = vmatmul.mubr.f32.gmra.mrb[0].mxu0 %v2337
      %v2444 = vpop.f32.mrb[0].mxu0
      %v2445 = vadd.f32 0.0, %v2444
      %v2446 = vpop.f32.mrb[0].mxu0
      %2447 = vmatprep.mubr.f32.mxu0 0.0
      %2448 = vmatmul.mubr.f32.gmra.mrb[0].mxu0 %v2340
      %v2449 = vpop.f32.mrb[0].mxu0
      %v2450 = vadd.f32 0.0, %v2449
      %v2451 = vpop.f32.mrb[0].mxu0
      %2452 = vmatprep.mubr.f32.mxu0 0.0
      %2453 = vmatmul.mubr.f32.gmra.mrb[0].mxu0 %v2343
      %v2454 = vpop.f32.mrb[0].mxu0
      %v2455 = vadd.f32 0.0, %v2454
      %v2456 = vpop.f32.mrb[0].mxu0
      %2457 = vdwg.mxu0
      %v2458 = vadd.f32 %v2280, %v2415
      %v2459 = vadd.f32 %v2281, %v2420
      %v2460 = vadd.f32 %v2282, %v2425
      %v2461 = vadd.f32 %v2283, %v2430
      %v2462 = vadd.f32 %v2284, %v2435
      %v2463 = vadd.f32 %v2285, %v2440
      %v2464 = vadd.f32 %v2286, %v2445
      %v2465 = vadd.f32 %v2287, %v2450
      %v2466 = vadd.f32 %v2288, %v2455
      %s2467 = scalar_lea.vmem %s165, 13
      %v2468 = vld [vmem:[%s2467] ss:$3 sm:$0xff]
      %s2469 = scalar_lea.vmem %s165, 37
      %v2470 = vld [vmem:[%s2469] ss:$3 sm:$0xff]
      %s2471 = scalar_lea.vmem %s165, 61
      %v2472 = vld [vmem:[%s2471] ss:$3 sm:$0xff]
      %s2473 = scalar_lea.vmem %s165, 85
      %v2474 = vld [vmem:[%s2473] ss:$3 sm:$0xff]
      %s2475 = scalar_lea.vmem %s165, 109
      %v2476 = vld [vmem:[%s2475] ss:$3 sm:$0xff]
      %s2477 = scalar_lea.vmem %s165, 133
      %v2478 = vld [vmem:[%s2477] ss:$3 sm:$0xff]
      %s2479 = scalar_lea.vmem %s165, 157
      %v2480 = vld [vmem:[%s2479] ss:$3 sm:$0xff]
      %s2481 = scalar_lea.vmem %s165, 181
      %v2482 = vld [vmem:[%s2481] ss:$3 sm:$0xff]
      %s2483 = scalar_lea.vmem %s165, 205
      %v2484 = vld [vmem:[%s2483] ss:$3 sm:$0x1]
      %s2485 = scalar_lea.vmem %s1, 1040
      %v2486 = vld [vmem:[%s2485] sm:$0xff]
      %v2487 = vld [vmem:[%s2485 + $0x8] sm:$0xff]
      %v2488 = vld [vmem:[%s2485 + $0x10] sm:$0xff]
      %v2489 = vld [vmem:[%s2485 + $0x18] sm:$0xff]
      %v2490 = vld [vmem:[%s2485 + $0x20] sm:$0xff]
      %v2491 = vld [vmem:[%s2485 + $0x28] sm:$0xff]
      %v2492 = vld [vmem:[%s2485 + $0x30] sm:$0xff]
      %v2493 = vld [vmem:[%s2485 + $0x38] sm:$0xff]
      %v2494 = vld [vmem:[%s2485 + $0x40] sm:$0xff]
      %v2495 = vld [vmem:[%s2485 + $0x48] sm:$0x1]
      %v2497 = vsel %vm227, %v2468, 0
      %v2500 = vsel %vm227, %v2470, 0
      %v2503 = vsel %vm227, %v2472, 0
      %v2506 = vsel %vm227, %v2474, 0
      %v2509 = vsel %vm227, %v2476, 0
      %v2512 = vsel %vm227, %v2478, 0
      %v2515 = vsel %vm227, %v2480, 0
      %v2518 = vsel %vm227, %v2482, 0
      %v2521 = vsel %vm227, %v2484, 0
      %v2524 = vsel %vm255, %v2495, 0
      %2526 = vmatprep.subr.mxu0 0.0
      %2527 = vmatpush1.msra.mxu0 %v2486
      %2528 = vmatprep.subr.mxu0 0.0
      %2529 = vmatpush1.msra.mxu0 %v2487
      %2530 = vmatprep.subr.mxu0 0.0
      %2531 = vmatpush1.msra.mxu0 %v2488
      %2532 = vmatprep.subr.mxu0 0.0
      %2533 = vmatpush1.msra.mxu0 %v2489
      %2534 = vmatprep.subr.mxu0 0.0
      %2535 = vmatpush1.msra.mxu0 %v2490
      %2536 = vmatprep.subr.mxu0 0.0
      %2537 = vmatpush1.msra.mxu0 %v2491
      %2538 = vmatprep.subr.mxu0 0.0
      %2539 = vmatpush1.msra.mxu0 %v2492
      %2540 = vmatprep.subr.mxu0 0.0
      %2541 = vmatpush1.msra.mxu0 %v2493
      %2542 = vmatprep.subr.mxu0 0.0
      %2543 = vmatpush1.msra.mxu0 %v2494
      %2544 = vmatprep.subr.mxu0 0.0
      %2545 = vmatpush1.msra.mxu0 %v2524
      %2546 = vmatprep.subr.mxu0 0.0
      %2547 = vmatpush1.msra.mxu0 0.0
      %2548 = vmatprep.subr.mxu0 0.0
      %2549 = vmatpush1.msra.mxu0 0.0
      %2550 = vmatprep.subr.mxu0 0.0
      %2551 = vmatpush1.msra.mxu0 0.0
      %2552 = vmatprep.subr.mxu0 0.0
      %2553 = vmatpush1.msra.mxu0 0.0
      %2554 = vmatprep.subr.mxu0 0.0
      %2555 = vmatpush1.msra.mxu0 0.0
      %2556 = vmatprep.subr.mxu0 0.0
      %2557 = vmatpush1.msra.mxu0 0.0
      %2558 = vmatprep.subr.mxu0 0.0
      %2559 = vmatpush1.msra.mxu0 0.0
      %2560 = vmatprep.subr.mxu0 0.0
      %2561 = vmatpush1.msra.mxu0 0.0
      %2562 = vmatprep.subr.mxu0 0.0
      %2563 = vmatpush1.msra.mxu0 0.0
      %2564 = vmatprep.subr.mxu0 0.0
      %2565 = vmatpush1.msra.mxu0 0.0
      %2566 = vmatprep.subr.mxu0 0.0
      %2567 = vmatpush1.msra.mxu0 0.0
      %2568 = vmatprep.subr.mxu0 0.0
      %2569 = vmatpush1.msra.mxu0 0.0
      %2570 = vmatprep.subr.mxu0 0.0
      %2571 = vmatpush1.msra.mxu0 0.0
      %2572 = vmatprep.subr.mxu0 0.0
      %2573 = vmatpush1.msra.mxu0 0.0
      %2574 = vmatprep.subr.mxu0 0.0
      %2575 = vmatpush1.msra.mxu0 0.0
      %2576 = vmatprep.subr.mxu0 0.0
      %2577 = vmatpush1.msra.mxu0 0.0
      %2578 = vmatprep.subr.mxu0 0.0
      %2579 = vmatpush1.msra.mxu0 0.0
      %2580 = vmatprep.subr.mxu0 0.0
      %2581 = vmatpush1.msra.mxu0 0.0
      %2582 = vmatprep.subr.mxu0 0.0
      %2583 = vmatpush1.msra.mxu0 0.0
      %2584 = vmatprep.subr.mxu0 0.0
      %2585 = vmatpush1.msra.mxu0 0.0
      %2586 = vmatprep.subr.mxu0 0.0
      %2587 = vmatpush1.msra.mxu0 0.0
      %2588 = vmatprep.subr.mxu0 0.0
      %2589 = vmatpush1.msra.mxu0 0.0
      %2590 = vmatprep.mubr.f32.mxu0 0.0
      %2591 = vmatmul.mubr.f32.gmra.mrb[0].mxu0 %v2497
      %v2592 = vpop.f32.mrb[0].mxu0
      %v2593 = vadd.f32 0.0, %v2592
      %v2594 = vpop.f32.mrb[0].mxu0
      %2595 = vmatprep.mubr.f32.mxu0 0.0
      %2596 = vmatmul.mubr.f32.gmra.mrb[0].mxu0 %v2500
      %v2597 = vpop.f32.mrb[0].mxu0
      %v2598 = vadd.f32 0.0, %v2597
      %v2599 = vpop.f32.mrb[0].mxu0
      %2600 = vmatprep.mubr.f32.mxu0 0.0
      %2601 = vmatmul.mubr.f32.gmra.mrb[0].mxu0 %v2503
      %v2602 = vpop.f32.mrb[0].mxu0
      %v2603 = vadd.f32 0.0, %v2602
      %v2604 = vpop.f32.mrb[0].mxu0
      %2605 = vmatprep.mubr.f32.mxu0 0.0
      %2606 = vmatmul.mubr.f32.gmra.mrb[0].mxu0 %v2506
      %v2607 = vpop.f32.mrb[0].mxu0
      %v2608 = vadd.f32 0.0, %v2607
      %v2609 = vpop.f32.mrb[0].mxu0
      %2610 = vmatprep.mubr.f32.mxu0 0.0
      %2611 = vmatmul.mubr.f32.gmra.mrb[0].mxu0 %v2509
      %v2612 = vpop.f32.mrb[0].mxu0
      %v2613 = vadd.f32 0.0, %v2612
      %v2614 = vpop.f32.mrb[0].mxu0
      %2615 = vmatprep.mubr.f32.mxu0 0.0
      %2616 = vmatmul.mubr.f32.gmra.mrb[0].mxu0 %v2512
      %v2617 = vpop.f32.mrb[0].mxu0
      %v2618 = vadd.f32 0.0, %v2617
      %v2619 = vpop.f32.mrb[0].mxu0
      %2620 = vmatprep.mubr.f32.mxu0 0.0
      %2621 = vmatmul.mubr.f32.gmra.mrb[0].mxu0 %v2515
      %v2622 = vpop.f32.mrb[0].mxu0
      %v2623 = vadd.f32 0.0, %v2622
      %v2624 = vpop.f32.mrb[0].mxu0
      %2625 = vmatprep.mubr.f32.mxu0 0.0
      %2626 = vmatmul.mubr.f32.gmra.mrb[0].mxu0 %v2518
      %v2627 = vpop.f32.mrb[0].mxu0
      %v2628 = vadd.f32 0.0, %v2627
      %v2629 = vpop.f32.mrb[0].mxu0
      %2630 = vmatprep.mubr.f32.mxu0 0.0
      %2631 = vmatmul.mubr.f32.gmra.mrb[0].mxu0 %v2521
      %v2632 = vpop.f32.mrb[0].mxu0
      %v2633 = vadd.f32 0.0, %v2632
      %v2634 = vpop.f32.mrb[0].mxu0
      %2635 = vdwg.mxu0
      %v2636 = vadd.f32 %v2458, %v2593
      %v2637 = vadd.f32 %v2459, %v2598
      %v2638 = vadd.f32 %v2460, %v2603
      %v2639 = vadd.f32 %v2461, %v2608
      %v2640 = vadd.f32 %v2462, %v2613
      %v2641 = vadd.f32 %v2463, %v2618
      %v2642 = vadd.f32 %v2464, %v2623
      %v2643 = vadd.f32 %v2465, %v2628
      %v2644 = vadd.f32 %v2466, %v2633
      %s2645 = scalar_lea.vmem %s165, 14
      %v2646 = vld [vmem:[%s2645] ss:$3 sm:$0xff]
      %s2647 = scalar_lea.vmem %s165, 38
      %v2648 = vld [vmem:[%s2647] ss:$3 sm:$0xff]
      %s2649 = scalar_lea.vmem %s165, 62
      %v2650 = vld [vmem:[%s2649] ss:$3 sm:$0xff]
      %s2651 = scalar_lea.vmem %s165, 86
      %v2652 = vld [vmem:[%s2651] ss:$3 sm:$0xff]
      %s2653 = scalar_lea.vmem %s165, 110
      %v2654 = vld [vmem:[%s2653] ss:$3 sm:$0xff]
      %s2655 = scalar_lea.vmem %s165, 134
      %v2656 = vld [vmem:[%s2655] ss:$3 sm:$0xff]
      %s2657 = scalar_lea.vmem %s165, 158
      %v2658 = vld [vmem:[%s2657] ss:$3 sm:$0xff]
      %s2659 = scalar_lea.vmem %s165, 182
      %v2660 = vld [vmem:[%s2659] ss:$3 sm:$0xff]
      %s2661 = scalar_lea.vmem %s165, 206
      %v2662 = vld [vmem:[%s2661] ss:$3 sm:$0x1]
      %s2663 = scalar_lea.vmem %s1, 1120
      %v2664 = vld [vmem:[%s2663] sm:$0xff]
      %v2665 = vld [vmem:[%s2663 + $0x8] sm:$0xff]
      %v2666 = vld [vmem:[%s2663 + $0x10] sm:$0xff]
      %v2667 = vld [vmem:[%s2663 + $0x18] sm:$0xff]
      %v2668 = vld [vmem:[%s2663 + $0x20] sm:$0xff]
      %v2669 = vld [vmem:[%s2663 + $0x28] sm:$0xff]
      %v2670 = vld [vmem:[%s2663 + $0x30] sm:$0xff]
      %v2671 = vld [vmem:[%s2663 + $0x38] sm:$0xff]
      %v2672 = vld [vmem:[%s2663 + $0x40] sm:$0xff]
      %v2673 = vld [vmem:[%s2663 + $0x48] sm:$0x1]
      %v2675 = vsel %vm227, %v2646, 0
      %v2678 = vsel %vm227, %v2648, 0
      %v2681 = vsel %vm227, %v2650, 0
      %v2684 = vsel %vm227, %v2652, 0
      %v2687 = vsel %vm227, %v2654, 0
      %v2690 = vsel %vm227, %v2656, 0
      %v2693 = vsel %vm227, %v2658, 0
      %v2696 = vsel %vm227, %v2660, 0
      %v2699 = vsel %vm227, %v2662, 0
      %v2702 = vsel %vm255, %v2673, 0
      %2704 = vmatprep.subr.mxu0 0.0
      %2705 = vmatpush1.msra.mxu0 %v2664
      %2706 = vmatprep.subr.mxu0 0.0
      %2707 = vmatpush1.msra.mxu0 %v2665
      %2708 = vmatprep.subr.mxu0 0.0
      %2709 = vmatpush1.msra.mxu0 %v2666
      %2710 = vmatprep.subr.mxu0 0.0
      %2711 = vmatpush1.msra.mxu0 %v2667
      %2712 = vmatprep.subr.mxu0 0.0
      %2713 = vmatpush1.msra.mxu0 %v2668
      %2714 = vmatprep.subr.mxu0 0.0
      %2715 = vmatpush1.msra.mxu0 %v2669
      %2716 = vmatprep.subr.mxu0 0.0
      %2717 = vmatpush1.msra.mxu0 %v2670
      %2718 = vmatprep.subr.mxu0 0.0
      %2719 = vmatpush1.msra.mxu0 %v2671
      %2720 = vmatprep.subr.mxu0 0.0
      %2721 = vmatpush1.msra.mxu0 %v2672
      %2722 = vmatprep.subr.mxu0 0.0
      %2723 = vmatpush1.msra.mxu0 %v2702
      %2724 = vmatprep.subr.mxu0 0.0
      %2725 = vmatpush1.msra.mxu0 0.0
      %2726 = vmatprep.subr.mxu0 0.0
      %2727 = vmatpush1.msra.mxu0 0.0
      %2728 = vmatprep.subr.mxu0 0.0
      %2729 = vmatpush1.msra.mxu0 0.0
      %2730 = vmatprep.subr.mxu0 0.0
      %2731 = vmatpush1.msra.mxu0 0.0
      %2732 = vmatprep.subr.mxu0 0.0
      %2733 = vmatpush1.msra.mxu0 0.0
      %2734 = vmatprep.subr.mxu0 0.0
      %2735 = vmatpush1.msra.mxu0 0.0
      %2736 = vmatprep.subr.mxu0 0.0
      %2737 = vmatpush1.msra.mxu0 0.0
      %2738 = vmatprep.subr.mxu0 0.0
      %2739 = vmatpush1.msra.mxu0 0.0
      %2740 = vmatprep.subr.mxu0 0.0
      %2741 = vmatpush1.msra.mxu0 0.0
      %2742 = vmatprep.subr.mxu0 0.0
      %2743 = vmatpush1.msra.mxu0 0.0
      %2744 = vmatprep.subr.mxu0 0.0
      %2745 = vmatpush1.msra.mxu0 0.0
      %2746 = vmatprep.subr.mxu0 0.0
      %2747 = vmatpush1.msra.mxu0 0.0
      %2748 = vmatprep.subr.mxu0 0.0
      %2749 = vmatpush1.msra.mxu0 0.0
      %2750 = vmatprep.subr.mxu0 0.0
      %2751 = vmatpush1.msra.mxu0 0.0
      %2752 = vmatprep.subr.mxu0 0.0
      %2753 = vmatpush1.msra.mxu0 0.0
      %2754 = vmatprep.subr.mxu0 0.0
      %2755 = vmatpush1.msra.mxu0 0.0
      %2756 = vmatprep.subr.mxu0 0.0
      %2757 = vmatpush1.msra.mxu0 0.0
      %2758 = vmatprep.subr.mxu0 0.0
      %2759 = vmatpush1.msra.mxu0 0.0
      %2760 = vmatprep.subr.mxu0 0.0
      %2761 = vmatpush1.msra.mxu0 0.0
      %2762 = vmatprep.subr.mxu0 0.0
      %2763 = vmatpush1.msra.mxu0 0.0
      %2764 = vmatprep.subr.mxu0 0.0
      %2765 = vmatpush1.msra.mxu0 0.0
      %2766 = vmatprep.subr.mxu0 0.0
      %2767 = vmatpush1.msra.mxu0 0.0
      %2768 = vmatprep.mubr.f32.mxu0 0.0
      %2769 = vmatmul.mubr.f32.gmra.mrb[0].mxu0 %v2675
      %v2770 = vpop.f32.mrb[0].mxu0
      %v2771 = vadd.f32 0.0, %v2770
      %v2772 = vpop.f32.mrb[0].mxu0
      %2773 = vmatprep.mubr.f32.mxu0 0.0
      %2774 = vmatmul.mubr.f32.gmra.mrb[0].mxu0 %v2678
      %v2775 = vpop.f32.mrb[0].mxu0
      %v2776 = vadd.f32 0.0, %v2775
      %v2777 = vpop.f32.mrb[0].mxu0
      %2778 = vmatprep.mubr.f32.mxu0 0.0
      %2779 = vmatmul.mubr.f32.gmra.mrb[0].mxu0 %v2681
      %v2780 = vpop.f32.mrb[0].mxu0
      %v2781 = vadd.f32 0.0, %v2780
      %v2782 = vpop.f32.mrb[0].mxu0
      %2783 = vmatprep.mubr.f32.mxu0 0.0
      %2784 = vmatmul.mubr.f32.gmra.mrb[0].mxu0 %v2684
      %v2785 = vpop.f32.mrb[0].mxu0
      %v2786 = vadd.f32 0.0, %v2785
      %v2787 = vpop.f32.mrb[0].mxu0
      %2788 = vmatprep.mubr.f32.mxu0 0.0
      %2789 = vmatmul.mubr.f32.gmra.mrb[0].mxu0 %v2687
      %v2790 = vpop.f32.mrb[0].mxu0
      %v2791 = vadd.f32 0.0, %v2790
      %v2792 = vpop.f32.mrb[0].mxu0
      %2793 = vmatprep.mubr.f32.mxu0 0.0
      %2794 = vmatmul.mubr.f32.gmra.mrb[0].mxu0 %v2690
      %v2795 = vpop.f32.mrb[0].mxu0
      %v2796 = vadd.f32 0.0, %v2795
      %v2797 = vpop.f32.mrb[0].mxu0
      %2798 = vmatprep.mubr.f32.mxu0 0.0
      %2799 = vmatmul.mubr.f32.gmra.mrb[0].mxu0 %v2693
      %v2800 = vpop.f32.mrb[0].mxu0
      %v2801 = vadd.f32 0.0, %v2800
      %v2802 = vpop.f32.mrb[0].mxu0
      %2803 = vmatprep.mubr.f32.mxu0 0.0
      %2804 = vmatmul.mubr.f32.gmra.mrb[0].mxu0 %v2696
      %v2805 = vpop.f32.mrb[0].mxu0
      %v2806 = vadd.f32 0.0, %v2805
      %v2807 = vpop.f32.mrb[0].mxu0
      %2808 = vmatprep.mubr.f32.mxu0 0.0
      %2809 = vmatmul.mubr.f32.gmra.mrb[0].mxu0 %v2699
      %v2810 = vpop.f32.mrb[0].mxu0
      %v2811 = vadd.f32 0.0, %v2810
      %v2812 = vpop.f32.mrb[0].mxu0
      %2813 = vdwg.mxu0
      %v2814 = vadd.f32 %v2636, %v2771
      %v2815 = vadd.f32 %v2637, %v2776
      %v2816 = vadd.f32 %v2638, %v2781
      %v2817 = vadd.f32 %v2639, %v2786
      %v2818 = vadd.f32 %v2640, %v2791
      %v2819 = vadd.f32 %v2641, %v2796
      %v2820 = vadd.f32 %v2642, %v2801
      %v2821 = vadd.f32 %v2643, %v2806
      %v2822 = vadd.f32 %v2644, %v2811
      %s2823 = scalar_lea.vmem %s165, 15
      %v2824 = vld [vmem:[%s2823] ss:$3 sm:$0xff]
      %s2825 = scalar_lea.vmem %s165, 39
      %v2826 = vld [vmem:[%s2825] ss:$3 sm:$0xff]
      %s2827 = scalar_lea.vmem %s165, 63
      %v2828 = vld [vmem:[%s2827] ss:$3 sm:$0xff]
      %s2829 = scalar_lea.vmem %s165, 87
      %v2830 = vld [vmem:[%s2829] ss:$3 sm:$0xff]
      %s2831 = scalar_lea.vmem %s165, 111
      %v2832 = vld [vmem:[%s2831] ss:$3 sm:$0xff]
      %s2833 = scalar_lea.vmem %s165, 135
      %v2834 = vld [vmem:[%s2833] ss:$3 sm:$0xff]
      %s2835 = scalar_lea.vmem %s165, 159
      %v2836 = vld [vmem:[%s2835] ss:$3 sm:$0xff]
      %s2837 = scalar_lea.vmem %s165, 183
      %v2838 = vld [vmem:[%s2837] ss:$3 sm:$0xff]
      %s2839 = scalar_lea.vmem %s165, 207
      %v2840 = vld [vmem:[%s2839] ss:$3 sm:$0x1]
      %s2841 = scalar_lea.vmem %s1, 1200
      %v2842 = vld [vmem:[%s2841] sm:$0xff]
      %v2843 = vld [vmem:[%s2841 + $0x8] sm:$0xff]
      %v2844 = vld [vmem:[%s2841 + $0x10] sm:$0xff]
      %v2845 = vld [vmem:[%s2841 + $0x18] sm:$0xff]
      %v2846 = vld [vmem:[%s2841 + $0x20] sm:$0xff]
      %v2847 = vld [vmem:[%s2841 + $0x28] sm:$0xff]
      %v2848 = vld [vmem:[%s2841 + $0x30] sm:$0xff]
      %v2849 = vld [vmem:[%s2841 + $0x38] sm:$0xff]
      %v2850 = vld [vmem:[%s2841 + $0x40] sm:$0xff]
      %v2851 = vld [vmem:[%s2841 + $0x48] sm:$0x1]
      %v2853 = vsel %vm227, %v2824, 0
      %v2856 = vsel %vm227, %v2826, 0
      %v2859 = vsel %vm227, %v2828, 0
      %v2862 = vsel %vm227, %v2830, 0
      %v2865 = vsel %vm227, %v2832, 0
      %v2868 = vsel %vm227, %v2834, 0
      %v2871 = vsel %vm227, %v2836, 0
      %v2874 = vsel %vm227, %v2838, 0
      %v2877 = vsel %vm227, %v2840, 0
      %v2880 = vsel %vm255, %v2851, 0
      %2882 = vmatprep.subr.mxu0 0.0
      %2883 = vmatpush1.msra.mxu0 %v2842
      %2884 = vmatprep.subr.mxu0 0.0
      %2885 = vmatpush1.msra.mxu0 %v2843
      %2886 = vmatprep.subr.mxu0 0.0
      %2887 = vmatpush1.msra.mxu0 %v2844
      %2888 = vmatprep.subr.mxu0 0.0
      %2889 = vmatpush1.msra.mxu0 %v2845
      %2890 = vmatprep.subr.mxu0 0.0
      %2891 = vmatpush1.msra.mxu0 %v2846
      %2892 = vmatprep.subr.mxu0 0.0
      %2893 = vmatpush1.msra.mxu0 %v2847
      %2894 = vmatprep.subr.mxu0 0.0
      %2895 = vmatpush1.msra.mxu0 %v2848
      %2896 = vmatprep.subr.mxu0 0.0
      %2897 = vmatpush1.msra.mxu0 %v2849
      %2898 = vmatprep.subr.mxu0 0.0
      %2899 = vmatpush1.msra.mxu0 %v2850
      %2900 = vmatprep.subr.mxu0 0.0
      %2901 = vmatpush1.msra.mxu0 %v2880
      %2902 = vmatprep.subr.mxu0 0.0
      %2903 = vmatpush1.msra.mxu0 0.0
      %2904 = vmatprep.subr.mxu0 0.0
      %2905 = vmatpush1.msra.mxu0 0.0
      %2906 = vmatprep.subr.mxu0 0.0
      %2907 = vmatpush1.msra.mxu0 0.0
      %2908 = vmatprep.subr.mxu0 0.0
      %2909 = vmatpush1.msra.mxu0 0.0
      %2910 = vmatprep.subr.mxu0 0.0
      %2911 = vmatpush1.msra.mxu0 0.0
      %2912 = vmatprep.subr.mxu0 0.0
      %2913 = vmatpush1.msra.mxu0 0.0
      %2914 = vmatprep.subr.mxu0 0.0
      %2915 = vmatpush1.msra.mxu0 0.0
      %2916 = vmatprep.subr.mxu0 0.0
      %2917 = vmatpush1.msra.mxu0 0.0
      %2918 = vmatprep.subr.mxu0 0.0
      %2919 = vmatpush1.msra.mxu0 0.0
      %2920 = vmatprep.subr.mxu0 0.0
      %2921 = vmatpush1.msra.mxu0 0.0
      %2922 = vmatprep.subr.mxu0 0.0
      %2923 = vmatpush1.msra.mxu0 0.0
      %2924 = vmatprep.subr.mxu0 0.0
      %2925 = vmatpush1.msra.mxu0 0.0
      %2926 = vmatprep.subr.mxu0 0.0
      %2927 = vmatpush1.msra.mxu0 0.0
      %2928 = vmatprep.subr.mxu0 0.0
      %2929 = vmatpush1.msra.mxu0 0.0
      %2930 = vmatprep.subr.mxu0 0.0
      %2931 = vmatpush1.msra.mxu0 0.0
      %2932 = vmatprep.subr.mxu0 0.0
      %2933 = vmatpush1.msra.mxu0 0.0
      %2934 = vmatprep.subr.mxu0 0.0
      %2935 = vmatpush1.msra.mxu0 0.0
      %2936 = vmatprep.subr.mxu0 0.0
      %2937 = vmatpush1.msra.mxu0 0.0
      %2938 = vmatprep.subr.mxu0 0.0
      %2939 = vmatpush1.msra.mxu0 0.0
      %2940 = vmatprep.subr.mxu0 0.0
      %2941 = vmatpush1.msra.mxu0 0.0
      %2942 = vmatprep.subr.mxu0 0.0
      %2943 = vmatpush1.msra.mxu0 0.0
      %2944 = vmatprep.subr.mxu0 0.0
      %2945 = vmatpush1.msra.mxu0 0.0
      %2946 = vmatprep.mubr.f32.mxu0 0.0
      %2947 = vmatmul.mubr.f32.gmra.mrb[0].mxu0 %v2853
      %v2948 = vpop.f32.mrb[0].mxu0
      %v2949 = vadd.f32 0.0, %v2948
      %v2950 = vpop.f32.mrb[0].mxu0
      %2951 = vmatprep.mubr.f32.mxu0 0.0
      %2952 = vmatmul.mubr.f32.gmra.mrb[0].mxu0 %v2856
      %v2953 = vpop.f32.mrb[0].mxu0
      %v2954 = vadd.f32 0.0, %v2953
      %v2955 = vpop.f32.mrb[0].mxu0
      %2956 = vmatprep.mubr.f32.mxu0 0.0
      %2957 = vmatmul.mubr.f32.gmra.mrb[0].mxu0 %v2859
      %v2958 = vpop.f32.mrb[0].mxu0
      %v2959 = vadd.f32 0.0, %v2958
      %v2960 = vpop.f32.mrb[0].mxu0
      %2961 = vmatprep.mubr.f32.mxu0 0.0
      %2962 = vmatmul.mubr.f32.gmra.mrb[0].mxu0 %v2862
      %v2963 = vpop.f32.mrb[0].mxu0
      %v2964 = vadd.f32 0.0, %v2963
      %v2965 = vpop.f32.mrb[0].mxu0
      %2966 = vmatprep.mubr.f32.mxu0 0.0
      %2967 = vmatmul.mubr.f32.gmra.mrb[0].mxu0 %v2865
      %v2968 = vpop.f32.mrb[0].mxu0
      %v2969 = vadd.f32 0.0, %v2968
      %v2970 = vpop.f32.mrb[0].mxu0
      %2971 = vmatprep.mubr.f32.mxu0 0.0
      %2972 = vmatmul.mubr.f32.gmra.mrb[0].mxu0 %v2868
      %v2973 = vpop.f32.mrb[0].mxu0
      %v2974 = vadd.f32 0.0, %v2973
      %v2975 = vpop.f32.mrb[0].mxu0
      %2976 = vmatprep.mubr.f32.mxu0 0.0
      %2977 = vmatmul.mubr.f32.gmra.mrb[0].mxu0 %v2871
      %v2978 = vpop.f32.mrb[0].mxu0
      %v2979 = vadd.f32 0.0, %v2978
      %v2980 = vpop.f32.mrb[0].mxu0
      %2981 = vmatprep.mubr.f32.mxu0 0.0
      %2982 = vmatmul.mubr.f32.gmra.mrb[0].mxu0 %v2874
      %v2983 = vpop.f32.mrb[0].mxu0
      %v2984 = vadd.f32 0.0, %v2983
      %v2985 = vpop.f32.mrb[0].mxu0
      %2986 = vmatprep.mubr.f32.mxu0 0.0
      %2987 = vmatmul.mubr.f32.gmra.mrb[0].mxu0 %v2877
      %v2988 = vpop.f32.mrb[0].mxu0
      %v2989 = vadd.f32 0.0, %v2988
      %v2990 = vpop.f32.mrb[0].mxu0
      %2991 = vdwg.mxu0
      %v2992 = vadd.f32 %v2814, %v2949
      %v2993 = vadd.f32 %v2815, %v2954
      %v2994 = vadd.f32 %v2816, %v2959
      %v2995 = vadd.f32 %v2817, %v2964
      %v2996 = vadd.f32 %v2818, %v2969
      %v2997 = vadd.f32 %v2819, %v2974
      %v2998 = vadd.f32 %v2820, %v2979
      %v2999 = vadd.f32 %v2821, %v2984
      %v3000 = vadd.f32 %v2822, %v2989
      %s3001 = scalar_lea.vmem %s165, 16
      %v3002 = vld [vmem:[%s3001] ss:$3 sm:$0xff]
      %s3003 = scalar_lea.vmem %s165, 40
      %v3004 = vld [vmem:[%s3003] ss:$3 sm:$0xff]
      %s3005 = scalar_lea.vmem %s165, 64
      %v3006 = vld [vmem:[%s3005] ss:$3 sm:$0xff]
      %s3007 = scalar_lea.vmem %s165, 88
      %v3008 = vld [vmem:[%s3007] ss:$3 sm:$0xff]
      %s3009 = scalar_lea.vmem %s165, 112
      %v3010 = vld [vmem:[%s3009] ss:$3 sm:$0xff]
      %s3011 = scalar_lea.vmem %s165, 136
      %v3012 = vld [vmem:[%s3011] ss:$3 sm:$0xff]
      %s3013 = scalar_lea.vmem %s165, 160
      %v3014 = vld [vmem:[%s3013] ss:$3 sm:$0xff]
      %s3015 = scalar_lea.vmem %s165, 184
      %v3016 = vld [vmem:[%s3015] ss:$3 sm:$0xff]
      %s3017 = scalar_lea.vmem %s165, 208
      %v3018 = vld [vmem:[%s3017] ss:$3 sm:$0x1]
      %s3019 = scalar_lea.vmem %s1, 1280
      %v3020 = vld [vmem:[%s3019] sm:$0xff]
      %v3021 = vld [vmem:[%s3019 + $0x8] sm:$0xff]
      %v3022 = vld [vmem:[%s3019 + $0x10] sm:$0xff]
      %v3023 = vld [vmem:[%s3019 + $0x18] sm:$0xff]
      %v3024 = vld [vmem:[%s3019 + $0x20] sm:$0xff]
      %v3025 = vld [vmem:[%s3019 + $0x28] sm:$0xff]
      %v3026 = vld [vmem:[%s3019 + $0x30] sm:$0xff]
      %v3027 = vld [vmem:[%s3019 + $0x38] sm:$0xff]
      %v3028 = vld [vmem:[%s3019 + $0x40] sm:$0xff]
      %v3029 = vld [vmem:[%s3019 + $0x48] sm:$0x1]
      %v3031 = vsel %vm227, %v3002, 0
      %v3034 = vsel %vm227, %v3004, 0
      %v3037 = vsel %vm227, %v3006, 0
      %v3040 = vsel %vm227, %v3008, 0
      %v3043 = vsel %vm227, %v3010, 0
      %v3046 = vsel %vm227, %v3012, 0
      %v3049 = vsel %vm227, %v3014, 0
      %v3052 = vsel %vm227, %v3016, 0
      %v3055 = vsel %vm227, %v3018, 0
      %v3058 = vsel %vm255, %v3029, 0
      %3060 = vmatprep.subr.mxu0 0.0
      %3061 = vmatpush1.msra.mxu0 %v3020
      %3062 = vmatprep.subr.mxu0 0.0
      %3063 = vmatpush1.msra.mxu0 %v3021
      %3064 = vmatprep.subr.mxu0 0.0
      %3065 = vmatpush1.msra.mxu0 %v3022
      %3066 = vmatprep.subr.mxu0 0.0
      %3067 = vmatpush1.msra.mxu0 %v3023
      %3068 = vmatprep.subr.mxu0 0.0
      %3069 = vmatpush1.msra.mxu0 %v3024
      %3070 = vmatprep.subr.mxu0 0.0
      %3071 = vmatpush1.msra.mxu0 %v3025
      %3072 = vmatprep.subr.mxu0 0.0
      %3073 = vmatpush1.msra.mxu0 %v3026
      %3074 = vmatprep.subr.mxu0 0.0
      %3075 = vmatpush1.msra.mxu0 %v3027
      %3076 = vmatprep.subr.mxu0 0.0
      %3077 = vmatpush1.msra.mxu0 %v3028
      %3078 = vmatprep.subr.mxu0 0.0
      %3079 = vmatpush1.msra.mxu0 %v3058
      %3080 = vmatprep.subr.mxu0 0.0
      %3081 = vmatpush1.msra.mxu0 0.0
      %3082 = vmatprep.subr.mxu0 0.0
      %3083 = vmatpush1.msra.mxu0 0.0
      %3084 = vmatprep.subr.mxu0 0.0
      %3085 = vmatpush1.msra.mxu0 0.0
      %3086 = vmatprep.subr.mxu0 0.0
      %3087 = vmatpush1.msra.mxu0 0.0
      %3088 = vmatprep.subr.mxu0 0.0
      %3089 = vmatpush1.msra.mxu0 0.0
      %3090 = vmatprep.subr.mxu0 0.0
      %3091 = vmatpush1.msra.mxu0 0.0
      %3092 = vmatprep.subr.mxu0 0.0
      %3093 = vmatpush1.msra.mxu0 0.0
      %3094 = vmatprep.subr.mxu0 0.0
      %3095 = vmatpush1.msra.mxu0 0.0
      %3096 = vmatprep.subr.mxu0 0.0
      %3097 = vmatpush1.msra.mxu0 0.0
      %3098 = vmatprep.subr.mxu0 0.0
      %3099 = vmatpush1.msra.mxu0 0.0
      %3100 = vmatprep.subr.mxu0 0.0
      %3101 = vmatpush1.msra.mxu0 0.0
      %3102 = vmatprep.subr.mxu0 0.0
      %3103 = vmatpush1.msra.mxu0 0.0
      %3104 = vmatprep.subr.mxu0 0.0
      %3105 = vmatpush1.msra.mxu0 0.0
      %3106 = vmatprep.subr.mxu0 0.0
      %3107 = vmatpush1.msra.mxu0 0.0
      %3108 = vmatprep.subr.mxu0 0.0
      %3109 = vmatpush1.msra.mxu0 0.0
      %3110 = vmatprep.subr.mxu0 0.0
      %3111 = vmatpush1.msra.mxu0 0.0
      %3112 = vmatprep.subr.mxu0 0.0
      %3113 = vmatpush1.msra.mxu0 0.0
      %3114 = vmatprep.subr.mxu0 0.0
      %3115 = vmatpush1.msra.mxu0 0.0
      %3116 = vmatprep.subr.mxu0 0.0
      %3117 = vmatpush1.msra.mxu0 0.0
      %3118 = vmatprep.subr.mxu0 0.0
      %3119 = vmatpush1.msra.mxu0 0.0
      %3120 = vmatprep.subr.mxu0 0.0
      %3121 = vmatpush1.msra.mxu0 0.0
      %3122 = vmatprep.subr.mxu0 0.0
      %3123 = vmatpush1.msra.mxu0 0.0
      %3124 = vmatprep.mubr.f32.mxu0 0.0
      %3125 = vmatmul.mubr.f32.gmra.mrb[0].mxu0 %v3031
      %v3126 = vpop.f32.mrb[0].mxu0
      %v3127 = vadd.f32 0.0, %v3126
      %v3128 = vpop.f32.mrb[0].mxu0
      %3129 = vmatprep.mubr.f32.mxu0 0.0
      %3130 = vmatmul.mubr.f32.gmra.mrb[0].mxu0 %v3034
      %v3131 = vpop.f32.mrb[0].mxu0
      %v3132 = vadd.f32 0.0, %v3131
      %v3133 = vpop.f32.mrb[0].mxu0
      %3134 = vmatprep.mubr.f32.mxu0 0.0
      %3135 = vmatmul.mubr.f32.gmra.mrb[0].mxu0 %v3037
      %v3136 = vpop.f32.mrb[0].mxu0
      %v3137 = vadd.f32 0.0, %v3136
      %v3138 = vpop.f32.mrb[0].mxu0
      %3139 = vmatprep.mubr.f32.mxu0 0.0
      %3140 = vmatmul.mubr.f32.gmra.mrb[0].mxu0 %v3040
      %v3141 = vpop.f32.mrb[0].mxu0
      %v3142 = vadd.f32 0.0, %v3141
      %v3143 = vpop.f32.mrb[0].mxu0
      %3144 = vmatprep.mubr.f32.mxu0 0.0
      %3145 = vmatmul.mubr.f32.gmra.mrb[0].mxu0 %v3043
      %v3146 = vpop.f32.mrb[0].mxu0
      %v3147 = vadd.f32 0.0, %v3146
      %v3148 = vpop.f32.mrb[0].mxu0
      %3149 = vmatprep.mubr.f32.mxu0 0.0
      %3150 = vmatmul.mubr.f32.gmra.mrb[0].mxu0 %v3046
      %v3151 = vpop.f32.mrb[0].mxu0
      %v3152 = vadd.f32 0.0, %v3151
      %v3153 = vpop.f32.mrb[0].mxu0
      %3154 = vmatprep.mubr.f32.mxu0 0.0
      %3155 = vmatmul.mubr.f32.gmra.mrb[0].mxu0 %v3049
      %v3156 = vpop.f32.mrb[0].mxu0
      %v3157 = vadd.f32 0.0, %v3156
      %v3158 = vpop.f32.mrb[0].mxu0
      %3159 = vmatprep.mubr.f32.mxu0 0.0
      %3160 = vmatmul.mubr.f32.gmra.mrb[0].mxu0 %v3052
      %v3161 = vpop.f32.mrb[0].mxu0
      %v3162 = vadd.f32 0.0, %v3161
      %v3163 = vpop.f32.mrb[0].mxu0
      %3164 = vmatprep.mubr.f32.mxu0 0.0
      %3165 = vmatmul.mubr.f32.gmra.mrb[0].mxu0 %v3055
      %v3166 = vpop.f32.mrb[0].mxu0
      %v3167 = vadd.f32 0.0, %v3166
      %v3168 = vpop.f32.mrb[0].mxu0
      %3169 = vdwg.mxu0
      %v3170 = vadd.f32 %v2992, %v3127
      %v3171 = vadd.f32 %v2993, %v3132
      %v3172 = vadd.f32 %v2994, %v3137
      %v3173 = vadd.f32 %v2995, %v3142
      %v3174 = vadd.f32 %v2996, %v3147
      %v3175 = vadd.f32 %v2997, %v3152
      %v3176 = vadd.f32 %v2998, %v3157
      %v3177 = vadd.f32 %v2999, %v3162
      %v3178 = vadd.f32 %v3000, %v3167
      %s3179 = scalar_lea.vmem %s165, 17
      %v3180 = vld [vmem:[%s3179] ss:$3 sm:$0xff]
      %s3181 = scalar_lea.vmem %s165, 41
      %v3182 = vld [vmem:[%s3181] ss:$3 sm:$0xff]
      %s3183 = scalar_lea.vmem %s165, 65
      %v3184 = vld [vmem:[%s3183] ss:$3 sm:$0xff]
      %s3185 = scalar_lea.vmem %s165, 89
      %v3186 = vld [vmem:[%s3185] ss:$3 sm:$0xff]
      %s3187 = scalar_lea.vmem %s165, 113
      %v3188 = vld [vmem:[%s3187] ss:$3 sm:$0xff]
      %s3189 = scalar_lea.vmem %s165, 137
      %v3190 = vld [vmem:[%s3189] ss:$3 sm:$0xff]
      %s3191 = scalar_lea.vmem %s165, 161
      %v3192 = vld [vmem:[%s3191] ss:$3 sm:$0xff]
      %s3193 = scalar_lea.vmem %s165, 185
      %v3194 = vld [vmem:[%s3193] ss:$3 sm:$0xff]
      %s3195 = scalar_lea.vmem %s165, 209
      %v3196 = vld [vmem:[%s3195] ss:$3 sm:$0x1]
      %s3197 = scalar_lea.vmem %s1, 1360
      %v3198 = vld [vmem:[%s3197] sm:$0xff]
      %v3199 = vld [vmem:[%s3197 + $0x8] sm:$0xff]
      %v3200 = vld [vmem:[%s3197 + $0x10] sm:$0xff]
      %v3201 = vld [vmem:[%s3197 + $0x18] sm:$0xff]
      %v3202 = vld [vmem:[%s3197 + $0x20] sm:$0xff]
      %v3203 = vld [vmem:[%s3197 + $0x28] sm:$0xff]
      %v3204 = vld [vmem:[%s3197 + $0x30] sm:$0xff]
      %v3205 = vld [vmem:[%s3197 + $0x38] sm:$0xff]
      %v3206 = vld [vmem:[%s3197 + $0x40] sm:$0xff]
      %v3207 = vld [vmem:[%s3197 + $0x48] sm:$0x1]
      %v3209 = vsel %vm227, %v3180, 0
      %v3212 = vsel %vm227, %v3182, 0
      %v3215 = vsel %vm227, %v3184, 0
      %v3218 = vsel %vm227, %v3186, 0
      %v3221 = vsel %vm227, %v3188, 0
      %v3224 = vsel %vm227, %v3190, 0
      %v3227 = vsel %vm227, %v3192, 0
      %v3230 = vsel %vm227, %v3194, 0
      %v3233 = vsel %vm227, %v3196, 0
      %v3236 = vsel %vm255, %v3207, 0
      %3238 = vmatprep.subr.mxu0 0.0
      %3239 = vmatpush1.msra.mxu0 %v3198
      %3240 = vmatprep.subr.mxu0 0.0
      %3241 = vmatpush1.msra.mxu0 %v3199
      %3242 = vmatprep.subr.mxu0 0.0
      %3243 = vmatpush1.msra.mxu0 %v3200
      %3244 = vmatprep.subr.mxu0 0.0
      %3245 = vmatpush1.msra.mxu0 %v3201
      %3246 = vmatprep.subr.mxu0 0.0
      %3247 = vmatpush1.msra.mxu0 %v3202
      %3248 = vmatprep.subr.mxu0 0.0
      %3249 = vmatpush1.msra.mxu0 %v3203
      %3250 = vmatprep.subr.mxu0 0.0
      %3251 = vmatpush1.msra.mxu0 %v3204
      %3252 = vmatprep.subr.mxu0 0.0
      %3253 = vmatpush1.msra.mxu0 %v3205
      %3254 = vmatprep.subr.mxu0 0.0
      %3255 = vmatpush1.msra.mxu0 %v3206
      %3256 = vmatprep.subr.mxu0 0.0
      %3257 = vmatpush1.msra.mxu0 %v3236
      %3258 = vmatprep.subr.mxu0 0.0
      %3259 = vmatpush1.msra.mxu0 0.0
      %3260 = vmatprep.subr.mxu0 0.0
      %3261 = vmatpush1.msra.mxu0 0.0
      %3262 = vmatprep.subr.mxu0 0.0
      %3263 = vmatpush1.msra.mxu0 0.0
      %3264 = vmatprep.subr.mxu0 0.0
      %3265 = vmatpush1.msra.mxu0 0.0
      %3266 = vmatprep.subr.mxu0 0.0
      %3267 = vmatpush1.msra.mxu0 0.0
      %3268 = vmatprep.subr.mxu0 0.0
      %3269 = vmatpush1.msra.mxu0 0.0
      %3270 = vmatprep.subr.mxu0 0.0
      %3271 = vmatpush1.msra.mxu0 0.0
      %3272 = vmatprep.subr.mxu0 0.0
      %3273 = vmatpush1.msra.mxu0 0.0
      %3274 = vmatprep.subr.mxu0 0.0
      %3275 = vmatpush1.msra.mxu0 0.0
      %3276 = vmatprep.subr.mxu0 0.0
      %3277 = vmatpush1.msra.mxu0 0.0
      %3278 = vmatprep.subr.mxu0 0.0
      %3279 = vmatpush1.msra.mxu0 0.0
      %3280 = vmatprep.subr.mxu0 0.0
      %3281 = vmatpush1.msra.mxu0 0.0
      %3282 = vmatprep.subr.mxu0 0.0
      %3283 = vmatpush1.msra.mxu0 0.0
      %3284 = vmatprep.subr.mxu0 0.0
      %3285 = vmatpush1.msra.mxu0 0.0
      %3286 = vmatprep.subr.mxu0 0.0
      %3287 = vmatpush1.msra.mxu0 0.0
      %3288 = vmatprep.subr.mxu0 0.0
      %3289 = vmatpush1.msra.mxu0 0.0
      %3290 = vmatprep.subr.mxu0 0.0
      %3291 = vmatpush1.msra.mxu0 0.0
      %3292 = vmatprep.subr.mxu0 0.0
      %3293 = vmatpush1.msra.mxu0 0.0
      %3294 = vmatprep.subr.mxu0 0.0
      %3295 = vmatpush1.msra.mxu0 0.0
      %3296 = vmatprep.subr.mxu0 0.0
      %3297 = vmatpush1.msra.mxu0 0.0
      %3298 = vmatprep.subr.mxu0 0.0
      %3299 = vmatpush1.msra.mxu0 0.0
      %3300 = vmatprep.subr.mxu0 0.0
      %3301 = vmatpush1.msra.mxu0 0.0
      %3302 = vmatprep.mubr.f32.mxu0 0.0
      %3303 = vmatmul.mubr.f32.gmra.mrb[0].mxu0 %v3209
      %v3304 = vpop.f32.mrb[0].mxu0
      %v3305 = vadd.f32 0.0, %v3304
      %v3306 = vpop.f32.mrb[0].mxu0
      %3307 = vmatprep.mubr.f32.mxu0 0.0
      %3308 = vmatmul.mubr.f32.gmra.mrb[0].mxu0 %v3212
      %v3309 = vpop.f32.mrb[0].mxu0
      %v3310 = vadd.f32 0.0, %v3309
      %v3311 = vpop.f32.mrb[0].mxu0
      %3312 = vmatprep.mubr.f32.mxu0 0.0
      %3313 = vmatmul.mubr.f32.gmra.mrb[0].mxu0 %v3215
      %v3314 = vpop.f32.mrb[0].mxu0
      %v3315 = vadd.f32 0.0, %v3314
      %v3316 = vpop.f32.mrb[0].mxu0
      %3317 = vmatprep.mubr.f32.mxu0 0.0
      %3318 = vmatmul.mubr.f32.gmra.mrb[0].mxu0 %v3218
      %v3319 = vpop.f32.mrb[0].mxu0
      %v3320 = vadd.f32 0.0, %v3319
      %v3321 = vpop.f32.mrb[0].mxu0
      %3322 = vmatprep.mubr.f32.mxu0 0.0
      %3323 = vmatmul.mubr.f32.gmra.mrb[0].mxu0 %v3221
      %v3324 = vpop.f32.mrb[0].mxu0
      %v3325 = vadd.f32 0.0, %v3324
      %v3326 = vpop.f32.mrb[0].mxu0
      %3327 = vmatprep.mubr.f32.mxu0 0.0
      %3328 = vmatmul.mubr.f32.gmra.mrb[0].mxu0 %v3224
      %v3329 = vpop.f32.mrb[0].mxu0
      %v3330 = vadd.f32 0.0, %v3329
      %v3331 = vpop.f32.mrb[0].mxu0
      %3332 = vmatprep.mubr.f32.mxu0 0.0
      %3333 = vmatmul.mubr.f32.gmra.mrb[0].mxu0 %v3227
      %v3334 = vpop.f32.mrb[0].mxu0
      %v3335 = vadd.f32 0.0, %v3334
      %v3336 = vpop.f32.mrb[0].mxu0
      %3337 = vmatprep.mubr.f32.mxu0 0.0
      %3338 = vmatmul.mubr.f32.gmra.mrb[0].mxu0 %v3230
      %v3339 = vpop.f32.mrb[0].mxu0
      %v3340 = vadd.f32 0.0, %v3339
      %v3341 = vpop.f32.mrb[0].mxu0
      %3342 = vmatprep.mubr.f32.mxu0 0.0
      %3343 = vmatmul.mubr.f32.gmra.mrb[0].mxu0 %v3233
      %v3344 = vpop.f32.mrb[0].mxu0
      %v3345 = vadd.f32 0.0, %v3344
      %v3346 = vpop.f32.mrb[0].mxu0
      %3347 = vdwg.mxu0
      %v3348 = vadd.f32 %v3170, %v3305
      %v3349 = vadd.f32 %v3171, %v3310
      %v3350 = vadd.f32 %v3172, %v3315
      %v3351 = vadd.f32 %v3173, %v3320
      %v3352 = vadd.f32 %v3174, %v3325
      %v3353 = vadd.f32 %v3175, %v3330
      %v3354 = vadd.f32 %v3176, %v3335
      %v3355 = vadd.f32 %v3177, %v3340
      %v3356 = vadd.f32 %v3178, %v3345
      %s3357 = scalar_lea.vmem %s165, 18
      %v3358 = vld [vmem:[%s3357] ss:$3 sm:$0xff]
      %s3359 = scalar_lea.vmem %s165, 42
      %v3360 = vld [vmem:[%s3359] ss:$3 sm:$0xff]
      %s3361 = scalar_lea.vmem %s165, 66
      %v3362 = vld [vmem:[%s3361] ss:$3 sm:$0xff]
      %s3363 = scalar_lea.vmem %s165, 90
      %v3364 = vld [vmem:[%s3363] ss:$3 sm:$0xff]
      %s3365 = scalar_lea.vmem %s165, 114
      %v3366 = vld [vmem:[%s3365] ss:$3 sm:$0xff]
      %s3367 = scalar_lea.vmem %s165, 138
      %v3368 = vld [vmem:[%s3367] ss:$3 sm:$0xff]
      %s3369 = scalar_lea.vmem %s165, 162
      %v3370 = vld [vmem:[%s3369] ss:$3 sm:$0xff]
      %s3371 = scalar_lea.vmem %s165, 186
      %v3372 = vld [vmem:[%s3371] ss:$3 sm:$0xff]
      %s3373 = scalar_lea.vmem %s165, 210
      %v3374 = vld [vmem:[%s3373] ss:$3 sm:$0x1]
      %s3375 = scalar_lea.vmem %s1, 1440
      %v3376 = vld [vmem:[%s3375] sm:$0xff]
      %v3377 = vld [vmem:[%s3375 + $0x8] sm:$0xff]
      %v3378 = vld [vmem:[%s3375 + $0x10] sm:$0xff]
      %v3379 = vld [vmem:[%s3375 + $0x18] sm:$0xff]
      %v3380 = vld [vmem:[%s3375 + $0x20] sm:$0xff]
      %v3381 = vld [vmem:[%s3375 + $0x28] sm:$0xff]
      %v3382 = vld [vmem:[%s3375 + $0x30] sm:$0xff]
      %v3383 = vld [vmem:[%s3375 + $0x38] sm:$0xff]
      %v3384 = vld [vmem:[%s3375 + $0x40] sm:$0xff]
      %v3385 = vld [vmem:[%s3375 + $0x48] sm:$0x1]
      %v3387 = vsel %vm227, %v3358, 0
      %v3390 = vsel %vm227, %v3360, 0
      %v3393 = vsel %vm227, %v3362, 0
      %v3396 = vsel %vm227, %v3364, 0
      %v3399 = vsel %vm227, %v3366, 0
      %v3402 = vsel %vm227, %v3368, 0
      %v3405 = vsel %vm227, %v3370, 0
      %v3408 = vsel %vm227, %v3372, 0
      %v3411 = vsel %vm227, %v3374, 0
      %v3414 = vsel %vm255, %v3385, 0
      %3416 = vmatprep.subr.mxu0 0.0
      %3417 = vmatpush1.msra.mxu0 %v3376
      %3418 = vmatprep.subr.mxu0 0.0
      %3419 = vmatpush1.msra.mxu0 %v3377
      %3420 = vmatprep.subr.mxu0 0.0
      %3421 = vmatpush1.msra.mxu0 %v3378
      %3422 = vmatprep.subr.mxu0 0.0
      %3423 = vmatpush1.msra.mxu0 %v3379
      %3424 = vmatprep.subr.mxu0 0.0
      %3425 = vmatpush1.msra.mxu0 %v3380
      %3426 = vmatprep.subr.mxu0 0.0
      %3427 = vmatpush1.msra.mxu0 %v3381
      %3428 = vmatprep.subr.mxu0 0.0
      %3429 = vmatpush1.msra.mxu0 %v3382
      %3430 = vmatprep.subr.mxu0 0.0
      %3431 = vmatpush1.msra.mxu0 %v3383
      %3432 = vmatprep.subr.mxu0 0.0
      %3433 = vmatpush1.msra.mxu0 %v3384
      %3434 = vmatprep.subr.mxu0 0.0
      %3435 = vmatpush1.msra.mxu0 %v3414
      %3436 = vmatprep.subr.mxu0 0.0
      %3437 = vmatpush1.msra.mxu0 0.0
      %3438 = vmatprep.subr.mxu0 0.0
      %3439 = vmatpush1.msra.mxu0 0.0
      %3440 = vmatprep.subr.mxu0 0.0
      %3441 = vmatpush1.msra.mxu0 0.0
      %3442 = vmatprep.subr.mxu0 0.0
      %3443 = vmatpush1.msra.mxu0 0.0
      %3444 = vmatprep.subr.mxu0 0.0
      %3445 = vmatpush1.msra.mxu0 0.0
      %3446 = vmatprep.subr.mxu0 0.0
      %3447 = vmatpush1.msra.mxu0 0.0
      %3448 = vmatprep.subr.mxu0 0.0
      %3449 = vmatpush1.msra.mxu0 0.0
      %3450 = vmatprep.subr.mxu0 0.0
      %3451 = vmatpush1.msra.mxu0 0.0
      %3452 = vmatprep.subr.mxu0 0.0
      %3453 = vmatpush1.msra.mxu0 0.0
      %3454 = vmatprep.subr.mxu0 0.0
      %3455 = vmatpush1.msra.mxu0 0.0
      %3456 = vmatprep.subr.mxu0 0.0
      %3457 = vmatpush1.msra.mxu0 0.0
      %3458 = vmatprep.subr.mxu0 0.0
      %3459 = vmatpush1.msra.mxu0 0.0
      %3460 = vmatprep.subr.mxu0 0.0
      %3461 = vmatpush1.msra.mxu0 0.0
      %3462 = vmatprep.subr.mxu0 0.0
      %3463 = vmatpush1.msra.mxu0 0.0
      %3464 = vmatprep.subr.mxu0 0.0
      %3465 = vmatpush1.msra.mxu0 0.0
      %3466 = vmatprep.subr.mxu0 0.0
      %3467 = vmatpush1.msra.mxu0 0.0
      %3468 = vmatprep.subr.mxu0 0.0
      %3469 = vmatpush1.msra.mxu0 0.0
      %3470 = vmatprep.subr.mxu0 0.0
      %3471 = vmatpush1.msra.mxu0 0.0
      %3472 = vmatprep.subr.mxu0 0.0
      %3473 = vmatpush1.msra.mxu0 0.0
      %3474 = vmatprep.subr.mxu0 0.0
      %3475 = vmatpush1.msra.mxu0 0.0
      %3476 = vmatprep.subr.mxu0 0.0
      %3477 = vmatpush1.msra.mxu0 0.0
      %3478 = vmatprep.subr.mxu0 0.0
      %3479 = vmatpush1.msra.mxu0 0.0
      %3480 = vmatprep.mubr.f32.mxu0 0.0
      %3481 = vmatmul.mubr.f32.gmra.mrb[0].mxu0 %v3387
      %v3482 = vpop.f32.mrb[0].mxu0
      %v3483 = vadd.f32 0.0, %v3482
      %v3484 = vpop.f32.mrb[0].mxu0
      %3485 = vmatprep.mubr.f32.mxu0 0.0
      %3486 = vmatmul.mubr.f32.gmra.mrb[0].mxu0 %v3390
      %v3487 = vpop.f32.mrb[0].mxu0
      %v3488 = vadd.f32 0.0, %v3487
      %v3489 = vpop.f32.mrb[0].mxu0
      %3490 = vmatprep.mubr.f32.mxu0 0.0
      %3491 = vmatmul.mubr.f32.gmra.mrb[0].mxu0 %v3393
      %v3492 = vpop.f32.mrb[0].mxu0
      %v3493 = vadd.f32 0.0, %v3492
      %v3494 = vpop.f32.mrb[0].mxu0
      %3495 = vmatprep.mubr.f32.mxu0 0.0
      %3496 = vmatmul.mubr.f32.gmra.mrb[0].mxu0 %v3396
      %v3497 = vpop.f32.mrb[0].mxu0
      %v3498 = vadd.f32 0.0, %v3497
      %v3499 = vpop.f32.mrb[0].mxu0
      %3500 = vmatprep.mubr.f32.mxu0 0.0
      %3501 = vmatmul.mubr.f32.gmra.mrb[0].mxu0 %v3399
      %v3502 = vpop.f32.mrb[0].mxu0
      %v3503 = vadd.f32 0.0, %v3502
      %v3504 = vpop.f32.mrb[0].mxu0
      %3505 = vmatprep.mubr.f32.mxu0 0.0
      %3506 = vmatmul.mubr.f32.gmra.mrb[0].mxu0 %v3402
      %v3507 = vpop.f32.mrb[0].mxu0
      %v3508 = vadd.f32 0.0, %v3507
      %v3509 = vpop.f32.mrb[0].mxu0
      %3510 = vmatprep.mubr.f32.mxu0 0.0
      %3511 = vmatmul.mubr.f32.gmra.mrb[0].mxu0 %v3405
      %v3512 = vpop.f32.mrb[0].mxu0
      %v3513 = vadd.f32 0.0, %v3512
      %v3514 = vpop.f32.mrb[0].mxu0
      %3515 = vmatprep.mubr.f32.mxu0 0.0
      %3516 = vmatmul.mubr.f32.gmra.mrb[0].mxu0 %v3408
      %v3517 = vpop.f32.mrb[0].mxu0
      %v3518 = vadd.f32 0.0, %v3517
      %v3519 = vpop.f32.mrb[0].mxu0
      %3520 = vmatprep.mubr.f32.mxu0 0.0
      %3521 = vmatmul.mubr.f32.gmra.mrb[0].mxu0 %v3411
      %v3522 = vpop.f32.mrb[0].mxu0
      %v3523 = vadd.f32 0.0, %v3522
      %v3524 = vpop.f32.mrb[0].mxu0
      %3525 = vdwg.mxu0
      %v3526 = vadd.f32 %v3348, %v3483
      %v3527 = vadd.f32 %v3349, %v3488
      %v3528 = vadd.f32 %v3350, %v3493
      %v3529 = vadd.f32 %v3351, %v3498
      %v3530 = vadd.f32 %v3352, %v3503
      %v3531 = vadd.f32 %v3353, %v3508
      %v3532 = vadd.f32 %v3354, %v3513
      %v3533 = vadd.f32 %v3355, %v3518
      %v3534 = vadd.f32 %v3356, %v3523
      %s3535 = scalar_lea.vmem %s165, 19
      %v3536 = vld [vmem:[%s3535] ss:$3 sm:$0xff]
      %s3537 = scalar_lea.vmem %s165, 43
      %v3538 = vld [vmem:[%s3537] ss:$3 sm:$0xff]
      %s3539 = scalar_lea.vmem %s165, 67
      %v3540 = vld [vmem:[%s3539] ss:$3 sm:$0xff]
      %s3541 = scalar_lea.vmem %s165, 91
      %v3542 = vld [vmem:[%s3541] ss:$3 sm:$0xff]
      %s3543 = scalar_lea.vmem %s165, 115
      %v3544 = vld [vmem:[%s3543] ss:$3 sm:$0xff]
      %s3545 = scalar_lea.vmem %s165, 139
      %v3546 = vld [vmem:[%s3545] ss:$3 sm:$0xff]
      %s3547 = scalar_lea.vmem %s165, 163
      %v3548 = vld [vmem:[%s3547] ss:$3 sm:$0xff]
      %s3549 = scalar_lea.vmem %s165, 187
      %v3550 = vld [vmem:[%s3549] ss:$3 sm:$0xff]
      %s3551 = scalar_lea.vmem %s165, 211
      %v3552 = vld [vmem:[%s3551] ss:$3 sm:$0x1]
      %s3553 = scalar_lea.vmem %s1, 1520
      %v3554 = vld [vmem:[%s3553] sm:$0xff]
      %v3555 = vld [vmem:[%s3553 + $0x8] sm:$0xff]
      %v3556 = vld [vmem:[%s3553 + $0x10] sm:$0xff]
      %v3557 = vld [vmem:[%s3553 + $0x18] sm:$0xff]
      %v3558 = vld [vmem:[%s3553 + $0x20] sm:$0xff]
      %v3559 = vld [vmem:[%s3553 + $0x28] sm:$0xff]
      %v3560 = vld [vmem:[%s3553 + $0x30] sm:$0xff]
      %v3561 = vld [vmem:[%s3553 + $0x38] sm:$0xff]
      %v3562 = vld [vmem:[%s3553 + $0x40] sm:$0xff]
      %v3563 = vld [vmem:[%s3553 + $0x48] sm:$0x1]
      %v3565 = vsel %vm227, %v3536, 0
      %v3568 = vsel %vm227, %v3538, 0
      %v3571 = vsel %vm227, %v3540, 0
      %v3574 = vsel %vm227, %v3542, 0
      %v3577 = vsel %vm227, %v3544, 0
      %v3580 = vsel %vm227, %v3546, 0
      %v3583 = vsel %vm227, %v3548, 0
      %v3586 = vsel %vm227, %v3550, 0
      %v3589 = vsel %vm227, %v3552, 0
      %v3592 = vsel %vm255, %v3563, 0
      %3594 = vmatprep.subr.mxu0 0.0
      %3595 = vmatpush1.msra.mxu0 %v3554
      %3596 = vmatprep.subr.mxu0 0.0
      %3597 = vmatpush1.msra.mxu0 %v3555
      %3598 = vmatprep.subr.mxu0 0.0
      %3599 = vmatpush1.msra.mxu0 %v3556
      %3600 = vmatprep.subr.mxu0 0.0
      %3601 = vmatpush1.msra.mxu0 %v3557
      %3602 = vmatprep.subr.mxu0 0.0
      %3603 = vmatpush1.msra.mxu0 %v3558
      %3604 = vmatprep.subr.mxu0 0.0
      %3605 = vmatpush1.msra.mxu0 %v3559
      %3606 = vmatprep.subr.mxu0 0.0
      %3607 = vmatpush1.msra.mxu0 %v3560
      %3608 = vmatprep.subr.mxu0 0.0
      %3609 = vmatpush1.msra.mxu0 %v3561
      %3610 = vmatprep.subr.mxu0 0.0
      %3611 = vmatpush1.msra.mxu0 %v3562
      %3612 = vmatprep.subr.mxu0 0.0
      %3613 = vmatpush1.msra.mxu0 %v3592
      %3614 = vmatprep.subr.mxu0 0.0
      %3615 = vmatpush1.msra.mxu0 0.0
      %3616 = vmatprep.subr.mxu0 0.0
      %3617 = vmatpush1.msra.mxu0 0.0
      %3618 = vmatprep.subr.mxu0 0.0
      %3619 = vmatpush1.msra.mxu0 0.0
      %3620 = vmatprep.subr.mxu0 0.0
      %3621 = vmatpush1.msra.mxu0 0.0
      %3622 = vmatprep.subr.mxu0 0.0
      %3623 = vmatpush1.msra.mxu0 0.0
      %3624 = vmatprep.subr.mxu0 0.0
      %3625 = vmatpush1.msra.mxu0 0.0
      %3626 = vmatprep.subr.mxu0 0.0
      %3627 = vmatpush1.msra.mxu0 0.0
      %3628 = vmatprep.subr.mxu0 0.0
      %3629 = vmatpush1.msra.mxu0 0.0
      %3630 = vmatprep.subr.mxu0 0.0
      %3631 = vmatpush1.msra.mxu0 0.0
      %3632 = vmatprep.subr.mxu0 0.0
      %3633 = vmatpush1.msra.mxu0 0.0
      %3634 = vmatprep.subr.mxu0 0.0
      %3635 = vmatpush1.msra.mxu0 0.0
      %3636 = vmatprep.subr.mxu0 0.0
      %3637 = vmatpush1.msra.mxu0 0.0
      %3638 = vmatprep.subr.mxu0 0.0
      %3639 = vmatpush1.msra.mxu0 0.0
      %3640 = vmatprep.subr.mxu0 0.0
      %3641 = vmatpush1.msra.mxu0 0.0
      %3642 = vmatprep.subr.mxu0 0.0
      %3643 = vmatpush1.msra.mxu0 0.0
      %3644 = vmatprep.subr.mxu0 0.0
      %3645 = vmatpush1.msra.mxu0 0.0
      %3646 = vmatprep.subr.mxu0 0.0
      %3647 = vmatpush1.msra.mxu0 0.0
      %3648 = vmatprep.subr.mxu0 0.0
      %3649 = vmatpush1.msra.mxu0 0.0
      %3650 = vmatprep.subr.mxu0 0.0
      %3651 = vmatpush1.msra.mxu0 0.0
      %3652 = vmatprep.subr.mxu0 0.0
      %3653 = vmatpush1.msra.mxu0 0.0
      %3654 = vmatprep.subr.mxu0 0.0
      %3655 = vmatpush1.msra.mxu0 0.0
      %3656 = vmatprep.subr.mxu0 0.0
      %3657 = vmatpush1.msra.mxu0 0.0
      %3658 = vmatprep.mubr.f32.mxu0 0.0
      %3659 = vmatmul.mubr.f32.gmra.mrb[0].mxu0 %v3565
      %v3660 = vpop.f32.mrb[0].mxu0
      %v3661 = vadd.f32 0.0, %v3660
      %v3662 = vpop.f32.mrb[0].mxu0
      %3663 = vmatprep.mubr.f32.mxu0 0.0
      %3664 = vmatmul.mubr.f32.gmra.mrb[0].mxu0 %v3568
      %v3665 = vpop.f32.mrb[0].mxu0
      %v3666 = vadd.f32 0.0, %v3665
      %v3667 = vpop.f32.mrb[0].mxu0
      %3668 = vmatprep.mubr.f32.mxu0 0.0
      %3669 = vmatmul.mubr.f32.gmra.mrb[0].mxu0 %v3571
      %v3670 = vpop.f32.mrb[0].mxu0
      %v3671 = vadd.f32 0.0, %v3670
      %v3672 = vpop.f32.mrb[0].mxu0
      %3673 = vmatprep.mubr.f32.mxu0 0.0
      %3674 = vmatmul.mubr.f32.gmra.mrb[0].mxu0 %v3574
      %v3675 = vpop.f32.mrb[0].mxu0
      %v3676 = vadd.f32 0.0, %v3675
      %v3677 = vpop.f32.mrb[0].mxu0
      %3678 = vmatprep.mubr.f32.mxu0 0.0
      %3679 = vmatmul.mubr.f32.gmra.mrb[0].mxu0 %v3577
      %v3680 = vpop.f32.mrb[0].mxu0
      %v3681 = vadd.f32 0.0, %v3680
      %v3682 = vpop.f32.mrb[0].mxu0
      %3683 = vmatprep.mubr.f32.mxu0 0.0
      %3684 = vmatmul.mubr.f32.gmra.mrb[0].mxu0 %v3580
      %v3685 = vpop.f32.mrb[0].mxu0
      %v3686 = vadd.f32 0.0, %v3685
      %v3687 = vpop.f32.mrb[0].mxu0
      %3688 = vmatprep.mubr.f32.mxu0 0.0
      %3689 = vmatmul.mubr.f32.gmra.mrb[0].mxu0 %v3583
      %v3690 = vpop.f32.mrb[0].mxu0
      %v3691 = vadd.f32 0.0, %v3690
      %v3692 = vpop.f32.mrb[0].mxu0
      %3693 = vmatprep.mubr.f32.mxu0 0.0
      %3694 = vmatmul.mubr.f32.gmra.mrb[0].mxu0 %v3586
      %v3695 = vpop.f32.mrb[0].mxu0
      %v3696 = vadd.f32 0.0, %v3695
      %v3697 = vpop.f32.mrb[0].mxu0
      %3698 = vmatprep.mubr.f32.mxu0 0.0
      %3699 = vmatmul.mubr.f32.gmra.mrb[0].mxu0 %v3589
      %v3700 = vpop.f32.mrb[0].mxu0
      %v3701 = vadd.f32 0.0, %v3700
      %v3702 = vpop.f32.mrb[0].mxu0
      %3703 = vdwg.mxu0
      %v3704 = vadd.f32 %v3526, %v3661
      %v3705 = vadd.f32 %v3527, %v3666
      %v3706 = vadd.f32 %v3528, %v3671
      %v3707 = vadd.f32 %v3529, %v3676
      %v3708 = vadd.f32 %v3530, %v3681
      %v3709 = vadd.f32 %v3531, %v3686
      %v3710 = vadd.f32 %v3532, %v3691
      %v3711 = vadd.f32 %v3533, %v3696
      %v3712 = vadd.f32 %v3534, %v3701
      %s3713 = scalar_lea.vmem %s165, 20
      %v3714 = vld [vmem:[%s3713] ss:$3 sm:$0xff]
      %s3715 = scalar_lea.vmem %s165, 44
      %v3716 = vld [vmem:[%s3715] ss:$3 sm:$0xff]
      %s3717 = scalar_lea.vmem %s165, 68
      %v3718 = vld [vmem:[%s3717] ss:$3 sm:$0xff]
      %s3719 = scalar_lea.vmem %s165, 92
      %v3720 = vld [vmem:[%s3719] ss:$3 sm:$0xff]
      %s3721 = scalar_lea.vmem %s165, 116
      %v3722 = vld [vmem:[%s3721] ss:$3 sm:$0xff]
      %s3723 = scalar_lea.vmem %s165, 140
      %v3724 = vld [vmem:[%s3723] ss:$3 sm:$0xff]
      %s3725 = scalar_lea.vmem %s165, 164
      %v3726 = vld [vmem:[%s3725] ss:$3 sm:$0xff]
      %s3727 = scalar_lea.vmem %s165, 188
      %v3728 = vld [vmem:[%s3727] ss:$3 sm:$0xff]
      %s3729 = scalar_lea.vmem %s165, 212
      %v3730 = vld [vmem:[%s3729] ss:$3 sm:$0x1]
      %s3731 = scalar_lea.vmem %s1, 1600
      %v3732 = vld [vmem:[%s3731] sm:$0xff]
      %v3733 = vld [vmem:[%s3731 + $0x8] sm:$0xff]
      %v3734 = vld [vmem:[%s3731 + $0x10] sm:$0xff]
      %v3735 = vld [vmem:[%s3731 + $0x18] sm:$0xff]
      %v3736 = vld [vmem:[%s3731 + $0x20] sm:$0xff]
      %v3737 = vld [vmem:[%s3731 + $0x28] sm:$0xff]
      %v3738 = vld [vmem:[%s3731 + $0x30] sm:$0xff]
      %v3739 = vld [vmem:[%s3731 + $0x38] sm:$0xff]
      %v3740 = vld [vmem:[%s3731 + $0x40] sm:$0xff]
      %v3741 = vld [vmem:[%s3731 + $0x48] sm:$0x1]
      %v3743 = vsel %vm227, %v3714, 0
      %v3746 = vsel %vm227, %v3716, 0
      %v3749 = vsel %vm227, %v3718, 0
      %v3752 = vsel %vm227, %v3720, 0
      %v3755 = vsel %vm227, %v3722, 0
      %v3758 = vsel %vm227, %v3724, 0
      %v3761 = vsel %vm227, %v3726, 0
      %v3764 = vsel %vm227, %v3728, 0
      %v3767 = vsel %vm227, %v3730, 0
      %v3770 = vsel %vm255, %v3741, 0
      %3772 = vmatprep.subr.mxu0 0.0
      %3773 = vmatpush1.msra.mxu0 %v3732
      %3774 = vmatprep.subr.mxu0 0.0
      %3775 = vmatpush1.msra.mxu0 %v3733
      %3776 = vmatprep.subr.mxu0 0.0
      %3777 = vmatpush1.msra.mxu0 %v3734
      %3778 = vmatprep.subr.mxu0 0.0
      %3779 = vmatpush1.msra.mxu0 %v3735
      %3780 = vmatprep.subr.mxu0 0.0
      %3781 = vmatpush1.msra.mxu0 %v3736
      %3782 = vmatprep.subr.mxu0 0.0
      %3783 = vmatpush1.msra.mxu0 %v3737
      %3784 = vmatprep.subr.mxu0 0.0
      %3785 = vmatpush1.msra.mxu0 %v3738
      %3786 = vmatprep.subr.mxu0 0.0
      %3787 = vmatpush1.msra.mxu0 %v3739
      %3788 = vmatprep.subr.mxu0 0.0
      %3789 = vmatpush1.msra.mxu0 %v3740
      %3790 = vmatprep.subr.mxu0 0.0
      %3791 = vmatpush1.msra.mxu0 %v3770
      %3792 = vmatprep.subr.mxu0 0.0
      %3793 = vmatpush1.msra.mxu0 0.0
      %3794 = vmatprep.subr.mxu0 0.0
      %3795 = vmatpush1.msra.mxu0 0.0
      %3796 = vmatprep.subr.mxu0 0.0
      %3797 = vmatpush1.msra.mxu0 0.0
      %3798 = vmatprep.subr.mxu0 0.0
      %3799 = vmatpush1.msra.mxu0 0.0
      %3800 = vmatprep.subr.mxu0 0.0
      %3801 = vmatpush1.msra.mxu0 0.0
      %3802 = vmatprep.subr.mxu0 0.0
      %3803 = vmatpush1.msra.mxu0 0.0
      %3804 = vmatprep.subr.mxu0 0.0
      %3805 = vmatpush1.msra.mxu0 0.0
      %3806 = vmatprep.subr.mxu0 0.0
      %3807 = vmatpush1.msra.mxu0 0.0
      %3808 = vmatprep.subr.mxu0 0.0
      %3809 = vmatpush1.msra.mxu0 0.0
      %3810 = vmatprep.subr.mxu0 0.0
      %3811 = vmatpush1.msra.mxu0 0.0
      %3812 = vmatprep.subr.mxu0 0.0
      %3813 = vmatpush1.msra.mxu0 0.0
      %3814 = vmatprep.subr.mxu0 0.0
      %3815 = vmatpush1.msra.mxu0 0.0
      %3816 = vmatprep.subr.mxu0 0.0
      %3817 = vmatpush1.msra.mxu0 0.0
      %3818 = vmatprep.subr.mxu0 0.0
      %3819 = vmatpush1.msra.mxu0 0.0
      %3820 = vmatprep.subr.mxu0 0.0
      %3821 = vmatpush1.msra.mxu0 0.0
      %3822 = vmatprep.subr.mxu0 0.0
      %3823 = vmatpush1.msra.mxu0 0.0
      %3824 = vmatprep.subr.mxu0 0.0
      %3825 = vmatpush1.msra.mxu0 0.0
      %3826 = vmatprep.subr.mxu0 0.0
      %3827 = vmatpush1.msra.mxu0 0.0
      %3828 = vmatprep.subr.mxu0 0.0
      %3829 = vmatpush1.msra.mxu0 0.0
      %3830 = vmatprep.subr.mxu0 0.0
      %3831 = vmatpush1.msra.mxu0 0.0
      %3832 = vmatprep.subr.mxu0 0.0
      %3833 = vmatpush1.msra.mxu0 0.0
      %3834 = vmatprep.subr.mxu0 0.0
      %3835 = vmatpush1.msra.mxu0 0.0
      %3836 = vmatprep.mubr.f32.mxu0 0.0
      %3837 = vmatmul.mubr.f32.gmra.mrb[0].mxu0 %v3743
      %v3838 = vpop.f32.mrb[0].mxu0
      %v3839 = vadd.f32 0.0, %v3838
      %v3840 = vpop.f32.mrb[0].mxu0
      %3841 = vmatprep.mubr.f32.mxu0 0.0
      %3842 = vmatmul.mubr.f32.gmra.mrb[0].mxu0 %v3746
      %v3843 = vpop.f32.mrb[0].mxu0
      %v3844 = vadd.f32 0.0, %v3843
      %v3845 = vpop.f32.mrb[0].mxu0
      %3846 = vmatprep.mubr.f32.mxu0 0.0
      %3847 = vmatmul.mubr.f32.gmra.mrb[0].mxu0 %v3749
      %v3848 = vpop.f32.mrb[0].mxu0
      %v3849 = vadd.f32 0.0, %v3848
      %v3850 = vpop.f32.mrb[0].mxu0
      %3851 = vmatprep.mubr.f32.mxu0 0.0
      %3852 = vmatmul.mubr.f32.gmra.mrb[0].mxu0 %v3752
      %v3853 = vpop.f32.mrb[0].mxu0
      %v3854 = vadd.f32 0.0, %v3853
      %v3855 = vpop.f32.mrb[0].mxu0
      %3856 = vmatprep.mubr.f32.mxu0 0.0
      %3857 = vmatmul.mubr.f32.gmra.mrb[0].mxu0 %v3755
      %v3858 = vpop.f32.mrb[0].mxu0
      %v3859 = vadd.f32 0.0, %v3858
      %v3860 = vpop.f32.mrb[0].mxu0
      %3861 = vmatprep.mubr.f32.mxu0 0.0
      %3862 = vmatmul.mubr.f32.gmra.mrb[0].mxu0 %v3758
      %v3863 = vpop.f32.mrb[0].mxu0
      %v3864 = vadd.f32 0.0, %v3863
      %v3865 = vpop.f32.mrb[0].mxu0
      %3866 = vmatprep.mubr.f32.mxu0 0.0
      %3867 = vmatmul.mubr.f32.gmra.mrb[0].mxu0 %v3761
      %v3868 = vpop.f32.mrb[0].mxu0
      %v3869 = vadd.f32 0.0, %v3868
      %v3870 = vpop.f32.mrb[0].mxu0
      %3871 = vmatprep.mubr.f32.mxu0 0.0
      %3872 = vmatmul.mubr.f32.gmra.mrb[0].mxu0 %v3764
      %v3873 = vpop.f32.mrb[0].mxu0
      %v3874 = vadd.f32 0.0, %v3873
      %v3875 = vpop.f32.mrb[0].mxu0
      %3876 = vmatprep.mubr.f32.mxu0 0.0
      %3877 = vmatmul.mubr.f32.gmra.mrb[0].mxu0 %v3767
      %v3878 = vpop.f32.mrb[0].mxu0
      %v3879 = vadd.f32 0.0, %v3878
      %v3880 = vpop.f32.mrb[0].mxu0
      %3881 = vdwg.mxu0
      %v3882 = vadd.f32 %v3704, %v3839
      %v3883 = vadd.f32 %v3705, %v3844
      %v3884 = vadd.f32 %v3706, %v3849
      %v3885 = vadd.f32 %v3707, %v3854
      %v3886 = vadd.f32 %v3708, %v3859
      %v3887 = vadd.f32 %v3709, %v3864
      %v3888 = vadd.f32 %v3710, %v3869
      %v3889 = vadd.f32 %v3711, %v3874
      %v3890 = vadd.f32 %v3712, %v3879
      %s3891 = scalar_lea.vmem %s165, 21
      %v3892 = vld [vmem:[%s3891] ss:$3 sm:$0xff]
      %s3893 = scalar_lea.vmem %s165, 45
      %v3894 = vld [vmem:[%s3893] ss:$3 sm:$0xff]
      %s3895 = scalar_lea.vmem %s165, 69
      %v3896 = vld [vmem:[%s3895] ss:$3 sm:$0xff]
      %s3897 = scalar_lea.vmem %s165, 93
      %v3898 = vld [vmem:[%s3897] ss:$3 sm:$0xff]
      %s3899 = scalar_lea.vmem %s165, 117
      %v3900 = vld [vmem:[%s3899] ss:$3 sm:$0xff]
      %s3901 = scalar_lea.vmem %s165, 141
      %v3902 = vld [vmem:[%s3901] ss:$3 sm:$0xff]
      %s3903 = scalar_lea.vmem %s165, 165
      %v3904 = vld [vmem:[%s3903] ss:$3 sm:$0xff]
      %s3905 = scalar_lea.vmem %s165, 189
      %v3906 = vld [vmem:[%s3905] ss:$3 sm:$0xff]
      %s3907 = scalar_lea.vmem %s165, 213
      %v3908 = vld [vmem:[%s3907] ss:$3 sm:$0x1]
      %s3909 = scalar_lea.vmem %s1, 1680
      %v3910 = vld [vmem:[%s3909] sm:$0xff]
      %v3911 = vld [vmem:[%s3909 + $0x8] sm:$0xff]
      %v3912 = vld [vmem:[%s3909 + $0x10] sm:$0xff]
      %v3913 = vld [vmem:[%s3909 + $0x18] sm:$0xff]
      %v3914 = vld [vmem:[%s3909 + $0x20] sm:$0xff]
      %v3915 = vld [vmem:[%s3909 + $0x28] sm:$0xff]
      %v3916 = vld [vmem:[%s3909 + $0x30] sm:$0xff]
      %v3917 = vld [vmem:[%s3909 + $0x38] sm:$0xff]
      %v3918 = vld [vmem:[%s3909 + $0x40] sm:$0xff]
      %v3919 = vld [vmem:[%s3909 + $0x48] sm:$0x1]
      %v3921 = vsel %vm227, %v3892, 0
      %v3924 = vsel %vm227, %v3894, 0
      %v3927 = vsel %vm227, %v3896, 0
      %v3930 = vsel %vm227, %v3898, 0
      %v3933 = vsel %vm227, %v3900, 0
      %v3936 = vsel %vm227, %v3902, 0
      %v3939 = vsel %vm227, %v3904, 0
      %v3942 = vsel %vm227, %v3906, 0
      %v3945 = vsel %vm227, %v3908, 0
      %v3948 = vsel %vm255, %v3919, 0
      %3950 = vmatprep.subr.mxu0 0.0
      %3951 = vmatpush1.msra.mxu0 %v3910
      %3952 = vmatprep.subr.mxu0 0.0
      %3953 = vmatpush1.msra.mxu0 %v3911
      %3954 = vmatprep.subr.mxu0 0.0
      %3955 = vmatpush1.msra.mxu0 %v3912
      %3956 = vmatprep.subr.mxu0 0.0
      %3957 = vmatpush1.msra.mxu0 %v3913
      %3958 = vmatprep.subr.mxu0 0.0
      %3959 = vmatpush1.msra.mxu0 %v3914
      %3960 = vmatprep.subr.mxu0 0.0
      %3961 = vmatpush1.msra.mxu0 %v3915
      %3962 = vmatprep.subr.mxu0 0.0
      %3963 = vmatpush1.msra.mxu0 %v3916
      %3964 = vmatprep.subr.mxu0 0.0
      %3965 = vmatpush1.msra.mxu0 %v3917
      %3966 = vmatprep.subr.mxu0 0.0
      %3967 = vmatpush1.msra.mxu0 %v3918
      %3968 = vmatprep.subr.mxu0 0.0
      %3969 = vmatpush1.msra.mxu0 %v3948
      %3970 = vmatprep.subr.mxu0 0.0
      %3971 = vmatpush1.msra.mxu0 0.0
      %3972 = vmatprep.subr.mxu0 0.0
      %3973 = vmatpush1.msra.mxu0 0.0
      %3974 = vmatprep.subr.mxu0 0.0
      %3975 = vmatpush1.msra.mxu0 0.0
      %3976 = vmatprep.subr.mxu0 0.0
      %3977 = vmatpush1.msra.mxu0 0.0
      %3978 = vmatprep.subr.mxu0 0.0
      %3979 = vmatpush1.msra.mxu0 0.0
      %3980 = vmatprep.subr.mxu0 0.0
      %3981 = vmatpush1.msra.mxu0 0.0
      %3982 = vmatprep.subr.mxu0 0.0
      %3983 = vmatpush1.msra.mxu0 0.0
      %3984 = vmatprep.subr.mxu0 0.0
      %3985 = vmatpush1.msra.mxu0 0.0
      %3986 = vmatprep.subr.mxu0 0.0
      %3987 = vmatpush1.msra.mxu0 0.0
      %3988 = vmatprep.subr.mxu0 0.0
      %3989 = vmatpush1.msra.mxu0 0.0
      %3990 = vmatprep.subr.mxu0 0.0
      %3991 = vmatpush1.msra.mxu0 0.0
      %3992 = vmatprep.subr.mxu0 0.0
      %3993 = vmatpush1.msra.mxu0 0.0
      %3994 = vmatprep.subr.mxu0 0.0
      %3995 = vmatpush1.msra.mxu0 0.0
      %3996 = vmatprep.subr.mxu0 0.0
      %3997 = vmatpush1.msra.mxu0 0.0
      %3998 = vmatprep.subr.mxu0 0.0
      %3999 = vmatpush1.msra.mxu0 0.0
      %4000 = vmatprep.subr.mxu0 0.0
      %4001 = vmatpush1.msra.mxu0 0.0
      %4002 = vmatprep.subr.mxu0 0.0
      %4003 = vmatpush1.msra.mxu0 0.0
      %4004 = vmatprep.subr.mxu0 0.0
      %4005 = vmatpush1.msra.mxu0 0.0
      %4006 = vmatprep.subr.mxu0 0.0
      %4007 = vmatpush1.msra.mxu0 0.0
      %4008 = vmatprep.subr.mxu0 0.0
      %4009 = vmatpush1.msra.mxu0 0.0
      %4010 = vmatprep.subr.mxu0 0.0
      %4011 = vmatpush1.msra.mxu0 0.0
      %4012 = vmatprep.subr.mxu0 0.0
      %4013 = vmatpush1.msra.mxu0 0.0
      %4014 = vmatprep.mubr.f32.mxu0 0.0
      %4015 = vmatmul.mubr.f32.gmra.mrb[0].mxu0 %v3921
      %v4016 = vpop.f32.mrb[0].mxu0
      %v4017 = vadd.f32 0.0, %v4016
      %v4018 = vpop.f32.mrb[0].mxu0
      %4019 = vmatprep.mubr.f32.mxu0 0.0
      %4020 = vmatmul.mubr.f32.gmra.mrb[0].mxu0 %v3924
      %v4021 = vpop.f32.mrb[0].mxu0
      %v4022 = vadd.f32 0.0, %v4021
      %v4023 = vpop.f32.mrb[0].mxu0
      %4024 = vmatprep.mubr.f32.mxu0 0.0
      %4025 = vmatmul.mubr.f32.gmra.mrb[0].mxu0 %v3927
      %v4026 = vpop.f32.mrb[0].mxu0
      %v4027 = vadd.f32 0.0, %v4026
      %v4028 = vpop.f32.mrb[0].mxu0
      %4029 = vmatprep.mubr.f32.mxu0 0.0
      %4030 = vmatmul.mubr.f32.gmra.mrb[0].mxu0 %v3930
      %v4031 = vpop.f32.mrb[0].mxu0
      %v4032 = vadd.f32 0.0, %v4031
      %v4033 = vpop.f32.mrb[0].mxu0
      %4034 = vmatprep.mubr.f32.mxu0 0.0
      %4035 = vmatmul.mubr.f32.gmra.mrb[0].mxu0 %v3933
      %v4036 = vpop.f32.mrb[0].mxu0
      %v4037 = vadd.f32 0.0, %v4036
      %v4038 = vpop.f32.mrb[0].mxu0
      %4039 = vmatprep.mubr.f32.mxu0 0.0
      %4040 = vmatmul.mubr.f32.gmra.mrb[0].mxu0 %v3936
      %v4041 = vpop.f32.mrb[0].mxu0
      %v4042 = vadd.f32 0.0, %v4041
      %v4043 = vpop.f32.mrb[0].mxu0
      %4044 = vmatprep.mubr.f32.mxu0 0.0
      %4045 = vmatmul.mubr.f32.gmra.mrb[0].mxu0 %v3939
      %v4046 = vpop.f32.mrb[0].mxu0
      %v4047 = vadd.f32 0.0, %v4046
      %v4048 = vpop.f32.mrb[0].mxu0
      %4049 = vmatprep.mubr.f32.mxu0 0.0
      %4050 = vmatmul.mubr.f32.gmra.mrb[0].mxu0 %v3942
      %v4051 = vpop.f32.mrb[0].mxu0
      %v4052 = vadd.f32 0.0, %v4051
      %v4053 = vpop.f32.mrb[0].mxu0
      %4054 = vmatprep.mubr.f32.mxu0 0.0
      %4055 = vmatmul.mubr.f32.gmra.mrb[0].mxu0 %v3945
      %v4056 = vpop.f32.mrb[0].mxu0
      %v4057 = vadd.f32 0.0, %v4056
      %v4058 = vpop.f32.mrb[0].mxu0
      %4059 = vdwg.mxu0
      %v4060 = vadd.f32 %v3882, %v4017
      %v4061 = vadd.f32 %v3883, %v4022
      %v4062 = vadd.f32 %v3884, %v4027
      %v4063 = vadd.f32 %v3885, %v4032
      %v4064 = vadd.f32 %v3886, %v4037
      %v4065 = vadd.f32 %v3887, %v4042
      %v4066 = vadd.f32 %v3888, %v4047
      %v4067 = vadd.f32 %v3889, %v4052
      %v4068 = vadd.f32 %v3890, %v4057
      %s4069 = scalar_lea.vmem %s165, 22
      %v4070 = vld [vmem:[%s4069] ss:$3 sm:$0xff]
      %s4071 = scalar_lea.vmem %s165, 46
      %v4072 = vld [vmem:[%s4071] ss:$3 sm:$0xff]
      %s4073 = scalar_lea.vmem %s165, 70
      %v4074 = vld [vmem:[%s4073] ss:$3 sm:$0xff]
      %s4075 = scalar_lea.vmem %s165, 94
      %v4076 = vld [vmem:[%s4075] ss:$3 sm:$0xff]
      %s4077 = scalar_lea.vmem %s165, 118
      %v4078 = vld [vmem:[%s4077] ss:$3 sm:$0xff]
      %s4079 = scalar_lea.vmem %s165, 142
      %v4080 = vld [vmem:[%s4079] ss:$3 sm:$0xff]
      %s4081 = scalar_lea.vmem %s165, 166
      %v4082 = vld [vmem:[%s4081] ss:$3 sm:$0xff]
      %s4083 = scalar_lea.vmem %s165, 190
      %v4084 = vld [vmem:[%s4083] ss:$3 sm:$0xff]
      %s4085 = scalar_lea.vmem %s165, 214
      %v4086 = vld [vmem:[%s4085] ss:$3 sm:$0x1]
      %s4087 = scalar_lea.vmem %s1, 1760
      %v4088 = vld [vmem:[%s4087] sm:$0xff]
      %v4089 = vld [vmem:[%s4087 + $0x8] sm:$0xff]
      %v4090 = vld [vmem:[%s4087 + $0x10] sm:$0xff]
      %v4091 = vld [vmem:[%s4087 + $0x18] sm:$0xff]
      %v4092 = vld [vmem:[%s4087 + $0x20] sm:$0xff]
      %v4093 = vld [vmem:[%s4087 + $0x28] sm:$0xff]
      %v4094 = vld [vmem:[%s4087 + $0x30] sm:$0xff]
      %v4095 = vld [vmem:[%s4087 + $0x38] sm:$0xff]
      %v4096 = vld [vmem:[%s4087 + $0x40] sm:$0xff]
      %v4097 = vld [vmem:[%s4087 + $0x48] sm:$0x1]
      %v4099 = vsel %vm227, %v4070, 0
      %v4102 = vsel %vm227, %v4072, 0
      %v4105 = vsel %vm227, %v4074, 0
      %v4108 = vsel %vm227, %v4076, 0
      %v4111 = vsel %vm227, %v4078, 0
      %v4114 = vsel %vm227, %v4080, 0
      %v4117 = vsel %vm227, %v4082, 0
      %v4120 = vsel %vm227, %v4084, 0
      %v4123 = vsel %vm227, %v4086, 0
      %v4126 = vsel %vm255, %v4097, 0
      %4128 = vmatprep.subr.mxu0 0.0
      %4129 = vmatpush1.msra.mxu0 %v4088
      %4130 = vmatprep.subr.mxu0 0.0
      %4131 = vmatpush1.msra.mxu0 %v4089
      %4132 = vmatprep.subr.mxu0 0.0
      %4133 = vmatpush1.msra.mxu0 %v4090
      %4134 = vmatprep.subr.mxu0 0.0
      %4135 = vmatpush1.msra.mxu0 %v4091
      %4136 = vmatprep.subr.mxu0 0.0
      %4137 = vmatpush1.msra.mxu0 %v4092
      %4138 = vmatprep.subr.mxu0 0.0
      %4139 = vmatpush1.msra.mxu0 %v4093
      %4140 = vmatprep.subr.mxu0 0.0
      %4141 = vmatpush1.msra.mxu0 %v4094
      %4142 = vmatprep.subr.mxu0 0.0
      %4143 = vmatpush1.msra.mxu0 %v4095
      %4144 = vmatprep.subr.mxu0 0.0
      %4145 = vmatpush1.msra.mxu0 %v4096
      %4146 = vmatprep.subr.mxu0 0.0
      %4147 = vmatpush1.msra.mxu0 %v4126
      %4148 = vmatprep.subr.mxu0 0.0
      %4149 = vmatpush1.msra.mxu0 0.0
      %4150 = vmatprep.subr.mxu0 0.0
      %4151 = vmatpush1.msra.mxu0 0.0
      %4152 = vmatprep.subr.mxu0 0.0
      %4153 = vmatpush1.msra.mxu0 0.0
      %4154 = vmatprep.subr.mxu0 0.0
      %4155 = vmatpush1.msra.mxu0 0.0
      %4156 = vmatprep.subr.mxu0 0.0
      %4157 = vmatpush1.msra.mxu0 0.0
      %4158 = vmatprep.subr.mxu0 0.0
      %4159 = vmatpush1.msra.mxu0 0.0
      %4160 = vmatprep.subr.mxu0 0.0
      %4161 = vmatpush1.msra.mxu0 0.0
      %4162 = vmatprep.subr.mxu0 0.0
      %4163 = vmatpush1.msra.mxu0 0.0
      %4164 = vmatprep.subr.mxu0 0.0
      %4165 = vmatpush1.msra.mxu0 0.0
      %4166 = vmatprep.subr.mxu0 0.0
      %4167 = vmatpush1.msra.mxu0 0.0
      %4168 = vmatprep.subr.mxu0 0.0
      %4169 = vmatpush1.msra.mxu0 0.0
      %4170 = vmatprep.subr.mxu0 0.0
      %4171 = vmatpush1.msra.mxu0 0.0
      %4172 = vmatprep.subr.mxu0 0.0
      %4173 = vmatpush1.msra.mxu0 0.0
      %4174 = vmatprep.subr.mxu0 0.0
      %4175 = vmatpush1.msra.mxu0 0.0
      %4176 = vmatprep.subr.mxu0 0.0
      %4177 = vmatpush1.msra.mxu0 0.0
      %4178 = vmatprep.subr.mxu0 0.0
      %4179 = vmatpush1.msra.mxu0 0.0
      %4180 = vmatprep.subr.mxu0 0.0
      %4181 = vmatpush1.msra.mxu0 0.0
      %4182 = vmatprep.subr.mxu0 0.0
      %4183 = vmatpush1.msra.mxu0 0.0
      %4184 = vmatprep.subr.mxu0 0.0
      %4185 = vmatpush1.msra.mxu0 0.0
      %4186 = vmatprep.subr.mxu0 0.0
      %4187 = vmatpush1.msra.mxu0 0.0
      %4188 = vmatprep.subr.mxu0 0.0
      %4189 = vmatpush1.msra.mxu0 0.0
      %4190 = vmatprep.subr.mxu0 0.0
      %4191 = vmatpush1.msra.mxu0 0.0
      %4192 = vmatprep.mubr.f32.mxu0 0.0
      %4193 = vmatmul.mubr.f32.gmra.mrb[0].mxu0 %v4099
      %v4194 = vpop.f32.mrb[0].mxu0
      %v4195 = vadd.f32 0.0, %v4194
      %v4196 = vpop.f32.mrb[0].mxu0
      %4197 = vmatprep.mubr.f32.mxu0 0.0
      %4198 = vmatmul.mubr.f32.gmra.mrb[0].mxu0 %v4102
      %v4199 = vpop.f32.mrb[0].mxu0
      %v4200 = vadd.f32 0.0, %v4199
      %v4201 = vpop.f32.mrb[0].mxu0
      %4202 = vmatprep.mubr.f32.mxu0 0.0
      %4203 = vmatmul.mubr.f32.gmra.mrb[0].mxu0 %v4105
      %v4204 = vpop.f32.mrb[0].mxu0
      %v4205 = vadd.f32 0.0, %v4204
      %v4206 = vpop.f32.mrb[0].mxu0
      %4207 = vmatprep.mubr.f32.mxu0 0.0
      %4208 = vmatmul.mubr.f32.gmra.mrb[0].mxu0 %v4108
      %v4209 = vpop.f32.mrb[0].mxu0
      %v4210 = vadd.f32 0.0, %v4209
      %v4211 = vpop.f32.mrb[0].mxu0
      %4212 = vmatprep.mubr.f32.mxu0 0.0
      %4213 = vmatmul.mubr.f32.gmra.mrb[0].mxu0 %v4111
      %v4214 = vpop.f32.mrb[0].mxu0
      %v4215 = vadd.f32 0.0, %v4214
      %v4216 = vpop.f32.mrb[0].mxu0
      %4217 = vmatprep.mubr.f32.mxu0 0.0
      %4218 = vmatmul.mubr.f32.gmra.mrb[0].mxu0 %v4114
      %v4219 = vpop.f32.mrb[0].mxu0
      %v4220 = vadd.f32 0.0, %v4219
      %v4221 = vpop.f32.mrb[0].mxu0
      %4222 = vmatprep.mubr.f32.mxu0 0.0
      %4223 = vmatmul.mubr.f32.gmra.mrb[0].mxu0 %v4117
      %v4224 = vpop.f32.mrb[0].mxu0
      %v4225 = vadd.f32 0.0, %v4224
      %v4226 = vpop.f32.mrb[0].mxu0
      %4227 = vmatprep.mubr.f32.mxu0 0.0
      %4228 = vmatmul.mubr.f32.gmra.mrb[0].mxu0 %v4120
      %v4229 = vpop.f32.mrb[0].mxu0
      %v4230 = vadd.f32 0.0, %v4229
      %v4231 = vpop.f32.mrb[0].mxu0
      %4232 = vmatprep.mubr.f32.mxu0 0.0
      %4233 = vmatmul.mubr.f32.gmra.mrb[0].mxu0 %v4123
      %v4234 = vpop.f32.mrb[0].mxu0
      %v4235 = vadd.f32 0.0, %v4234
      %v4236 = vpop.f32.mrb[0].mxu0
      %4237 = vdwg.mxu0
      %v4238 = vadd.f32 %v4060, %v4195
      %v4239 = vadd.f32 %v4061, %v4200
      %v4240 = vadd.f32 %v4062, %v4205
      %v4241 = vadd.f32 %v4063, %v4210
      %v4242 = vadd.f32 %v4064, %v4215
      %v4243 = vadd.f32 %v4065, %v4220
      %v4244 = vadd.f32 %v4066, %v4225
      %v4245 = vadd.f32 %v4067, %v4230
      %v4246 = vadd.f32 %v4068, %v4235
      %s4247 = scalar_lea.vmem %s165, 23
      %v4248 = vld [vmem:[%s4247] ss:$3 sm:$0xff]
      %s4249 = scalar_lea.vmem %s165, 47
      %v4250 = vld [vmem:[%s4249] ss:$3 sm:$0xff]
      %s4251 = scalar_lea.vmem %s165, 71
      %v4252 = vld [vmem:[%s4251] ss:$3 sm:$0xff]
      %s4253 = scalar_lea.vmem %s165, 95
      %v4254 = vld [vmem:[%s4253] ss:$3 sm:$0xff]
      %s4255 = scalar_lea.vmem %s165, 119
      %v4256 = vld [vmem:[%s4255] ss:$3 sm:$0xff]
      %s4257 = scalar_lea.vmem %s165, 143
      %v4258 = vld [vmem:[%s4257] ss:$3 sm:$0xff]
      %s4259 = scalar_lea.vmem %s165, 167
      %v4260 = vld [vmem:[%s4259] ss:$3 sm:$0xff]
      %s4261 = scalar_lea.vmem %s165, 191
      %v4262 = vld [vmem:[%s4261] ss:$3 sm:$0xff]
      %s4263 = scalar_lea.vmem %s165, 215
      %v4264 = vld [vmem:[%s4263] ss:$3 sm:$0x1]
      %s4265 = scalar_lea.vmem %s1, 1840
      %v4266 = vld [vmem:[%s4265] sm:$0xff]
      %v4267 = vld [vmem:[%s4265 + $0x8] sm:$0xff]
      %v4268 = vld [vmem:[%s4265 + $0x10] sm:$0xff]
      %v4269 = vld [vmem:[%s4265 + $0x18] sm:$0xff]
      %v4270 = vld [vmem:[%s4265 + $0x20] sm:$0xff]
      %v4271 = vld [vmem:[%s4265 + $0x28] sm:$0xff]
      %v4272 = vld [vmem:[%s4265 + $0x30] sm:$0xff]
      %v4273 = vld [vmem:[%s4265 + $0x38] sm:$0xff]
      %v4274 = vld [vmem:[%s4265 + $0x40] sm:$0xff]
      %v4275 = vld [vmem:[%s4265 + $0x48] sm:$0x1]
      %v4277 = vsel %vm227, %v4248, 0
      %v4280 = vsel %vm227, %v4250, 0
      %v4283 = vsel %vm227, %v4252, 0
      %v4286 = vsel %vm227, %v4254, 0
      %v4289 = vsel %vm227, %v4256, 0
      %v4292 = vsel %vm227, %v4258, 0
      %v4295 = vsel %vm227, %v4260, 0
      %v4298 = vsel %vm227, %v4262, 0
      %v4301 = vsel %vm227, %v4264, 0
      %v4304 = vsel %vm255, %v4275, 0
      %4306 = vmatprep.subr.mxu0 0.0
      %4307 = vmatpush1.msra.mxu0 %v4266
      %4308 = vmatprep.subr.mxu0 0.0
      %4309 = vmatpush1.msra.mxu0 %v4267
      %4310 = vmatprep.subr.mxu0 0.0
      %4311 = vmatpush1.msra.mxu0 %v4268
      %4312 = vmatprep.subr.mxu0 0.0
      %4313 = vmatpush1.msra.mxu0 %v4269
      %4314 = vmatprep.subr.mxu0 0.0
      %4315 = vmatpush1.msra.mxu0 %v4270
      %4316 = vmatprep.subr.mxu0 0.0
      %4317 = vmatpush1.msra.mxu0 %v4271
      %4318 = vmatprep.subr.mxu0 0.0
      %4319 = vmatpush1.msra.mxu0 %v4272
      %4320 = vmatprep.subr.mxu0 0.0
      %4321 = vmatpush1.msra.mxu0 %v4273
      %4322 = vmatprep.subr.mxu0 0.0
      %4323 = vmatpush1.msra.mxu0 %v4274
      %4324 = vmatprep.subr.mxu0 0.0
      %4325 = vmatpush1.msra.mxu0 %v4304
      %4326 = vmatprep.subr.mxu0 0.0
      %4327 = vmatpush1.msra.mxu0 0.0
      %4328 = vmatprep.subr.mxu0 0.0
      %4329 = vmatpush1.msra.mxu0 0.0
      %4330 = vmatprep.subr.mxu0 0.0
      %4331 = vmatpush1.msra.mxu0 0.0
      %4332 = vmatprep.subr.mxu0 0.0
      %4333 = vmatpush1.msra.mxu0 0.0
      %4334 = vmatprep.subr.mxu0 0.0
      %4335 = vmatpush1.msra.mxu0 0.0
      %4336 = vmatprep.subr.mxu0 0.0
      %4337 = vmatpush1.msra.mxu0 0.0
      %4338 = vmatprep.subr.mxu0 0.0
      %4339 = vmatpush1.msra.mxu0 0.0
      %4340 = vmatprep.subr.mxu0 0.0
      %4341 = vmatpush1.msra.mxu0 0.0
      %4342 = vmatprep.subr.mxu0 0.0
      %4343 = vmatpush1.msra.mxu0 0.0
      %4344 = vmatprep.subr.mxu0 0.0
      %4345 = vmatpush1.msra.mxu0 0.0
      %4346 = vmatprep.subr.mxu0 0.0
      %4347 = vmatpush1.msra.mxu0 0.0
      %4348 = vmatprep.subr.mxu0 0.0
      %4349 = vmatpush1.msra.mxu0 0.0
      %4350 = vmatprep.subr.mxu0 0.0
      %4351 = vmatpush1.msra.mxu0 0.0
      %4352 = vmatprep.subr.mxu0 0.0
      %4353 = vmatpush1.msra.mxu0 0.0
      %4354 = vmatprep.subr.mxu0 0.0
      %4355 = vmatpush1.msra.mxu0 0.0
      %4356 = vmatprep.subr.mxu0 0.0
      %4357 = vmatpush1.msra.mxu0 0.0
      %4358 = vmatprep.subr.mxu0 0.0
      %4359 = vmatpush1.msra.mxu0 0.0
      %4360 = vmatprep.subr.mxu0 0.0
      %4361 = vmatpush1.msra.mxu0 0.0
      %4362 = vmatprep.subr.mxu0 0.0
      %4363 = vmatpush1.msra.mxu0 0.0
      %4364 = vmatprep.subr.mxu0 0.0
      %4365 = vmatpush1.msra.mxu0 0.0
      %4366 = vmatprep.subr.mxu0 0.0
      %4367 = vmatpush1.msra.mxu0 0.0
      %4368 = vmatprep.subr.mxu0 0.0
      %4369 = vmatpush1.msra.mxu0 0.0
      %4370 = vmatprep.mubr.f32.mxu0 0.0
      %4371 = vmatmul.mubr.f32.gmra.mrb[0].mxu0 %v4277
      %v4372 = vpop.f32.mrb[0].mxu0
      %v4373 = vadd.f32 0.0, %v4372
      %v4374 = vpop.f32.mrb[0].mxu0
      %4375 = vmatprep.mubr.f32.mxu0 0.0
      %4376 = vmatmul.mubr.f32.gmra.mrb[0].mxu0 %v4280
      %v4377 = vpop.f32.mrb[0].mxu0
      %v4378 = vadd.f32 0.0, %v4377
      %v4379 = vpop.f32.mrb[0].mxu0
      %4380 = vmatprep.mubr.f32.mxu0 0.0
      %4381 = vmatmul.mubr.f32.gmra.mrb[0].mxu0 %v4283
      %v4382 = vpop.f32.mrb[0].mxu0
      %v4383 = vadd.f32 0.0, %v4382
      %v4384 = vpop.f32.mrb[0].mxu0
      %4385 = vmatprep.mubr.f32.mxu0 0.0
      %4386 = vmatmul.mubr.f32.gmra.mrb[0].mxu0 %v4286
      %v4387 = vpop.f32.mrb[0].mxu0
      %v4388 = vadd.f32 0.0, %v4387
      %v4389 = vpop.f32.mrb[0].mxu0
      %4390 = vmatprep.mubr.f32.mxu0 0.0
      %4391 = vmatmul.mubr.f32.gmra.mrb[0].mxu0 %v4289
      %v4392 = vpop.f32.mrb[0].mxu0
      %v4393 = vadd.f32 0.0, %v4392
      %v4394 = vpop.f32.mrb[0].mxu0
      %4395 = vmatprep.mubr.f32.mxu0 0.0
      %4396 = vmatmul.mubr.f32.gmra.mrb[0].mxu0 %v4292
      %v4397 = vpop.f32.mrb[0].mxu0
      %v4398 = vadd.f32 0.0, %v4397
      %v4399 = vpop.f32.mrb[0].mxu0
      %4400 = vmatprep.mubr.f32.mxu0 0.0
      %4401 = vmatmul.mubr.f32.gmra.mrb[0].mxu0 %v4295
      %v4402 = vpop.f32.mrb[0].mxu0
      %v4403 = vadd.f32 0.0, %v4402
      %v4404 = vpop.f32.mrb[0].mxu0
      %4405 = vmatprep.mubr.f32.mxu0 0.0
      %4406 = vmatmul.mubr.f32.gmra.mrb[0].mxu0 %v4298
      %v4407 = vpop.f32.mrb[0].mxu0
      %v4408 = vadd.f32 0.0, %v4407
      %v4409 = vpop.f32.mrb[0].mxu0
      %4410 = vmatprep.mubr.f32.mxu0 0.0
      %4411 = vmatmul.mubr.f32.gmra.mrb[0].mxu0 %v4301
      %v4412 = vpop.f32.mrb[0].mxu0
      %v4413 = vadd.f32 0.0, %v4412
      %v4414 = vpop.f32.mrb[0].mxu0
      %4415 = vdwg.mxu0
      %v4416 = vadd.f32 %v4238, %v4373
      %v4417 = vadd.f32 %v4239, %v4378
      %v4418 = vadd.f32 %v4240, %v4383
      %v4419 = vadd.f32 %v4241, %v4388
      %v4420 = vadd.f32 %v4242, %v4393
      %v4421 = vadd.f32 %v4243, %v4398
      %v4422 = vadd.f32 %v4244, %v4403
      %v4423 = vadd.f32 %v4245, %v4408
      %v4424 = vadd.f32 %v4246, %v4413
      %v4425 = vld [vmem:[%s172] ss:$3 sm:$0xff]
      %v4426 = vld [vmem:[%s174] ss:$3 sm:$0xff]
      %v4427 = vld [vmem:[%s176] ss:$3 sm:$0xff]
      %v4428 = vld [vmem:[%s178] ss:$3 sm:$0xff]
      %v4429 = vld [vmem:[%s180] ss:$3 sm:$0xff]
      %v4430 = vld [vmem:[%s182] ss:$3 sm:$0xff]
      %v4431 = vld [vmem:[%s184] ss:$3 sm:$0xff]
      %v4432 = vld [vmem:[%s186] ss:$3 sm:$0xff]
      %s4433 = scalar_lea.vmem %s165, 216
      %v4434 = vld [vmem:[%s4433] ss:$3 sm:$0x1]
      %s4435 = scalar_lea.vmem %s1, 1920
      %v4436 = vld [vmem:[%s4435] sm:$0xff]
      %v4437 = vld [vmem:[%s4435 + $0x8] sm:$0xff]
      %v4438 = vld [vmem:[%s4435 + $0x10] sm:$0xff]
      %v4439 = vld [vmem:[%s4435 + $0x18] sm:$0xff]
      %v4440 = vld [vmem:[%s4435 + $0x20] sm:$0xff]
      %v4441 = vld [vmem:[%s4435 + $0x28] sm:$0xff]
      %v4442 = vld [vmem:[%s4435 + $0x30] sm:$0xff]
      %v4443 = vld [vmem:[%s4435 + $0x38] sm:$0xff]
      %v4444 = vld [vmem:[%s4435 + $0x40] sm:$0xff]
      %v4445 = vld [vmem:[%s4435 + $0x48] sm:$0x1]
      %v4447 = vsel %vm227, %v4425, 0
      %v4450 = vsel %vm227, %v4426, 0
      %v4453 = vsel %vm227, %v4427, 0
      %v4456 = vsel %vm227, %v4428, 0
      %v4459 = vsel %vm227, %v4429, 0
      %v4462 = vsel %vm227, %v4430, 0
      %v4465 = vsel %vm227, %v4431, 0
      %v4468 = vsel %vm227, %v4432, 0
      %v4471 = vsel %vm227, %v4434, 0
      %v4474 = vsel %vm255, %v4445, 0
      %4476 = vmatprep.subr.mxu0 0.0
      %4477 = vmatpush1.msra.mxu0 %v4436
      %4478 = vmatprep.subr.mxu0 0.0
      %4479 = vmatpush1.msra.mxu0 %v4437
      %4480 = vmatprep.subr.mxu0 0.0
      %4481 = vmatpush1.msra.mxu0 %v4438
      %4482 = vmatprep.subr.mxu0 0.0
      %4483 = vmatpush1.msra.mxu0 %v4439
      %4484 = vmatprep.subr.mxu0 0.0
      %4485 = vmatpush1.msra.mxu0 %v4440
      %4486 = vmatprep.subr.mxu0 0.0
      %4487 = vmatpush1.msra.mxu0 %v4441
      %4488 = vmatprep.subr.mxu0 0.0
      %4489 = vmatpush1.msra.mxu0 %v4442
      %4490 = vmatprep.subr.mxu0 0.0
      %4491 = vmatpush1.msra.mxu0 %v4443
      %4492 = vmatprep.subr.mxu0 0.0
      %4493 = vmatpush1.msra.mxu0 %v4444
      %4494 = vmatprep.subr.mxu0 0.0
      %4495 = vmatpush1.msra.mxu0 %v4474
      %4496 = vmatprep.subr.mxu0 0.0
      %4497 = vmatpush1.msra.mxu0 0.0
      %4498 = vmatprep.subr.mxu0 0.0
      %4499 = vmatpush1.msra.mxu0 0.0
      %4500 = vmatprep.subr.mxu0 0.0
      %4501 = vmatpush1.msra.mxu0 0.0
      %4502 = vmatprep.subr.mxu0 0.0
      %4503 = vmatpush1.msra.mxu0 0.0
      %4504 = vmatprep.subr.mxu0 0.0
      %4505 = vmatpush1.msra.mxu0 0.0
      %4506 = vmatprep.subr.mxu0 0.0
      %4507 = vmatpush1.msra.mxu0 0.0
      %4508 = vmatprep.subr.mxu0 0.0
      %4509 = vmatpush1.msra.mxu0 0.0
      %4510 = vmatprep.subr.mxu0 0.0
      %4511 = vmatpush1.msra.mxu0 0.0
      %4512 = vmatprep.subr.mxu0 0.0
      %4513 = vmatpush1.msra.mxu0 0.0
      %4514 = vmatprep.subr.mxu0 0.0
      %4515 = vmatpush1.msra.mxu0 0.0
      %4516 = vmatprep.subr.mxu0 0.0
      %4517 = vmatpush1.msra.mxu0 0.0
      %4518 = vmatprep.subr.mxu0 0.0
      %4519 = vmatpush1.msra.mxu0 0.0
      %4520 = vmatprep.subr.mxu0 0.0
      %4521 = vmatpush1.msra.mxu0 0.0
      %4522 = vmatprep.subr.mxu0 0.0
      %4523 = vmatpush1.msra.mxu0 0.0
      %4524 = vmatprep.subr.mxu0 0.0
      %4525 = vmatpush1.msra.mxu0 0.0
      %4526 = vmatprep.subr.mxu0 0.0
      %4527 = vmatpush1.msra.mxu0 0.0
      %4528 = vmatprep.subr.mxu0 0.0
      %4529 = vmatpush1.msra.mxu0 0.0
      %4530 = vmatprep.subr.mxu0 0.0
      %4531 = vmatpush1.msra.mxu0 0.0
      %4532 = vmatprep.subr.mxu0 0.0
      %4533 = vmatpush1.msra.mxu0 0.0
      %4534 = vmatprep.subr.mxu0 0.0
      %4535 = vmatpush1.msra.mxu0 0.0
      %4536 = vmatprep.subr.mxu0 0.0
      %4537 = vmatpush1.msra.mxu0 0.0
      %4538 = vmatprep.subr.mxu0 0.0
      %4539 = vmatpush1.msra.mxu0 0.0
      %4540 = vmatprep.mubr.f32.mxu0 0.0
      %4541 = vmatmul.mubr.f32.gmra.mrb[0].mxu0 %v4447
      %v4542 = vpop.f32.mrb[0].mxu0
      %v4543 = vadd.f32 0.0, %v4542
      %v4544 = vpop.f32.mrb[0].mxu0
      %4545 = vmatprep.mubr.f32.mxu0 0.0
      %4546 = vmatmul.mubr.f32.gmra.mrb[0].mxu0 %v4450
      %v4547 = vpop.f32.mrb[0].mxu0
      %v4548 = vadd.f32 0.0, %v4547
      %v4549 = vpop.f32.mrb[0].mxu0
      %4550 = vmatprep.mubr.f32.mxu0 0.0
      %4551 = vmatmul.mubr.f32.gmra.mrb[0].mxu0 %v4453
      %v4552 = vpop.f32.mrb[0].mxu0
      %v4553 = vadd.f32 0.0, %v4552
      %v4554 = vpop.f32.mrb[0].mxu0
      %4555 = vmatprep.mubr.f32.mxu0 0.0
      %4556 = vmatmul.mubr.f32.gmra.mrb[0].mxu0 %v4456
      %v4557 = vpop.f32.mrb[0].mxu0
      %v4558 = vadd.f32 0.0, %v4557
      %v4559 = vpop.f32.mrb[0].mxu0
      %4560 = vmatprep.mubr.f32.mxu0 0.0
      %4561 = vmatmul.mubr.f32.gmra.mrb[0].mxu0 %v4459
      %v4562 = vpop.f32.mrb[0].mxu0
      %v4563 = vadd.f32 0.0, %v4562
      %v4564 = vpop.f32.mrb[0].mxu0
      %4565 = vmatprep.mubr.f32.mxu0 0.0
      %4566 = vmatmul.mubr.f32.gmra.mrb[0].mxu0 %v4462
      %v4567 = vpop.f32.mrb[0].mxu0
      %v4568 = vadd.f32 0.0, %v4567
      %v4569 = vpop.f32.mrb[0].mxu0
      %4570 = vmatprep.mubr.f32.mxu0 0.0
      %4571 = vmatmul.mubr.f32.gmra.mrb[0].mxu0 %v4465
      %v4572 = vpop.f32.mrb[0].mxu0
      %v4573 = vadd.f32 0.0, %v4572
      %v4574 = vpop.f32.mrb[0].mxu0
      %4575 = vmatprep.mubr.f32.mxu0 0.0
      %4576 = vmatmul.mubr.f32.gmra.mrb[0].mxu0 %v4468
      %v4577 = vpop.f32.mrb[0].mxu0
      %v4578 = vadd.f32 0.0, %v4577
      %v4579 = vpop.f32.mrb[0].mxu0
      %4580 = vmatprep.mubr.f32.mxu0 0.0
      %4581 = vmatmul.mubr.f32.gmra.mrb[0].mxu0 %v4471
      %v4582 = vpop.f32.mrb[0].mxu0
      %v4583 = vadd.f32 0.0, %v4582
      %v4584 = vpop.f32.mrb[0].mxu0
      %4585 = vdwg.mxu0
      %v4586 = vadd.f32 %v4416, %v4543
      %v4587 = vadd.f32 %v4417, %v4548
      %v4588 = vadd.f32 %v4418, %v4553
      %v4589 = vadd.f32 %v4419, %v4558
      %v4590 = vadd.f32 %v4420, %v4563
      %v4591 = vadd.f32 %v4421, %v4568
      %v4592 = vadd.f32 %v4422, %v4573
      %v4593 = vadd.f32 %v4423, %v4578
      %v4594 = vadd.f32 %v4424, %v4583
      %v4595 = vld [vmem:[%s200] ss:$3 sm:$0xff]
      %v4596 = vld [vmem:[%s202] ss:$3 sm:$0xff]
      %v4597 = vld [vmem:[%s204] ss:$3 sm:$0xff]
      %v4598 = vld [vmem:[%s206] ss:$3 sm:$0xff]
      %v4599 = vld [vmem:[%s208] ss:$3 sm:$0xff]
      %v4600 = vld [vmem:[%s210] ss:$3 sm:$0xff]
      %v4601 = vld [vmem:[%s212] ss:$3 sm:$0xff]
      %v4602 = vld [vmem:[%s214] ss:$3 sm:$0xff]
      %s4603 = scalar_lea.vmem %s165, 217
      %v4604 = vld [vmem:[%s4603] ss:$3 sm:$0x1]
      %s4605 = scalar_lea.vmem %s1, 2000
      %v4606 = vld [vmem:[%s4605] sm:$0xff]
      %v4607 = vld [vmem:[%s4605 + $0x8] sm:$0xff]
      %v4608 = vld [vmem:[%s4605 + $0x10] sm:$0xff]
      %v4609 = vld [vmem:[%s4605 + $0x18] sm:$0xff]
      %v4610 = vld [vmem:[%s4605 + $0x20] sm:$0xff]
      %v4611 = vld [vmem:[%s4605 + $0x28] sm:$0xff]
      %v4612 = vld [vmem:[%s4605 + $0x30] sm:$0xff]
      %v4613 = vld [vmem:[%s4605 + $0x38] sm:$0xff]
      %v4614 = vld [vmem:[%s4605 + $0x40] sm:$0xff]
      %v4615 = vld [vmem:[%s4605 + $0x48] sm:$0x1]
      %v4617 = vsel %vm227, %v4595, 0
      %v4620 = vsel %vm227, %v4596, 0
      %v4623 = vsel %vm227, %v4597, 0
      %v4626 = vsel %vm227, %v4598, 0
      %v4629 = vsel %vm227, %v4599, 0
      %v4632 = vsel %vm227, %v4600, 0
      %v4635 = vsel %vm227, %v4601, 0
      %v4638 = vsel %vm227, %v4602, 0
      %v4641 = vsel %vm227, %v4604, 0
      %v4644 = vsel %vm255, %v4615, 0
      %4646 = vmatprep.subr.mxu0 0.0
      %4647 = vmatpush1.msra.mxu0 %v4606
      %4648 = vmatprep.subr.mxu0 0.0
      %4649 = vmatpush1.msra.mxu0 %v4607
      %4650 = vmatprep.subr.mxu0 0.0
      %4651 = vmatpush1.msra.mxu0 %v4608
      %4652 = vmatprep.subr.mxu0 0.0
      %4653 = vmatpush1.msra.mxu0 %v4609
      %4654 = vmatprep.subr.mxu0 0.0
      %4655 = vmatpush1.msra.mxu0 %v4610
      %4656 = vmatprep.subr.mxu0 0.0
      %4657 = vmatpush1.msra.mxu0 %v4611
      %4658 = vmatprep.subr.mxu0 0.0
      %4659 = vmatpush1.msra.mxu0 %v4612
      %4660 = vmatprep.subr.mxu0 0.0
      %4661 = vmatpush1.msra.mxu0 %v4613
      %4662 = vmatprep.subr.mxu0 0.0
      %4663 = vmatpush1.msra.mxu0 %v4614
      %4664 = vmatprep.subr.mxu0 0.0
      %4665 = vmatpush1.msra.mxu0 %v4644
      %4666 = vmatprep.subr.mxu0 0.0
      %4667 = vmatpush1.msra.mxu0 0.0
      %4668 = vmatprep.subr.mxu0 0.0
      %4669 = vmatpush1.msra.mxu0 0.0
      %4670 = vmatprep.subr.mxu0 0.0
      %4671 = vmatpush1.msra.mxu0 0.0
      %4672 = vmatprep.subr.mxu0 0.0
      %4673 = vmatpush1.msra.mxu0 0.0
      %4674 = vmatprep.subr.mxu0 0.0
      %4675 = vmatpush1.msra.mxu0 0.0
      %4676 = vmatprep.subr.mxu0 0.0
      %4677 = vmatpush1.msra.mxu0 0.0
      %4678 = vmatprep.subr.mxu0 0.0
      %4679 = vmatpush1.msra.mxu0 0.0
      %4680 = vmatprep.subr.mxu0 0.0
      %4681 = vmatpush1.msra.mxu0 0.0
      %4682 = vmatprep.subr.mxu0 0.0
      %4683 = vmatpush1.msra.mxu0 0.0
      %4684 = vmatprep.subr.mxu0 0.0
      %4685 = vmatpush1.msra.mxu0 0.0
      %4686 = vmatprep.subr.mxu0 0.0
      %4687 = vmatpush1.msra.mxu0 0.0
      %4688 = vmatprep.subr.mxu0 0.0
      %4689 = vmatpush1.msra.mxu0 0.0
      %4690 = vmatprep.subr.mxu0 0.0
      %4691 = vmatpush1.msra.mxu0 0.0
      %4692 = vmatprep.subr.mxu0 0.0
      %4693 = vmatpush1.msra.mxu0 0.0
      %4694 = vmatprep.subr.mxu0 0.0
      %4695 = vmatpush1.msra.mxu0 0.0
      %4696 = vmatprep.subr.mxu0 0.0
      %4697 = vmatpush1.msra.mxu0 0.0
      %4698 = vmatprep.subr.mxu0 0.0
      %4699 = vmatpush1.msra.mxu0 0.0
      %4700 = vmatprep.subr.mxu0 0.0
      %4701 = vmatpush1.msra.mxu0 0.0
      %4702 = vmatprep.subr.mxu0 0.0
      %4703 = vmatpush1.msra.mxu0 0.0
      %4704 = vmatprep.subr.mxu0 0.0
      %4705 = vmatpush1.msra.mxu0 0.0
      %4706 = vmatprep.subr.mxu0 0.0
      %4707 = vmatpush1.msra.mxu0 0.0
      %4708 = vmatprep.subr.mxu0 0.0
      %4709 = vmatpush1.msra.mxu0 0.0
      %4710 = vmatprep.mubr.f32.mxu0 0.0
      %4711 = vmatmul.mubr.f32.gmra.mrb[0].mxu0 %v4617
      %v4712 = vpop.f32.mrb[0].mxu0
      %v4713 = vadd.f32 0.0, %v4712
      %v4714 = vpop.f32.mrb[0].mxu0
      %4715 = vmatprep.mubr.f32.mxu0 0.0
      %4716 = vmatmul.mubr.f32.gmra.mrb[0].mxu0 %v4620
      %v4717 = vpop.f32.mrb[0].mxu0
      %v4718 = vadd.f32 0.0, %v4717
      %v4719 = vpop.f32.mrb[0].mxu0
      %4720 = vmatprep.mubr.f32.mxu0 0.0
      %4721 = vmatmul.mubr.f32.gmra.mrb[0].mxu0 %v4623
      %v4722 = vpop.f32.mrb[0].mxu0
      %v4723 = vadd.f32 0.0, %v4722
      %v4724 = vpop.f32.mrb[0].mxu0
      %4725 = vmatprep.mubr.f32.mxu0 0.0
      %4726 = vmatmul.mubr.f32.gmra.mrb[0].mxu0 %v4626
      %v4727 = vpop.f32.mrb[0].mxu0
      %v4728 = vadd.f32 0.0, %v4727
      %v4729 = vpop.f32.mrb[0].mxu0
      %4730 = vmatprep.mubr.f32.mxu0 0.0
      %4731 = vmatmul.mubr.f32.gmra.mrb[0].mxu0 %v4629
      %v4732 = vpop.f32.mrb[0].mxu0
      %v4733 = vadd.f32 0.0, %v4732
      %v4734 = vpop.f32.mrb[0].mxu0
      %4735 = vmatprep.mubr.f32.mxu0 0.0
      %4736 = vmatmul.mubr.f32.gmra.mrb[0].mxu0 %v4632
      %v4737 = vpop.f32.mrb[0].mxu0
      %v4738 = vadd.f32 0.0, %v4737
      %v4739 = vpop.f32.mrb[0].mxu0
      %4740 = vmatprep.mubr.f32.mxu0 0.0
      %4741 = vmatmul.mubr.f32.gmra.mrb[0].mxu0 %v4635
      %v4742 = vpop.f32.mrb[0].mxu0
      %v4743 = vadd.f32 0.0, %v4742
      %v4744 = vpop.f32.mrb[0].mxu0
      %4745 = vmatprep.mubr.f32.mxu0 0.0
      %4746 = vmatmul.mubr.f32.gmra.mrb[0].mxu0 %v4638
      %v4747 = vpop.f32.mrb[0].mxu0
      %v4748 = vadd.f32 0.0, %v4747
      %v4749 = vpop.f32.mrb[0].mxu0
      %4750 = vmatprep.mubr.f32.mxu0 0.0
      %4751 = vmatmul.mubr.f32.gmra.mrb[0].mxu0 %v4641
      %v4752 = vpop.f32.mrb[0].mxu0
      %v4753 = vadd.f32 0.0, %v4752
      %v4754 = vpop.f32.mrb[0].mxu0
      %4755 = vdwg.mxu0
      %v4756 = vadd.f32 %v4586, %v4713
      %v4757 = vadd.f32 %v4587, %v4718
      %v4758 = vadd.f32 %v4588, %v4723
      %v4759 = vadd.f32 %v4589, %v4728
      %v4760 = vadd.f32 %v4590, %v4733
      %v4761 = vadd.f32 %v4591, %v4738
      %v4762 = vadd.f32 %v4592, %v4743
      %v4763 = vadd.f32 %v4593, %v4748
      %v4764 = vadd.f32 %v4594, %v4753
      %v4765 = vld [vmem:[%s511] ss:$3 sm:$0xff]
      %v4766 = vld [vmem:[%s513] ss:$3 sm:$0xff]
      %v4767 = vld [vmem:[%s515] ss:$3 sm:$0xff]
      %v4768 = vld [vmem:[%s517] ss:$3 sm:$0xff]
      %v4769 = vld [vmem:[%s519] ss:$3 sm:$0xff]
      %v4770 = vld [vmem:[%s521] ss:$3 sm:$0xff]
      %v4771 = vld [vmem:[%s523] ss:$3 sm:$0xff]
      %v4772 = vld [vmem:[%s525] ss:$3 sm:$0xff]
      %s4773 = scalar_lea.vmem %s165, 218
      %v4774 = vld [vmem:[%s4773] ss:$3 sm:$0x1]
      %s4775 = scalar_lea.vmem %s1, 2080
      %v4776 = vld [vmem:[%s4775] sm:$0xff]
      %v4777 = vld [vmem:[%s4775 + $0x8] sm:$0xff]
      %v4778 = vld [vmem:[%s4775 + $0x10] sm:$0xff]
      %v4779 = vld [vmem:[%s4775 + $0x18] sm:$0xff]
      %v4780 = vld [vmem:[%s4775 + $0x20] sm:$0xff]
      %v4781 = vld [vmem:[%s4775 + $0x28] sm:$0xff]
      %v4782 = vld [vmem:[%s4775 + $0x30] sm:$0xff]
      %v4783 = vld [vmem:[%s4775 + $0x38] sm:$0xff]
      %v4784 = vld [vmem:[%s4775 + $0x40] sm:$0xff]
      %v4785 = vld [vmem:[%s4775 + $0x48] sm:$0x1]
      %v4787 = vsel %vm227, %v4765, 0
      %v4790 = vsel %vm227, %v4766, 0
      %v4793 = vsel %vm227, %v4767, 0
      %v4796 = vsel %vm227, %v4768, 0
      %v4799 = vsel %vm227, %v4769, 0
      %v4802 = vsel %vm227, %v4770, 0
      %v4805 = vsel %vm227, %v4771, 0
      %v4808 = vsel %vm227, %v4772, 0
      %v4811 = vsel %vm227, %v4774, 0
      %v4814 = vsel %vm255, %v4785, 0
      %4816 = vmatprep.subr.mxu0 0.0
      %4817 = vmatpush1.msra.mxu0 %v4776
      %4818 = vmatprep.subr.mxu0 0.0
      %4819 = vmatpush1.msra.mxu0 %v4777
      %4820 = vmatprep.subr.mxu0 0.0
      %4821 = vmatpush1.msra.mxu0 %v4778
      %4822 = vmatprep.subr.mxu0 0.0
      %4823 = vmatpush1.msra.mxu0 %v4779
      %4824 = vmatprep.subr.mxu0 0.0
      %4825 = vmatpush1.msra.mxu0 %v4780
      %4826 = vmatprep.subr.mxu0 0.0
      %4827 = vmatpush1.msra.mxu0 %v4781
      %4828 = vmatprep.subr.mxu0 0.0
      %4829 = vmatpush1.msra.mxu0 %v4782
      %4830 = vmatprep.subr.mxu0 0.0
      %4831 = vmatpush1.msra.mxu0 %v4783
      %4832 = vmatprep.subr.mxu0 0.0
      %4833 = vmatpush1.msra.mxu0 %v4784
      %4834 = vmatprep.subr.mxu0 0.0
      %4835 = vmatpush1.msra.mxu0 %v4814
      %4836 = vmatprep.subr.mxu0 0.0
      %4837 = vmatpush1.msra.mxu0 0.0
      %4838 = vmatprep.subr.mxu0 0.0
      %4839 = vmatpush1.msra.mxu0 0.0
      %4840 = vmatprep.subr.mxu0 0.0
      %4841 = vmatpush1.msra.mxu0 0.0
      %4842 = vmatprep.subr.mxu0 0.0
      %4843 = vmatpush1.msra.mxu0 0.0
      %4844 = vmatprep.subr.mxu0 0.0
      %4845 = vmatpush1.msra.mxu0 0.0
      %4846 = vmatprep.subr.mxu0 0.0
      %4847 = vmatpush1.msra.mxu0 0.0
      %4848 = vmatprep.subr.mxu0 0.0
      %4849 = vmatpush1.msra.mxu0 0.0
      %4850 = vmatprep.subr.mxu0 0.0
      %4851 = vmatpush1.msra.mxu0 0.0
      %4852 = vmatprep.subr.mxu0 0.0
      %4853 = vmatpush1.msra.mxu0 0.0
      %4854 = vmatprep.subr.mxu0 0.0
      %4855 = vmatpush1.msra.mxu0 0.0
      %4856 = vmatprep.subr.mxu0 0.0
      %4857 = vmatpush1.msra.mxu0 0.0
      %4858 = vmatprep.subr.mxu0 0.0
      %4859 = vmatpush1.msra.mxu0 0.0
      %4860 = vmatprep.subr.mxu0 0.0
      %4861 = vmatpush1.msra.mxu0 0.0
      %4862 = vmatprep.subr.mxu0 0.0
      %4863 = vmatpush1.msra.mxu0 0.0
      %4864 = vmatprep.subr.mxu0 0.0
      %4865 = vmatpush1.msra.mxu0 0.0
      %4866 = vmatprep.subr.mxu0 0.0
      %4867 = vmatpush1.msra.mxu0 0.0
      %4868 = vmatprep.subr.mxu0 0.0
      %4869 = vmatpush1.msra.mxu0 0.0
      %4870 = vmatprep.subr.mxu0 0.0
      %4871 = vmatpush1.msra.mxu0 0.0
      %4872 = vmatprep.subr.mxu0 0.0
      %4873 = vmatpush1.msra.mxu0 0.0
      %4874 = vmatprep.subr.mxu0 0.0
      %4875 = vmatpush1.msra.mxu0 0.0
      %4876 = vmatprep.subr.mxu0 0.0
      %4877 = vmatpush1.msra.mxu0 0.0
      %4878 = vmatprep.subr.mxu0 0.0
      %4879 = vmatpush1.msra.mxu0 0.0
      %4880 = vmatprep.mubr.f32.mxu0 0.0
      %4881 = vmatmul.mubr.f32.gmra.mrb[0].mxu0 %v4787
      %v4882 = vpop.f32.mrb[0].mxu0
      %v4883 = vadd.f32 0.0, %v4882
      %v4884 = vpop.f32.mrb[0].mxu0
      %4885 = vmatprep.mubr.f32.mxu0 0.0
      %4886 = vmatmul.mubr.f32.gmra.mrb[0].mxu0 %v4790
      %v4887 = vpop.f32.mrb[0].mxu0
      %v4888 = vadd.f32 0.0, %v4887
      %v4889 = vpop.f32.mrb[0].mxu0
      %4890 = vmatprep.mubr.f32.mxu0 0.0
      %4891 = vmatmul.mubr.f32.gmra.mrb[0].mxu0 %v4793
      %v4892 = vpop.f32.mrb[0].mxu0
      %v4893 = vadd.f32 0.0, %v4892
      %v4894 = vpop.f32.mrb[0].mxu0
      %4895 = vmatprep.mubr.f32.mxu0 0.0
      %4896 = vmatmul.mubr.f32.gmra.mrb[0].mxu0 %v4796
      %v4897 = vpop.f32.mrb[0].mxu0
      %v4898 = vadd.f32 0.0, %v4897
      %v4899 = vpop.f32.mrb[0].mxu0
      %4900 = vmatprep.mubr.f32.mxu0 0.0
      %4901 = vmatmul.mubr.f32.gmra.mrb[0].mxu0 %v4799
      %v4902 = vpop.f32.mrb[0].mxu0
      %v4903 = vadd.f32 0.0, %v4902
      %v4904 = vpop.f32.mrb[0].mxu0
      %4905 = vmatprep.mubr.f32.mxu0 0.0
      %4906 = vmatmul.mubr.f32.gmra.mrb[0].mxu0 %v4802
      %v4907 = vpop.f32.mrb[0].mxu0
      %v4908 = vadd.f32 0.0, %v4907
      %v4909 = vpop.f32.mrb[0].mxu0
      %4910 = vmatprep.mubr.f32.mxu0 0.0
      %4911 = vmatmul.mubr.f32.gmra.mrb[0].mxu0 %v4805
      %v4912 = vpop.f32.mrb[0].mxu0
      %v4913 = vadd.f32 0.0, %v4912
      %v4914 = vpop.f32.mrb[0].mxu0
      %4915 = vmatprep.mubr.f32.mxu0 0.0
      %4916 = vmatmul.mubr.f32.gmra.mrb[0].mxu0 %v4808
      %v4917 = vpop.f32.mrb[0].mxu0
      %v4918 = vadd.f32 0.0, %v4917
      %v4919 = vpop.f32.mrb[0].mxu0
      %4920 = vmatprep.mubr.f32.mxu0 0.0
      %4921 = vmatmul.mubr.f32.gmra.mrb[0].mxu0 %v4811
      %v4922 = vpop.f32.mrb[0].mxu0
      %v4923 = vadd.f32 0.0, %v4922
      %v4924 = vpop.f32.mrb[0].mxu0
      %4925 = vdwg.mxu0
      %v4926 = vadd.f32 %v4756, %v4883
      %v4927 = vadd.f32 %v4757, %v4888
      %v4928 = vadd.f32 %v4758, %v4893
      %v4929 = vadd.f32 %v4759, %v4898
      %v4930 = vadd.f32 %v4760, %v4903
      %v4931 = vadd.f32 %v4761, %v4908
      %v4932 = vadd.f32 %v4762, %v4913
      %v4933 = vadd.f32 %v4763, %v4918
      %v4934 = vadd.f32 %v4764, %v4923
      %v4935 = vld [vmem:[%s689] ss:$3 sm:$0xff]
      %v4936 = vld [vmem:[%s691] ss:$3 sm:$0xff]
      %v4937 = vld [vmem:[%s693] ss:$3 sm:$0xff]
      %v4938 = vld [vmem:[%s695] ss:$3 sm:$0xff]
      %v4939 = vld [vmem:[%s697] ss:$3 sm:$0xff]
      %v4940 = vld [vmem:[%s699] ss:$3 sm:$0xff]
      %v4941 = vld [vmem:[%s701] ss:$3 sm:$0xff]
      %v4942 = vld [vmem:[%s703] ss:$3 sm:$0xff]
      %s4943 = scalar_lea.vmem %s165, 219
      %v4944 = vld [vmem:[%s4943] ss:$3 sm:$0x1]
      %s4945 = scalar_lea.vmem %s1, 2160
      %v4946 = vld [vmem:[%s4945] sm:$0xff]
      %v4947 = vld [vmem:[%s4945 + $0x8] sm:$0xff]
      %v4948 = vld [vmem:[%s4945 + $0x10] sm:$0xff]
      %v4949 = vld [vmem:[%s4945 + $0x18] sm:$0xff]
      %v4950 = vld [vmem:[%s4945 + $0x20] sm:$0xff]
      %v4951 = vld [vmem:[%s4945 + $0x28] sm:$0xff]
      %v4952 = vld [vmem:[%s4945 + $0x30] sm:$0xff]
      %v4953 = vld [vmem:[%s4945 + $0x38] sm:$0xff]
      %v4954 = vld [vmem:[%s4945 + $0x40] sm:$0xff]
      %v4955 = vld [vmem:[%s4945 + $0x48] sm:$0x1]
      %v4957 = vsel %vm227, %v4935, 0
      %v4960 = vsel %vm227, %v4936, 0
      %v4963 = vsel %vm227, %v4937, 0
      %v4966 = vsel %vm227, %v4938, 0
      %v4969 = vsel %vm227, %v4939, 0
      %v4972 = vsel %vm227, %v4940, 0
      %v4975 = vsel %vm227, %v4941, 0
      %v4978 = vsel %vm227, %v4942, 0
      %v4981 = vsel %vm227, %v4944, 0
      %v4984 = vsel %vm255, %v4955, 0
      %4986 = vmatprep.subr.mxu0 0.0
      %4987 = vmatpush1.msra.mxu0 %v4946
      %4988 = vmatprep.subr.mxu0 0.0
      %4989 = vmatpush1.msra.mxu0 %v4947
      %4990 = vmatprep.subr.mxu0 0.0
      %4991 = vmatpush1.msra.mxu0 %v4948
      %4992 = vmatprep.subr.mxu0 0.0
      %4993 = vmatpush1.msra.mxu0 %v4949
      %4994 = vmatprep.subr.mxu0 0.0
      %4995 = vmatpush1.msra.mxu0 %v4950
      %4996 = vmatprep.subr.mxu0 0.0
      %4997 = vmatpush1.msra.mxu0 %v4951
      %4998 = vmatprep.subr.mxu0 0.0
      %4999 = vmatpush1.msra.mxu0 %v4952
      %5000 = vmatprep.subr.mxu0 0.0
      %5001 = vmatpush1.msra.mxu0 %v4953
      %5002 = vmatprep.subr.mxu0 0.0
      %5003 = vmatpush1.msra.mxu0 %v4954
      %5004 = vmatprep.subr.mxu0 0.0
      %5005 = vmatpush1.msra.mxu0 %v4984
      %5006 = vmatprep.subr.mxu0 0.0
      %5007 = vmatpush1.msra.mxu0 0.0
      %5008 = vmatprep.subr.mxu0 0.0
      %5009 = vmatpush1.msra.mxu0 0.0
      %5010 = vmatprep.subr.mxu0 0.0
      %5011 = vmatpush1.msra.mxu0 0.0
      %5012 = vmatprep.subr.mxu0 0.0
      %5013 = vmatpush1.msra.mxu0 0.0
      %5014 = vmatprep.subr.mxu0 0.0
      %5015 = vmatpush1.msra.mxu0 0.0
      %5016 = vmatprep.subr.mxu0 0.0
      %5017 = vmatpush1.msra.mxu0 0.0
      %5018 = vmatprep.subr.mxu0 0.0
      %5019 = vmatpush1.msra.mxu0 0.0
      %5020 = vmatprep.subr.mxu0 0.0
      %5021 = vmatpush1.msra.mxu0 0.0
      %5022 = vmatprep.subr.mxu0 0.0
      %5023 = vmatpush1.msra.mxu0 0.0
      %5024 = vmatprep.subr.mxu0 0.0
      %5025 = vmatpush1.msra.mxu0 0.0
      %5026 = vmatprep.subr.mxu0 0.0
      %5027 = vmatpush1.msra.mxu0 0.0
      %5028 = vmatprep.subr.mxu0 0.0
      %5029 = vmatpush1.msra.mxu0 0.0
      %5030 = vmatprep.subr.mxu0 0.0
      %5031 = vmatpush1.msra.mxu0 0.0
      %5032 = vmatprep.subr.mxu0 0.0
      %5033 = vmatpush1.msra.mxu0 0.0
      %5034 = vmatprep.subr.mxu0 0.0
      %5035 = vmatpush1.msra.mxu0 0.0
      %5036 = vmatprep.subr.mxu0 0.0
      %5037 = vmatpush1.msra.mxu0 0.0
      %5038 = vmatprep.subr.mxu0 0.0
      %5039 = vmatpush1.msra.mxu0 0.0
      %5040 = vmatprep.subr.mxu0 0.0
      %5041 = vmatpush1.msra.mxu0 0.0
      %5042 = vmatprep.subr.mxu0 0.0
      %5043 = vmatpush1.msra.mxu0 0.0
      %5044 = vmatprep.subr.mxu0 0.0
      %5045 = vmatpush1.msra.mxu0 0.0
      %5046 = vmatprep.subr.mxu0 0.0
      %5047 = vmatpush1.msra.mxu0 0.0
      %5048 = vmatprep.subr.mxu0 0.0
      %5049 = vmatpush1.msra.mxu0 0.0
      %5050 = vmatprep.mubr.f32.mxu0 0.0
      %5051 = vmatmul.mubr.f32.gmra.mrb[0].mxu0 %v4957
      %v5052 = vpop.f32.mrb[0].mxu0
      %v5053 = vadd.f32 0.0, %v5052
      %v5054 = vpop.f32.mrb[0].mxu0
      %5055 = vmatprep.mubr.f32.mxu0 0.0
      %5056 = vmatmul.mubr.f32.gmra.mrb[0].mxu0 %v4960
      %v5057 = vpop.f32.mrb[0].mxu0
      %v5058 = vadd.f32 0.0, %v5057
      %v5059 = vpop.f32.mrb[0].mxu0
      %5060 = vmatprep.mubr.f32.mxu0 0.0
      %5061 = vmatmul.mubr.f32.gmra.mrb[0].mxu0 %v4963
      %v5062 = vpop.f32.mrb[0].mxu0
      %v5063 = vadd.f32 0.0, %v5062
      %v5064 = vpop.f32.mrb[0].mxu0
      %5065 = vmatprep.mubr.f32.mxu0 0.0
      %5066 = vmatmul.mubr.f32.gmra.mrb[0].mxu0 %v4966
      %v5067 = vpop.f32.mrb[0].mxu0
      %v5068 = vadd.f32 0.0, %v5067
      %v5069 = vpop.f32.mrb[0].mxu0
      %5070 = vmatprep.mubr.f32.mxu0 0.0
      %5071 = vmatmul.mubr.f32.gmra.mrb[0].mxu0 %v4969
      %v5072 = vpop.f32.mrb[0].mxu0
      %v5073 = vadd.f32 0.0, %v5072
      %v5074 = vpop.f32.mrb[0].mxu0
      %5075 = vmatprep.mubr.f32.mxu0 0.0
      %5076 = vmatmul.mubr.f32.gmra.mrb[0].mxu0 %v4972
      %v5077 = vpop.f32.mrb[0].mxu0
      %v5078 = vadd.f32 0.0, %v5077
      %v5079 = vpop.f32.mrb[0].mxu0
      %5080 = vmatprep.mubr.f32.mxu0 0.0
      %5081 = vmatmul.mubr.f32.gmra.mrb[0].mxu0 %v4975
      %v5082 = vpop.f32.mrb[0].mxu0
      %v5083 = vadd.f32 0.0, %v5082
      %v5084 = vpop.f32.mrb[0].mxu0
      %5085 = vmatprep.mubr.f32.mxu0 0.0
      %5086 = vmatmul.mubr.f32.gmra.mrb[0].mxu0 %v4978
      %v5087 = vpop.f32.mrb[0].mxu0
      %v5088 = vadd.f32 0.0, %v5087
      %v5089 = vpop.f32.mrb[0].mxu0
      %5090 = vmatprep.mubr.f32.mxu0 0.0
      %5091 = vmatmul.mubr.f32.gmra.mrb[0].mxu0 %v4981
      %v5092 = vpop.f32.mrb[0].mxu0
      %v5093 = vadd.f32 0.0, %v5092
      %v5094 = vpop.f32.mrb[0].mxu0
      %5095 = vdwg.mxu0
      %v5096 = vadd.f32 %v4926, %v5053
      %v5097 = vadd.f32 %v4927, %v5058
      %v5098 = vadd.f32 %v4928, %v5063
      %v5099 = vadd.f32 %v4929, %v5068
      %v5100 = vadd.f32 %v4930, %v5073
      %v5101 = vadd.f32 %v4931, %v5078
      %v5102 = vadd.f32 %v4932, %v5083
      %v5103 = vadd.f32 %v4933, %v5088
      %v5104 = vadd.f32 %v4934, %v5093
      %v5105 = vld [vmem:[%s2] sm:$0x1]
      %v5107 = vlaneseq
      %v5108 = vshrl.u32 %v5107, 7
      %v5109 = vsub.s32 0, %v5108
      %v5110 = vrot.slane %v5105, %v5109
      %v5112 = vadd.f32 %v5096, %v5110
      %v5113 = vadd.f32 %v5097, %v5110
      %v5114 = vadd.f32 %v5098, %v5110
      %v5115 = vadd.f32 %v5099, %v5110
      %v5116 = vadd.f32 %v5100, %v5110
      %v5117 = vadd.f32 %v5101, %v5110
      %v5118 = vadd.f32 %v5102, %v5110
      %v5119 = vadd.f32 %v5103, %v5110
      %v5120 = vadd.f32 %v5104, %v5110
      %vm5121 = vcmask 261120
      %5122 = vst.msk [vmem:[%s170] sm:$0xff] %vm5121, %v5112
      %5123 = vst.msk [vmem:[%s170 + $0x8] sm:$0xff] %vm5121, %v5113
      %5124 = vst.msk [vmem:[%s170 + $0x10] sm:$0xff] %vm5121, %v5114
      %5125 = vst.msk [vmem:[%s170 + $0x18] sm:$0xff] %vm5121, %v5115
      %5126 = vst.msk [vmem:[%s170 + $0x20] sm:$0xff] %vm5121, %v5116
      %5127 = vst.msk [vmem:[%s170 + $0x28] sm:$0xff] %vm5121, %v5117
      %5128 = vst.msk [vmem:[%s170 + $0x30] sm:$0xff] %vm5121, %v5118
      %5129 = vst.msk [vmem:[%s170 + $0x38] sm:$0xff] %vm5121, %v5119
      %vm5130 = vcmask 253952
      %5131 = vst.msk [vmem:[%s170 + $0x40] sm:$0x1] %vm5130, %v5120
      %p5132 = scmp.lt.s32.totalorder %s14, 1
      %s5133 = scalar_select %p5132, %s14, 1
      %s5134 = smul.addr %s5133, 9
      %s5135 = smul.addr %s5134, 8
      %s5136 = scalar_lea.vmem %s3, %s5135
      // Predicated region
      $region33: #{conv1d_nlc.1} parent=31 // pred_check
        %p5137 = pneg %p100
      $region34: #{conv1d_nlc.1} parent=31 // pred_check_branch
        %5139 = sbr.rel (%p5137) target = $region36
      $region35: #{conv1d_nlc.1} parent=31 // pred_region
        _
      $region36: #{conv1d_nlc.1} parent=31 // pred_fallthru
        _
    $region32: #{conv1d_nlc.1} parent=5 // pred_fallthru
      _
    %p5140 = scmp.le.s32.totalorder 2, %s9
    // Predicated region
    $region37: #{conv1d_nlc.1} parent=5 // pred_check
      %p5141 = pneg %p5140
    $region38: #{conv1d_nlc.1} parent=5 // pred_check_branch
      %5143 = sbr.rel (%p5141) target = $region40
    $region39: #{conv1d_nlc.1} parent=5 // pred_region
      %s5144 = ssub.s32 %s9, 2
      // Predicated region
      $region41: #{conv1d_nlc.1} parent=39 // pred_check
        %p5145 = pneg %p106
      $region42: #{conv1d_nlc.1} parent=39 // pred_check_branch
        %5147 = sbr.rel (%p5145) target = $region44
      $region43: #{conv1d_nlc.1} parent=39 // pred_region
        %p5148 = scmp.lt.s32.totalorder %s15, 1
        %s5149 = scalar_select %p5148, %s15, 1
        %s5150 = smul.addr %s5149, 9
        %s5151 = smul.addr %s5150, 8
        %s5152 = scalar_lea.vmem %s3, %s5151
      $region44: #{conv1d_nlc.1} parent=39 // pred_fallthru
        _
    $region40: #{conv1d_nlc.1} parent=5 // pred_fallthru
      _
  $region6: #{conv1d_nlc.1} parent=0 // loop_footer
    %s13 = sadd.s32 1, %s9
  $region7: #{conv1d_nlc.1} parent=0 // loop_footer_branch
    %8 = sbr.rel target = $region3
  $region8: #{conv1d_nlc.1} parent=0 // loop_exit
    _

</llo_original>
